<compile_context>
chip_gen: v6e
topology: v6e:2x2x1
jax: 0.10.0
libtpu: 0.0.40
codegen_flags: <defaults>
</compile_context>

<pallas_src>
import math
from types import SimpleNamespace

import numpy as np

import jax
import jax.numpy as jnp
from jax.experimental import pallas as pl
from jax.experimental.pallas import tpu as pltpu

LEAKY_SLOPE = 0.2               # nt_utils uses LeakyReLU(0.2)
MATMUL_DTYPE = jnp.bfloat16     # MXU-rate inputs, f32 accumulation


# ----------------------------------------------------------------------------
# In-kernel building blocks (operate on values + small VMEM pad scratches)
# ----------------------------------------------------------------------------
def _leaky(x):
    return jnp.where(x >= 0, x, LEAKY_SLOPE * x)


def _conv3x3_body(x, w_ref, b_ref, get_pad, pre_act):
    # x: (h, w, cin) f32 value ; w_ref: (9*cin, cout) ; b_ref: (1, cout)
    h, w, cin = x.shape
    cout = w_ref.shape[-1]
    if pre_act:
        # LeakyReLU(0) == 0, so activating before zero-padding is equivalent
        # to the PyTorch pre-act ordering.
        x = _leaky(x)
    pad_ref = get_pad(cin)                      # (h+2, w+2, cin), border == 0
    pad_ref[pl.ds(1, h), pl.ds(1, w), :] = x    # interior write, border stays 0
    taps = []
    for k in range(9):
        dy, dx = divmod(k, 3)
        taps.append(pad_ref[pl.ds(dy, h), pl.ds(dx, w), :].reshape(h * w, cin))
    patch = jnp.concatenate(taps, axis=-1)      # (h*w, 9*cin): K folded
    y = jnp.dot(patch.astype(MATMUL_DTYPE), w_ref[...].astype(MATMUL_DTYPE),
                preferred_element_type=jnp.float32) + b_ref[...]
    return y.reshape(h, w, cout)


def _conv1x1_body(x, w_ref, b_ref):
    h, w, cin = x.shape
    cout = w_ref.shape[-1]
    y = jnp.dot(x.reshape(h * w, cin).astype(MATMUL_DTYPE),
                w_ref[...].astype(MATMUL_DTYPE),
                preferred_element_type=jnp.float32) + b_ref[...]
    return y.reshape(h, w, cout)


def _resblock_body(x, w_refs, get_pad, blk):
    # pre-activation ResBlock: [act, conv3x3, act, conv3x3] + (1x1) skip
    y = _conv3x3_body(x, w_refs[blk["w1"]], w_refs[blk["b1"]], get_pad, True)
    y = _conv3x3_body(y, w_refs[blk["w2"]], w_refs[blk["b2"]], get_pad, True)
    if "ws" in blk:
        s = _conv1x1_body(x, w_refs[blk["ws"]], w_refs[blk["bs"]])
    else:
        s = x
    return y + s


def _make_stage_kernel(descr, n_weights, pad_channels, head, n_frames):
    """Fused conv-stage kernel.

    non-head refs: x, *weights, out, *pad_scratches
    head refs    : x, tex, *weights, tex_out, *pad_scratches, acc_scratch
    """
    n_lead = 2 if head else 1
    n_pad = len(pad_channels)

    def kernel(*refs):
        x_ref = refs[0]
        tex_ref = refs[1] if head else None
        w_refs = refs[n_lead:n_lead + n_weights]
        o_ref = refs[n_lead + n_weights]
        scratch = refs[n_lead + n_weights + 1:]
        pad_refs = scratch[:n_pad]
        acc_ref = scratch[n_pad] if head else None

        # Border of every pad scratch must be zero; interiors are always
        # overwritten before being read. Re-zeroing is a tiny VMEM memset.
        for pr in pad_refs:
            pr[...] = jnp.zeros_like(pr)

        def get_pad(cin):
            return pad_refs[pad_channels.index(cin)]

        x = x_ref[0]                                     # (h, w, cin)
        if descr.get("first_conv") is not None:
            wi, bi = descr["first_conv"]
            x = _conv3x3_body(x, w_refs[wi], w_refs[bi], get_pad, False)
        for blk in descr["blocks"]:
            x = _resblock_body(x, w_refs, get_pad, blk)

        if head:
            wi, bi = descr["last_conv"]
            # conv_out has exactly 3 output channels (== original out[:, :3]).
            x = _conv3x3_body(x, w_refs[wi], w_refs[bi], get_pad, True)
            j = pl.program_id(1)

            @pl.when(j == 0)
            def _():
                acc_ref[...] = jnp.zeros_like(acc_ref)

            acc_ref[...] = acc_ref[...] + jnp.tanh(x)    # EUP, free in epilogue

            @pl.when(j == n_frames - 1)
            def _():
                o_ref[0] = tex_ref[0] + acc_ref[...] * (1.0 / n_frames)
        else:
            o_ref[0] = x

    return kernel


# ----------------------------------------------------------------------------
# pallas_call wrapper for a fused stage
# ----------------------------------------------------------------------------
def run_stage(x, stage, *, head=False, tex=None, b=None, n=None):
    N, h, w, cin = x.shape
    flat_w = stage["flat_weights"]
    descr = stage["descr"]
    pad_channels = stage["pad_channels"]
    out_c = stage["out_channels"]
    nw = len(flat_w)

    scratch = [pltpu.VMEM((h + 2, w + 2, c), jnp.float32) for c in pad_channels]

    if head:
        scratch.append(pltpu.VMEM((h, w, 3), jnp.float32))      # tanh accumulator
        grid = (b, n)
        in_specs = [
            pl.BlockSpec((1, h, w, cin), lambda i, j: (i * n + j, 0, 0, 0)),
            pl.BlockSpec((1, h, w, 3), lambda i, j: (i, 0, 0, 0)),
        ]
        in_specs += [pl.BlockSpec(a.shape, lambda i, j: (0, 0)) for a in flat_w]
        out_specs = pl.BlockSpec((1, h, w, 3), lambda i, j: (i, 0, 0, 0))
        out_shape = jax.ShapeDtypeStruct((b, h, w, 3), jnp.float32)
        dims = ("parallel", "arbitrary")
        operands = (x, tex, *flat_w)
        n_frames = n
    else:
        grid = (N,)
        in_specs = [pl.BlockSpec((1, h, w, cin), lambda i: (i, 0, 0, 0))]
        in_specs += [pl.BlockSpec(a.shape, lambda i: (0, 0)) for a in flat_w]
        out_specs = pl.BlockSpec((1, h, w, out_c), lambda i: (i, 0, 0, 0))
        out_shape = jax.ShapeDtypeStruct((N, h, w, out_c), jnp.float32)
        dims = ("parallel",)
        operands = (x, *flat_w)
        n_frames = None

    kernel = _make_stage_kernel(descr, nw, pad_channels, head, n_frames)
    return pl.pallas_call(
        kernel,
        out_shape=out_shape,
        grid=grid,
        in_specs=in_specs,
        out_specs=out_specs,
        scratch_shapes=scratch,
        compiler_params=pltpu.CompilerParams(dimension_semantics=dims),
    )(*operands)


# ----------------------------------------------------------------------------
# Plain-JAX spatial resampling between fused stages (reshape/broadcast only)
# ----------------------------------------------------------------------------
def avgpool2_nhwc(x):
    n, h, w, c = x.shape
    return x.reshape(n, h // 2, 2, w // 2, 2, c).mean(axis=(2, 4))


def upsample2_nearest_nhwc(x):
    n, h, w, c = x.shape
    x = jnp.broadcast_to(x[:, :, None, :, None, :], (n, h, 2, w, 2, c))
    return x.reshape(n, 2 * h, 2 * w, c)


# ----------------------------------------------------------------------------
# Generator parameters / stage descriptors
# ----------------------------------------------------------------------------
def _conv3x3_init(key, cin, cout):
    w = jax.random.normal(key, (9 * cin, cout), jnp.float32) / np.sqrt(9 * cin)
    b = jnp.zeros((1, cout), jnp.float32)
    return w, b


def _conv1x1_init(key, cin, cout):
    w = jax.random.normal(key, (cin, cout), jnp.float32) / np.sqrt(cin)
    b = jnp.zeros((1, cout), jnp.float32)
    return w, b


def _resblock_init(key, cin, cout):
    k1, k2, k3 = jax.random.split(key, 3)
    w1, b1 = _conv3x3_init(k1, cin, cout)
    w2, b2 = _conv3x3_init(k2, cout, cout)
    blk = dict(w1=w1, b1=b1, w2=w2, b2=b2)
    if cin != cout:
        ws, bs = _conv1x1_init(k3, cin, cout)
        blk.update(ws=ws, bs=bs)
    return blk


def _prepare_stage(raw):
    """Flatten weights into a list and build an index-based descriptor."""
    flat = []

    def add(a):
        flat.append(a)
        return len(flat) - 1

    descr = {"blocks": []}
    pad_cins = set()
    out_c = None
    if "first_conv" in raw:
        w, bb = raw["first_conv"]
        pad_cins.add(w.shape[0] // 9)
        descr["first_conv"] = (add(w), add(bb))
        out_c = w.shape[1]
    for blk in raw["blocks"]:
        d = {k: add(blk[k]) for k in ("w1", "b1", "w2", "b2")}
        pad_cins.add(blk["w1"].shape[0] // 9)
        pad_cins.add(blk["w2"].shape[0] // 9)
        if "ws" in blk:
            d["ws"] = add(blk["ws"])
            d["bs"] = add(blk["bs"])
        descr["blocks"].append(d)
        out_c = blk["w2"].shape[1]
    if "last_conv" in raw:
        w, bb = raw["last_conv"]
        pad_cins.add(w.shape[0] // 9)
        descr["last_conv"] = (add(w), add(bb))
        out_c = 3
    return dict(flat_weights=flat, descr=descr, pad_channels=sorted(pad_cins),
                out_channels=out_c, pre=raw.get("pre"), post=raw.get("post"))


def init_generator_stages(key, args):
    num_down = int(math.log2(args.image_size // args.enh_bottleneck_tensor_size))
    keys = iter(jax.random.split(key, 256))

    first_conv = _conv3x3_init(next(keys), 6, args.enh_num_channels)
    raw_stages = []
    chan = args.enh_num_channels
    for i in range(1, num_down + 1):
        c_in, chan = chan, min(int(args.enh_num_channels * 2 ** i),
                               args.enh_max_channels)
        raw_stages.append(dict(blocks=[_resblock_init(next(keys), c_in, chan)],
                               post="down"))
    raw_stages.append(dict(blocks=[_resblock_init(next(keys), chan, chan)
                                   for _ in range(args.enh_num_blocks)]))
    for i in range(num_down - 1, -1, -1):
        c_in, chan = chan, min(int(args.enh_num_channels * 2 ** i),
                               args.enh_max_channels)
        raw_stages.append(dict(blocks=[_resblock_init(next(keys), c_in, chan)],
                               pre="up"))
    last_conv = _conv3x3_init(next(keys), chan, 3)
    raw_stages[0]["first_conv"] = first_conv
    raw_stages[-1]["last_conv"] = last_conv      # enh_norm_layer_type='none'
    return [_prepare_stage(s) for s in raw_stages]


def generator_forward(net_in, tex, stages, b, n):
    # net_in: (b*n, H, W, 6) NHWC ; tex: (b, H, W, 3) ; returns new tex (b,H,W,3)
    x = net_in
    last = len(stages) - 1
    for idx, st in enumerate(stages):
        if st["pre"] == "up":
            x = upsample2_nearest_nhwc(x)
        if idx == last:
            return run_stage(x, st, head=True, tex=tex, b=b, n=n)
        x = run_stage(x, st)
        if st["post"] == "down":
            x = avgpool2_nhwc(x)


# ----------------------------------------------------------------------------
# grid_sample (bilinear, zeros padding, align_corners=False) - plain JAX glue
# ----------------------------------------------------------------------------
def grid_sample_bilinear_nhwc(img, grid):
    # img: (N, H, W, C), grid: (N, Ho, Wo, 2) with values in [-1, 1]
    n_, h_, w_, c_ = img.shape
    gx = grid[..., 0]
    gy = grid[..., 1]
    ix = ((gx + 1.0) * w_ - 1.0) / 2.0
    iy = ((gy + 1.0) * h_ - 1.0) / 2.0
    ix0 = jnp.floor(ix)
    iy0 = jnp.floor(iy)

    def sample(im, yy, xx):
        valid = (xx >= 0) & (xx <= w_ - 1) & (yy >= 0) & (yy <= h_ - 1)
        xc = jnp.clip(xx, 0, w_ - 1).astype(jnp.int32)
        yc = jnp.clip(yy, 0, h_ - 1).astype(jnp.int32)
        v = im[yc, xc]                               # (Ho, Wo, C)
        return v * valid[..., None].astype(im.dtype)

    def per_batch(im, ix_, iy_, ix0_, iy0_):
        wx1 = ix_ - ix0_
        wx0 = 1.0 - wx1
        wy1 = iy_ - iy0_
        wy0 = 1.0 - wy1
        v00 = sample(im, iy0_, ix0_)
        v01 = sample(im, iy0_, ix0_ + 1)
        v10 = sample(im, iy0_ + 1, ix0_)
        v11 = sample(im, iy0_ + 1, ix0_ + 1)
        return (v00 * (wy0 * wx0)[..., None] + v01 * (wy0 * wx1)[..., None]
                + v10 * (wy1 * wx0)[..., None] + v11 * (wy1 * wx1)[..., None])

    return jax.vmap(per_batch)(img, ix, iy, ix0, iy0)


# ----------------------------------------------------------------------------
# NetworkWrapper.forward
# ----------------------------------------------------------------------------
RGB_LOSSES = {
    "sse": lambda fake, real: jnp.sum((real - fake) ** 2) / 2.0,
    "l1": lambda fake, real: jnp.sum(jnp.abs(real - fake)),
}


def network_wrapper_forward(data_dict, stages, args, networks_to_train):
    rgb_loss = RGB_LOSSES[args.enh_guiding_rgb_loss_type]

    b, t, c, h, w = data_dict["pred_target_delta_lf_rgbs"].shape
    n = data_dict["pred_source_uvs"].shape[1]

    to_nhwc = lambda a: jnp.transpose(a, (0, 2, 3, 1))
    to_nchw = lambda a: jnp.transpose(a, (0, 3, 1, 2))

    source_uvs = data_dict["pred_source_uvs"].reshape(b * n, h, w, 2)
    source_delta = to_nhwc(data_dict["pred_source_delta_lf_rgbs"].reshape(b * n, c, h, w))
    source_imgs = to_nhwc(data_dict["source_imgs"].reshape(b * n, c, h, w))
    enh_tex = to_nhwc(data_dict["pred_tex_hf_rgbs"][:, 0])           # (b, th, tw, 3)
    target_uvs = data_dict["pred_target_uvs"].reshape(b * t, h, w, 2)
    target_delta = to_nhwc(data_dict["pred_target_delta_lf_rgbs"].reshape(b * t, c, h, w))

    if args.enh_apply_masks and args.inf_pred_segmentation:
        target_imgs = data_dict["target_imgs"].reshape(b * t, c, h, w)
        pred_target_imgs = data_dict["pred_target_imgs"].reshape(b * t, c, h, w)
    if args.inf_pred_segmentation:
        src_segs = to_nhwc(data_dict["pred_source_segs"].reshape(b * n, 1, h, w))
        tgt_segs_nchw = data_dict["pred_target_segs"].reshape(b * t, 1, h, w)
        tgt_segs = to_nhwc(tgt_segs_nchw)
        source_imgs = source_imgs * src_segs - (1.0 - src_segs)

    th, tw = enh_tex.shape[1:3]

    # (enh_detach_inputs / .detach() toggles have no value effect in a pure forward)
    for _ in range(args.enh_unrolling_depth):
        tex_rep = jnp.broadcast_to(
            enh_tex[:, None], (b, n, th, tw, 3)).reshape(b * n, th, tw, 3)

        # gradient of the guiding RGB loss w.r.t. the replicated texture
        def loss_fn(tex_in):
            pred = source_delta + grid_sample_bilinear_nhwc(tex_in, source_uvs)
            if args.inf_pred_segmentation:
                pred = pred * src_segs - (1.0 - src_segs)
            return rgb_loss(pred, source_imgs)

        tex_grad = jax.grad(loss_fn)(tex_rep)
        net_in = jnp.concatenate([tex_rep, tex_grad], axis=-1)      # (b*n, th, tw, 6)

        # fused generator + tanh + mean-over-n + residual texture update
        enh_tex = generator_forward(net_in, enh_tex, stages, b, n)  # (b, th, tw, 3)

    enh_tex_t = jnp.broadcast_to(
        enh_tex[:, None], (b, t, th, tw, 3)).reshape(b * t, th, tw, 3)

    pred_enh_delta_hf = grid_sample_bilinear_nhwc(enh_tex_t, target_uvs)
    pred_enh_target_imgs = target_delta + pred_enh_delta_hf

    calc_detached = ("inference_generator" in networks_to_train) or args.inf_calc_grad
    if calc_detached:
        pred_enh_lf_detached = jax.lax.stop_gradient(target_delta) + pred_enh_delta_hf

    if args.inf_pred_segmentation and args.enh_apply_masks:
        pred_target_imgs = pred_target_imgs * tgt_segs_nchw - (1.0 - tgt_segs_nchw)
        target_imgs = target_imgs * tgt_segs_nchw - (1.0 - tgt_segs_nchw)
        pred_enh_target_imgs = pred_enh_target_imgs * tgt_segs - (1.0 - tgt_segs)
        if calc_detached:
            pred_enh_lf_detached = pred_enh_lf_detached * tgt_segs - (1.0 - tgt_segs)

    reshape_t = lambda d: d.reshape(b, t, *d.shape[1:])
    out = dict(data_dict)
    out["pred_enh_tex_hf_rgbs"] = reshape_t(to_nchw(enh_tex_t))
    out["pred_enh_target_imgs"] = reshape_t(to_nchw(pred_enh_target_imgs))
    out["pred_enh_target_delta_hf_rgbs"] = reshape_t(to_nchw(pred_enh_delta_hf))
    if calc_detached:
        out["pred_enh_target_imgs_lf_detached"] = reshape_t(to_nchw(pred_enh_lf_detached))
    if args.enh_apply_masks and args.inf_pred_segmentation:
        out["target_imgs"] = reshape_t(target_imgs)
        out["pred_target_imgs"] = reshape_t(pred_target_imgs)
    return out


# ----------------------------------------------------------------------------
# main
# ----------------------------------------------------------------------------
if __name__ == "__main__":
    # small synthetic config (scaled-down versions of the parser defaults)
    args = SimpleNamespace(
        image_size=16,
        enh_num_channels=8,
        enh_max_channels=16,
        enh_bottleneck_tensor_size=8,
        enh_num_blocks=2,
        enh_unrolling_depth=2,
        enh_guiding_rgb_loss_type="sse",
        enh_detach_inputs=True,
        enh_norm_layer_type="none",
        enh_activation_type="leakyrelu",
        enh_downsampling_type="avgpool",
        enh_upsampling_type="nearest",
        enh_apply_masks=True,
        inf_pred_segmentation=True,
        inf_calc_grad=False,
        num_source_frames=2,
    )

    b, n, t, c, h, w = 1, 2, 1, 3, 16, 16

    key = jax.random.PRNGKey(0)
    keys = jax.random.split(key, 12)

    data_dict = {
        "pred_source_uvs": jax.random.uniform(keys[0], (b, n, h, w, 2),
                                              minval=-1.0, maxval=1.0),
        "pred_source_delta_lf_rgbs": 0.1 * jax.random.normal(keys[1], (b, n, c, h, w)),
        "source_imgs": jnp.clip(jax.random.normal(keys[2], (b, n, c, h, w)), -1.0, 1.0),
        "pred_tex_hf_rgbs": 0.1 * jax.random.normal(keys[3], (b, 1, c, h, w)),
        "pred_target_uvs": jax.random.uniform(keys[4], (b, t, h, w, 2),
                                              minval=-1.0, maxval=1.0),
        "pred_target_delta_lf_rgbs": 0.1 * jax.random.normal(keys[5], (b, t, c, h, w)),
        "target_imgs": jnp.clip(jax.random.normal(keys[6], (b, t, c, h, w)), -1.0, 1.0),
        "pred_target_imgs": jnp.clip(jax.random.normal(keys[7], (b, t, c, h, w)), -1.0, 1.0),
        "pred_source_segs": (jax.random.uniform(keys[8], (b, n, 1, h, w)) > 0.3
                             ).astype(jnp.float32),
        "pred_target_segs": (jax.random.uniform(keys[9], (b, t, 1, h, w)) > 0.3
                             ).astype(jnp.float32),
    }
    data_dict = {k: jnp.asarray(v, jnp.float32) for k, v in data_dict.items()}

    stages = init_generator_stages(keys[10], args)

    out = network_wrapper_forward(
        data_dict, stages, args, networks_to_train=["texture_enhancer"])

    for leaf in jax.tree_util.tree_leaves(out):
        jax.block_until_ready(leaf)

    assert out["pred_enh_tex_hf_rgbs"].shape == (b, t, 3, h, w)
    assert out["pred_enh_target_imgs"].shape == (b, t, 3, h, w)
    assert out["pred_enh_target_delta_hf_rgbs"].shape == (b, t, 3, h, w)
    assert bool(jnp.all(jnp.isfinite(out["pred_enh_target_imgs"])))
    assert bool(jnp.all(jnp.isfinite(out["pred_enh_tex_hf_rgbs"])))

    print("KERNEL_OK")
</pallas_src>

<mosaic_0001>
module attributes {stable_mosaic.version = 11 : i64} {
  func.func @kernel(%arg0: i32, %arg1: memref<1x16x16x6xf32, #tpu.memory_space<vmem>>, %arg2: memref<54x8xf32, #tpu.memory_space<vmem>>, %arg3: memref<1x8xf32, #tpu.memory_space<vmem>>, %arg4: memref<72x16xf32, #tpu.memory_space<vmem>>, %arg5: memref<1x16xf32, #tpu.memory_space<vmem>>, %arg6: memref<144x16xf32, #tpu.memory_space<vmem>>, %arg7: memref<1x16xf32, #tpu.memory_space<vmem>>, %arg8: memref<8x16xf32, #tpu.memory_space<vmem>>, %arg9: memref<1x16xf32, #tpu.memory_space<vmem>>, %arg10: memref<1x16x16x16xf32, #tpu.memory_space<vmem>>, %arg11: memref<18x18x6xf32, #tpu.memory_space<vmem>>, %arg12: memref<18x18x8xf32, #tpu.memory_space<vmem>>, %arg13: memref<18x18x16xf32, #tpu.memory_space<vmem>>) attributes {dimension_semantics = [#tpu.dimension_semantics<parallel>], iteration_bounds = array<i64: 2>, scalar_prefetch = 0 : i64, scratch_operands = 3 : i64, tpu.core_type = #tpu.core_type<tc>, window_params = [{transform_indices = @transform_0, window_bounds = array<i64: 1, 16, 16, 6>}, {pipeline_mode = #tpu.pipeline_mode<synchronous>, transform_indices = @transform_1, window_bounds = array<i64: 54, 8>}, {pipeline_mode = #tpu.pipeline_mode<synchronous>, transform_indices = @transform_2, window_bounds = array<i64: 1, 8>}, {pipeline_mode = #tpu.pipeline_mode<synchronous>, transform_indices = @transform_3, window_bounds = array<i64: 72, 16>}, {pipeline_mode = #tpu.pipeline_mode<synchronous>, transform_indices = @transform_4, window_bounds = array<i64: 1, 16>}, {pipeline_mode = #tpu.pipeline_mode<synchronous>, transform_indices = @transform_5, window_bounds = array<i64: 144, 16>}, {pipeline_mode = #tpu.pipeline_mode<synchronous>, transform_indices = @transform_6, window_bounds = array<i64: 1, 16>}, {pipeline_mode = #tpu.pipeline_mode<synchronous>, transform_indices = @transform_7, window_bounds = array<i64: 8, 16>}, {pipeline_mode = #tpu.pipeline_mode<synchronous>, transform_indices = @transform_8, window_bounds = array<i64: 1, 16>}, {transform_indices = @transform_9, window_bounds = array<i64: 1, 16, 16, 16>}]} {
    %cst = arith.constant 0.000000e+00 : f32
    %0 = vector.broadcast %cst : f32 to vector<18x18x6xf32>
    %c0 = arith.constant 0 : index
    %c0_0 = arith.constant 0 : index
    %c0_1 = arith.constant 0 : index
    %1 = vector.load %arg11[%c0, %c0_0, %c0_1] : memref<18x18x6xf32, #tpu.memory_space<vmem>>, vector<18x18x6xf32>
    tpu.vector_store %arg11[%c0, %c0_0, %c0_1], %0 {strides = array<i32>} : memref<18x18x6xf32, #tpu.memory_space<vmem>>, vector<18x18x6xf32>,
    %cst_2 = arith.constant 0.000000e+00 : f32
    %2 = vector.broadcast %cst_2 : f32 to vector<18x18x8xf32>
    %c0_3 = arith.constant 0 : index
    %c0_4 = arith.constant 0 : index
    %c0_5 = arith.constant 0 : index
    %3 = vector.load %arg12[%c0_3, %c0_4, %c0_5] : memref<18x18x8xf32, #tpu.memory_space<vmem>>, vector<18x18x8xf32>
    tpu.vector_store %arg12[%c0_3, %c0_4, %c0_5], %2 {strides = array<i32>} : memref<18x18x8xf32, #tpu.memory_space<vmem>>, vector<18x18x8xf32>,
    %cst_6 = arith.constant 0.000000e+00 : f32
    %4 = vector.broadcast %cst_6 : f32 to vector<18x18x16xf32>
    %c0_7 = arith.constant 0 : index
    %c0_8 = arith.constant 0 : index
    %c0_9 = arith.constant 0 : index
    %5 = vector.load %arg13[%c0_7, %c0_8, %c0_9] : memref<18x18x16xf32, #tpu.memory_space<vmem>>, vector<18x18x16xf32>
    tpu.vector_store %arg13[%c0_7, %c0_8, %c0_9], %4 {strides = array<i32>} : memref<18x18x16xf32, #tpu.memory_space<vmem>>, vector<18x18x16xf32>,
    %c0_10 = arith.constant 0 : index
    %c0_11 = arith.constant 0 : index
    %c0_12 = arith.constant 0 : index
    %c0_13 = arith.constant 0 : index
    %6 = vector.load %arg1[%c0_10, %c0_11, %c0_12, %c0_13] : memref<1x16x16x6xf32, #tpu.memory_space<vmem>>, vector<1x16x16x6xf32>
    %7 = vector.shape_cast %6 : vector<1x16x16x6xf32> to vector<16x16x6xf32>
    %c1 = arith.constant 1 : index
    %c1_14 = arith.constant 1 : index
    %c0_15 = arith.constant 0 : index
    %8 = vector.load %arg11[%c1, %c1_14, %c0_15] : memref<18x18x6xf32, #tpu.memory_space<vmem>>, vector<16x16x6xf32>
    tpu.vector_store %arg11[%c1, %c1_14, %c0_15], %7 {strides = array<i32>} : memref<18x18x6xf32, #tpu.memory_space<vmem>>, vector<16x16x6xf32>,
    %c0_16 = arith.constant 0 : index
    %c0_17 = arith.constant 0 : index
    %c0_18 = arith.constant 0 : index
    %9 = vector.load %arg11[%c0_16, %c0_17, %c0_18] : memref<18x18x6xf32, #tpu.memory_space<vmem>>, vector<16x16x6xf32>
    %10 = vector.shape_cast %9 : vector<16x16x6xf32> to vector<256x6xf32>
    %c0_19 = arith.constant 0 : index
    %c1_20 = arith.constant 1 : index
    %c0_21 = arith.constant 0 : index
    %11 = vector.load %arg11[%c0_19, %c1_20, %c0_21] : memref<18x18x6xf32, #tpu.memory_space<vmem>>, vector<16x16x6xf32>
    %12 = vector.shape_cast %11 : vector<16x16x6xf32> to vector<256x6xf32>
    %c0_22 = arith.constant 0 : index
    %c2 = arith.constant 2 : index
    %c0_23 = arith.constant 0 : index
    %13 = vector.load %arg11[%c0_22, %c2, %c0_23] : memref<18x18x6xf32, #tpu.memory_space<vmem>>, vector<16x16x6xf32>
    %14 = vector.shape_cast %13 : vector<16x16x6xf32> to vector<256x6xf32>
    %c1_24 = arith.constant 1 : index
    %c0_25 = arith.constant 0 : index
    %c0_26 = arith.constant 0 : index
    %15 = vector.load %arg11[%c1_24, %c0_25, %c0_26] : memref<18x18x6xf32, #tpu.memory_space<vmem>>, vector<16x16x6xf32>
    %16 = vector.shape_cast %15 : vector<16x16x6xf32> to vector<256x6xf32>
    %c1_27 = arith.constant 1 : index
    %c1_28 = arith.constant 1 : index
    %c0_29 = arith.constant 0 : index
    %17 = vector.load %arg11[%c1_27, %c1_28, %c0_29] : memref<18x18x6xf32, #tpu.memory_space<vmem>>, vector<16x16x6xf32>
    %18 = vector.shape_cast %17 : vector<16x16x6xf32> to vector<256x6xf32>
    %c1_30 = arith.constant 1 : index
    %c2_31 = arith.constant 2 : index
    %c0_32 = arith.constant 0 : index
    %19 = vector.load %arg11[%c1_30, %c2_31, %c0_32] : memref<18x18x6xf32, #tpu.memory_space<vmem>>, vector<16x16x6xf32>
    %20 = vector.shape_cast %19 : vector<16x16x6xf32> to vector<256x6xf32>
    %c2_33 = arith.constant 2 : index
    %c0_34 = arith.constant 0 : index
    %c0_35 = arith.constant 0 : index
    %21 = vector.load %arg11[%c2_33, %c0_34, %c0_35] : memref<18x18x6xf32, #tpu.memory_space<vmem>>, vector<16x16x6xf32>
    %22 = vector.shape_cast %21 : vector<16x16x6xf32> to vector<256x6xf32>
    %c2_36 = arith.constant 2 : index
    %c1_37 = arith.constant 1 : index
    %c0_38 = arith.constant 0 : index
    %23 = vector.load %arg11[%c2_36, %c1_37, %c0_38] : memref<18x18x6xf32, #tpu.memory_space<vmem>>, vector<16x16x6xf32>
    %24 = vector.shape_cast %23 : vector<16x16x6xf32> to vector<256x6xf32>
    %c2_39 = arith.constant 2 : index
    %c2_40 = arith.constant 2 : index
    %c0_41 = arith.constant 0 : index
    %25 = vector.load %arg11[%c2_39, %c2_40, %c0_41] : memref<18x18x6xf32, #tpu.memory_space<vmem>>, vector<16x16x6xf32>
    %26 = vector.shape_cast %25 : vector<16x16x6xf32> to vector<256x6xf32>
    %27 = tpu.concatenate %10, %12, %14, %16, %18, %20, %22, %24, %26 in 1 : vector<256x6xf32>, vector<256x6xf32>, vector<256x6xf32>, vector<256x6xf32>, vector<256x6xf32>, vector<256x6xf32>, vector<256x6xf32>, vector<256x6xf32>, vector<256x6xf32> -> vector<256x54xf32>
    %28 = arith.truncf %27 : vector<256x54xf32> to vector<256x54xbf16>
    %c0_42 = arith.constant 0 : index
    %c0_43 = arith.constant 0 : index
    %29 = vector.load %arg2[%c0_42, %c0_43] : memref<54x8xf32, #tpu.memory_space<vmem>>, vector<54x8xf32>
    %30 = arith.truncf %29 : vector<54x8xf32> to vector<54x8xbf16>
    %cst_44 = arith.constant dense<0.000000e+00> : vector<256x8xf32>
    %31 = tpu.matmul %28, %30, %cst_44 {dimension_numbers = #tpu.dot_dimension_numbers<[1], [0], [0], [1], [0, 0, 1, 1], [], []>} : vector<256x54xbf16>, vector<54x8xbf16>, vector<256x8xf32> -> vector<256x8xf32>
    %c0_45 = arith.constant 0 : index
    %c0_46 = arith.constant 0 : index
    %32 = vector.load %arg3[%c0_45, %c0_46] : memref<1x8xf32, #tpu.memory_space<vmem>>, vector<1x8xf32>
    %33 = vector.broadcast %32 : vector<1x8xf32> to vector<256x8xf32>
    %34 = arith.addf %31, %33 : vector<256x8xf32>
    %35 = vector.shape_cast %34 : vector<256x8xf32> to vector<16x16x8xf32>
    %cst_47 = arith.constant 0.000000e+00 : f32
    %36 = vector.broadcast %cst_47 : f32 to vector<16x16x8xf32>
    %37 = arith.cmpf oge, %35, %36 : vector<16x16x8xf32>
    %cst_48 = arith.constant 2.000000e-01 : f32
    %38 = vector.broadcast %cst_48 : f32 to vector<16x16x8xf32>
    %39 = arith.mulf %38, %35 : vector<16x16x8xf32>
    %40 = arith.select %37, %35, %39 : vector<16x16x8xi1>, vector<16x16x8xf32>
    %c1_49 = arith.constant 1 : index
    %c1_50 = arith.constant 1 : index
    %c0_51 = arith.constant 0 : index
    %41 = vector.load %arg12[%c1_49, %c1_50, %c0_51] : memref<18x18x8xf32, #tpu.memory_space<vmem>>, vector<16x16x8xf32>
    tpu.vector_store %arg12[%c1_49, %c1_50, %c0_51], %40 {strides = array<i32>} : memref<18x18x8xf32, #tpu.memory_space<vmem>>, vector<16x16x8xf32>,
    %c0_52 = arith.constant 0 : index
    %c0_53 = arith.constant 0 : index
    %c0_54 = arith.constant 0 : index
    %42 = vector.load %arg12[%c0_52, %c0_53, %c0_54] : memref<18x18x8xf32, #tpu.memory_space<vmem>>, vector<16x16x8xf32>
    %43 = vector.shape_cast %42 : vector<16x16x8xf32> to vector<256x8xf32>
    %c0_55 = arith.constant 0 : index
    %c1_56 = arith.constant 1 : index
    %c0_57 = arith.constant 0 : index
    %44 = vector.load %arg12[%c0_55, %c1_56, %c0_57] : memref<18x18x8xf32, #tpu.memory_space<vmem>>, vector<16x16x8xf32>
    %45 = vector.shape_cast %44 : vector<16x16x8xf32> to vector<256x8xf32>
    %c0_58 = arith.constant 0 : index
    %c2_59 = arith.constant 2 : index
    %c0_60 = arith.constant 0 : index
    %46 = vector.load %arg12[%c0_58, %c2_59, %c0_60] : memref<18x18x8xf32, #tpu.memory_space<vmem>>, vector<16x16x8xf32>
    %47 = vector.shape_cast %46 : vector<16x16x8xf32> to vector<256x8xf32>
    %c1_61 = arith.constant 1 : index
    %c0_62 = arith.constant 0 : index
    %c0_63 = arith.constant 0 : index
    %48 = vector.load %arg12[%c1_61, %c0_62, %c0_63] : memref<18x18x8xf32, #tpu.memory_space<vmem>>, vector<16x16x8xf32>
    %49 = vector.shape_cast %48 : vector<16x16x8xf32> to vector<256x8xf32>
    %c1_64 = arith.constant 1 : index
    %c1_65 = arith.constant 1 : index
    %c0_66 = arith.constant 0 : index
    %50 = vector.load %arg12[%c1_64, %c1_65, %c0_66] : memref<18x18x8xf32, #tpu.memory_space<vmem>>, vector<16x16x8xf32>
    %51 = vector.shape_cast %50 : vector<16x16x8xf32> to vector<256x8xf32>
    %c1_67 = arith.constant 1 : index
    %c2_68 = arith.constant 2 : index
    %c0_69 = arith.constant 0 : index
    %52 = vector.load %arg12[%c1_67, %c2_68, %c0_69] : memref<18x18x8xf32, #tpu.memory_space<vmem>>, vector<16x16x8xf32>
    %53 = vector.shape_cast %52 : vector<16x16x8xf32> to vector<256x8xf32>
    %c2_70 = arith.constant 2 : index
    %c0_71 = arith.constant 0 : index
    %c0_72 = arith.constant 0 : index
    %54 = vector.load %arg12[%c2_70, %c0_71, %c0_72] : memref<18x18x8xf32, #tpu.memory_space<vmem>>, vector<16x16x8xf32>
    %55 = vector.shape_cast %54 : vector<16x16x8xf32> to vector<256x8xf32>
    %c2_73 = arith.constant 2 : index
    %c1_74 = arith.constant 1 : index
    %c0_75 = arith.constant 0 : index
    %56 = vector.load %arg12[%c2_73, %c1_74, %c0_75] : memref<18x18x8xf32, #tpu.memory_space<vmem>>, vector<16x16x8xf32>
    %57 = vector.shape_cast %56 : vector<16x16x8xf32> to vector<256x8xf32>
    %c2_76 = arith.constant 2 : index
    %c2_77 = arith.constant 2 : index
    %c0_78 = arith.constant 0 : index
    %58 = vector.load %arg12[%c2_76, %c2_77, %c0_78] : memref<18x18x8xf32, #tpu.memory_space<vmem>>, vector<16x16x8xf32>
    %59 = vector.shape_cast %58 : vector<16x16x8xf32> to vector<256x8xf32>
    %60 = tpu.concatenate %43, %45, %47, %49, %51, %53, %55, %57, %59 in 1 : vector<256x8xf32>, vector<256x8xf32>, vector<256x8xf32>, vector<256x8xf32>, vector<256x8xf32>, vector<256x8xf32>, vector<256x8xf32>, vector<256x8xf32>, vector<256x8xf32> -> vector<256x72xf32>
    %61 = arith.truncf %60 : vector<256x72xf32> to vector<256x72xbf16>
    %c0_79 = arith.constant 0 : index
    %c0_80 = arith.constant 0 : index
    %62 = vector.load %arg4[%c0_79, %c0_80] : memref<72x16xf32, #tpu.memory_space<vmem>>, vector<72x16xf32>
    %63 = arith.truncf %62 : vector<72x16xf32> to vector<72x16xbf16>
    %cst_81 = arith.constant dense<0.000000e+00> : vector<256x16xf32>
    %64 = tpu.matmul %61, %63, %cst_81 {dimension_numbers = #tpu.dot_dimension_numbers<[1], [0], [0], [1], [0, 0, 1, 1], [], []>} : vector<256x72xbf16>, vector<72x16xbf16>, vector<256x16xf32> -> vector<256x16xf32>
    %c0_82 = arith.constant 0 : index
    %c0_83 = arith.constant 0 : index
    %65 = vector.load %arg5[%c0_82, %c0_83] : memref<1x16xf32, #tpu.memory_space<vmem>>, vector<1x16xf32>
    %66 = vector.broadcast %65 : vector<1x16xf32> to vector<256x16xf32>
    %67 = arith.addf %64, %66 : vector<256x16xf32>
    %68 = vector.shape_cast %67 : vector<256x16xf32> to vector<16x16x16xf32>
    %cst_84 = arith.constant 0.000000e+00 : f32
    %69 = vector.broadcast %cst_84 : f32 to vector<16x16x16xf32>
    %70 = arith.cmpf oge, %68, %69 : vector<16x16x16xf32>
    %cst_85 = arith.constant 2.000000e-01 : f32
    %71 = vector.broadcast %cst_85 : f32 to vector<16x16x16xf32>
    %72 = arith.mulf %71, %68 : vector<16x16x16xf32>
    %73 = arith.select %70, %68, %72 : vector<16x16x16xi1>, vector<16x16x16xf32>
    %c1_86 = arith.constant 1 : index
    %c1_87 = arith.constant 1 : index
    %c0_88 = arith.constant 0 : index
    %74 = vector.load %arg13[%c1_86, %c1_87, %c0_88] : memref<18x18x16xf32, #tpu.memory_space<vmem>>, vector<16x16x16xf32>
    tpu.vector_store %arg13[%c1_86, %c1_87, %c0_88], %73 {strides = array<i32>} : memref<18x18x16xf32, #tpu.memory_space<vmem>>, vector<16x16x16xf32>,
    %c0_89 = arith.constant 0 : index
    %c0_90 = arith.constant 0 : index
    %c0_91 = arith.constant 0 : index
    %75 = vector.load %arg13[%c0_89, %c0_90, %c0_91] : memref<18x18x16xf32, #tpu.memory_space<vmem>>, vector<16x16x16xf32>
    %76 = vector.shape_cast %75 : vector<16x16x16xf32> to vector<256x16xf32>
    %c0_92 = arith.constant 0 : index
    %c1_93 = arith.constant 1 : index
    %c0_94 = arith.constant 0 : index
    %77 = vector.load %arg13[%c0_92, %c1_93, %c0_94] : memref<18x18x16xf32, #tpu.memory_space<vmem>>, vector<16x16x16xf32>
    %78 = vector.shape_cast %77 : vector<16x16x16xf32> to vector<256x16xf32>
    %c0_95 = arith.constant 0 : index
    %c2_96 = arith.constant 2 : index
    %c0_97 = arith.constant 0 : index
    %79 = vector.load %arg13[%c0_95, %c2_96, %c0_97] : memref<18x18x16xf32, #tpu.memory_space<vmem>>, vector<16x16x16xf32>
    %80 = vector.shape_cast %79 : vector<16x16x16xf32> to vector<256x16xf32>
    %c1_98 = arith.constant 1 : index
    %c0_99 = arith.constant 0 : index
    %c0_100 = arith.constant 0 : index
    %81 = vector.load %arg13[%c1_98, %c0_99, %c0_100] : memref<18x18x16xf32, #tpu.memory_space<vmem>>, vector<16x16x16xf32>
    %82 = vector.shape_cast %81 : vector<16x16x16xf32> to vector<256x16xf32>
    %c1_101 = arith.constant 1 : index
    %c1_102 = arith.constant 1 : index
    %c0_103 = arith.constant 0 : index
    %83 = vector.load %arg13[%c1_101, %c1_102, %c0_103] : memref<18x18x16xf32, #tpu.memory_space<vmem>>, vector<16x16x16xf32>
    %84 = vector.shape_cast %83 : vector<16x16x16xf32> to vector<256x16xf32>
    %c1_104 = arith.constant 1 : index
    %c2_105 = arith.constant 2 : index
    %c0_106 = arith.constant 0 : index
    %85 = vector.load %arg13[%c1_104, %c2_105, %c0_106] : memref<18x18x16xf32, #tpu.memory_space<vmem>>, vector<16x16x16xf32>
    %86 = vector.shape_cast %85 : vector<16x16x16xf32> to vector<256x16xf32>
    %c2_107 = arith.constant 2 : index
    %c0_108 = arith.constant 0 : index
    %c0_109 = arith.constant 0 : index
    %87 = vector.load %arg13[%c2_107, %c0_108, %c0_109] : memref<18x18x16xf32, #tpu.memory_space<vmem>>, vector<16x16x16xf32>
    %88 = vector.shape_cast %87 : vector<16x16x16xf32> to vector<256x16xf32>
    %c2_110 = arith.constant 2 : index
    %c1_111 = arith.constant 1 : index
    %c0_112 = arith.constant 0 : index
    %89 = vector.load %arg13[%c2_110, %c1_111, %c0_112] : memref<18x18x16xf32, #tpu.memory_space<vmem>>, vector<16x16x16xf32>
    %90 = vector.shape_cast %89 : vector<16x16x16xf32> to vector<256x16xf32>
    %c2_113 = arith.constant 2 : index
    %c2_114 = arith.constant 2 : index
    %c0_115 = arith.constant 0 : index
    %91 = vector.load %arg13[%c2_113, %c2_114, %c0_115] : memref<18x18x16xf32, #tpu.memory_space<vmem>>, vector<16x16x16xf32>
    %92 = vector.shape_cast %91 : vector<16x16x16xf32> to vector<256x16xf32>
    %93 = tpu.concatenate %76, %78, %80, %82, %84, %86, %88, %90, %92 in 1 : vector<256x16xf32>, vector<256x16xf32>, vector<256x16xf32>, vector<256x16xf32>, vector<256x16xf32>, vector<256x16xf32>, vector<256x16xf32>, vector<256x16xf32>, vector<256x16xf32> -> vector<256x144xf32>
    %94 = arith.truncf %93 : vector<256x144xf32> to vector<256x144xbf16>
    %c0_116 = arith.constant 0 : index
    %c0_117 = arith.constant 0 : index
    %95 = vector.load %arg6[%c0_116, %c0_117] : memref<144x16xf32, #tpu.memory_space<vmem>>, vector<144x16xf32>
    %96 = arith.truncf %95 : vector<144x16xf32> to vector<144x16xbf16>
    %cst_118 = arith.constant dense<0.000000e+00> : vector<256x16xf32>
    %97 = tpu.matmul %94, %96, %cst_118 {dimension_numbers = #tpu.dot_dimension_numbers<[1], [0], [0], [1], [0, 0, 1, 1], [], []>} : vector<256x144xbf16>, vector<144x16xbf16>, vector<256x16xf32> -> vector<256x16xf32>
    %c0_119 = arith.constant 0 : index
    %c0_120 = arith.constant 0 : index
    %98 = vector.load %arg7[%c0_119, %c0_120] : memref<1x16xf32, #tpu.memory_space<vmem>>, vector<1x16xf32>
    %99 = vector.broadcast %98 : vector<1x16xf32> to vector<256x16xf32>
    %100 = arith.addf %97, %99 : vector<256x16xf32>
    %101 = vector.shape_cast %100 : vector<256x16xf32> to vector<16x16x16xf32>
    %102 = vector.shape_cast %35 : vector<16x16x8xf32> to vector<256x8xf32>
    %103 = arith.truncf %102 : vector<256x8xf32> to vector<256x8xbf16>
    %c0_121 = arith.constant 0 : index
    %c0_122 = arith.constant 0 : index
    %104 = vector.load %arg8[%c0_121, %c0_122] : memref<8x16xf32, #tpu.memory_space<vmem>>, vector<8x16xf32>
    %105 = arith.truncf %104 : vector<8x16xf32> to vector<8x16xbf16>
    %cst_123 = arith.constant dense<0.000000e+00> : vector<256x16xf32>
    %106 = tpu.matmul %103, %105, %cst_123 {dimension_numbers = #tpu.dot_dimension_numbers<[1], [0], [0], [1], [0, 0, 1, 1], [], []>} : vector<256x8xbf16>, vector<8x16xbf16>, vector<256x16xf32> -> vector<256x16xf32>
    %c0_124 = arith.constant 0 : index
    %c0_125 = arith.constant 0 : index
    %107 = vector.load %arg9[%c0_124, %c0_125] : memref<1x16xf32, #tpu.memory_space<vmem>>, vector<1x16xf32>
    %108 = vector.broadcast %107 : vector<1x16xf32> to vector<256x16xf32>
    %109 = arith.addf %106, %108 : vector<256x16xf32>
    %110 = vector.shape_cast %109 : vector<256x16xf32> to vector<16x16x16xf32>
    %111 = arith.addf %101, %110 : vector<16x16x16xf32>
    %c0_126 = arith.constant 0 : index
    %c0_127 = arith.constant 0 : index
    %c0_128 = arith.constant 0 : index
    %c0_129 = arith.constant 0 : index
    %112 = vector.load %arg10[%c0_126, %c0_127, %c0_128, %c0_129] : memref<1x16x16x16xf32, #tpu.memory_space<vmem>>, vector<1x16x16x16xf32>
    %113 = vector.shape_cast %112 : vector<1x16x16x16xf32> to vector<16x16x16xf32>
    %114 = vector.shape_cast %111 : vector<16x16x16xf32> to vector<1x16x16x16xf32>
    tpu.vector_store %arg10[%c0_126, %c0_127, %c0_128, %c0_129], %114 {strides = array<i32>} : memref<1x16x16x16xf32, #tpu.memory_space<vmem>>, vector<1x16x16x16xf32>,
    return
  }
  func.func @transform_0(%arg0: i32) -> (i32, i32, i32, i32) {
    %c0_i32 = arith.constant 0 : i32
    %c0_i32_0 = arith.constant 0 : i32
    %c0_i32_1 = arith.constant 0 : i32
    %c0_i32_2 = arith.constant 0 : i32
    return %arg0, %c0_i32, %c0_i32_0, %c0_i32_1 : i32, i32, i32, i32
  }
  func.func @transform_1(%arg0: i32) -> (i32, i32) {
    %c0_i32 = arith.constant 0 : i32
    %c0_i32_0 = arith.constant 0 : i32
    %c0_i32_1 = arith.constant 0 : i32
    return %c0_i32, %c0_i32_0 : i32, i32
  }
  func.func @transform_2(%arg0: i32) -> (i32, i32) {
    %c0_i32 = arith.constant 0 : i32
    %c0_i32_0 = arith.constant 0 : i32
    %c0_i32_1 = arith.constant 0 : i32
    return %c0_i32, %c0_i32_0 : i32, i32
  }
  func.func @transform_3(%arg0: i32) -> (i32, i32) {
    %c0_i32 = arith.constant 0 : i32
    %c0_i32_0 = arith.constant 0 : i32
    %c0_i32_1 = arith.constant 0 : i32
    return %c0_i32, %c0_i32_0 : i32, i32
  }
  func.func @transform_4(%arg0: i32) -> (i32, i32) {
    %c0_i32 = arith.constant 0 : i32
    %c0_i32_0 = arith.constant 0 : i32
    %c0_i32_1 = arith.constant 0 : i32
    return %c0_i32, %c0_i32_0 : i32, i32
  }
  func.func @transform_5(%arg0: i32) -> (i32, i32) {
    %c0_i32 = arith.constant 0 : i32
    %c0_i32_0 = arith.constant 0 : i32
    %c0_i32_1 = arith.constant 0 : i32
    return %c0_i32, %c0_i32_0 : i32, i32
  }
  func.func @transform_6(%arg0: i32) -> (i32, i32) {
    %c0_i32 = arith.constant 0 : i32
    %c0_i32_0 = arith.constant 0 : i32
    %c0_i32_1 = arith.constant 0 : i32
    return %c0_i32, %c0_i32_0 : i32, i32
  }
  func.func @transform_7(%arg0: i32) -> (i32, i32) {
    %c0_i32 = arith.constant 0 : i32
    %c0_i32_0 = arith.constant 0 : i32
    %c0_i32_1 = arith.constant 0 : i32
    return %c0_i32, %c0_i32_0 : i32, i32
  }
  func.func @transform_8(%arg0: i32) -> (i32, i32) {
    %c0_i32 = arith.constant 0 : i32
    %c0_i32_0 = arith.constant 0 : i32
    %c0_i32_1 = arith.constant 0 : i32
    return %c0_i32, %c0_i32_0 : i32, i32
  }
  func.func @transform_9(%arg0: i32) -> (i32, i32, i32, i32) {
    %c0_i32 = arith.constant 0 : i32
    %c0_i32_0 = arith.constant 0 : i32
    %c0_i32_1 = arith.constant 0 : i32
    %c0_i32_2 = arith.constant 0 : i32
    return %arg0, %c0_i32, %c0_i32_0, %c0_i32_1 : i32, i32, i32, i32
  }
}

</mosaic_0001>

<llo_original>
// kernel: tpu_custom_call.1
$region0: #{tpu_custom_call.1}
  #allocation0 [shape = 'u32[]', space=smem, size = 0x4, offset = 0x4, fixed_abs, tag = 'smem constant byte address 0x4 - core index']
  #allocation1 [shape = 'u32[144,128]{1,0:T(1,128)}', space=vmem, size = 0x12000, scoped, tag = 'internal scratch']
  #allocation2 [shape = 'f32[18,18,6]{2,1,0:T(8,128)}', space=vmem, size = 0x36000, scoped, tag = 'scratch operand']
  #allocation3 [shape = 'f32[18,18,8]{2,1,0:T(8,128)}', space=vmem, size = 0x36000, scoped, tag = 'scratch operand']
  #allocation4 [shape = 'f32[18,18,16]{2,1,0:T(8,128)}', space=vmem, size = 0x36000, scoped, tag = 'scratch operand']
  %s0 = inlined_call_operand.vmem [shape: f32[2,16,16,6], index: 0, kind: input, shape index: {}]
  %s1 = inlined_call_operand.vmem [shape: f32[54,8], index: 1, kind: input, shape index: {}]
  %s2 = inlined_call_operand.vmem [shape: f32[1,8], index: 2, kind: input, shape index: {}]
  %s3 = inlined_call_operand.vmem [shape: f32[72,16], index: 3, kind: input, shape index: {}]
  %s4 = inlined_call_operand.vmem [shape: f32[1,16], index: 4, kind: input, shape index: {}]
  %s5 = inlined_call_operand.vmem [shape: f32[144,16], index: 5, kind: input, shape index: {}]
  %s6 = inlined_call_operand.vmem [shape: f32[1,16], index: 6, kind: input, shape index: {}]
  %s7 = inlined_call_operand.vmem [shape: f32[8,16], index: 7, kind: input, shape index: {}]
  %s8 = inlined_call_operand.vmem [shape: f32[1,16], index: 8, kind: input, shape index: {}]
  %s9 = inlined_call_operand.hbm [shape: f32[2,16,16,16], index: 9, kind: output, shape index: {}]
  %s10 = sld [smem:[#allocation0]]
  $region69: #{tpu_custom_call.1} parent=0
    _
  %s12 = ssub.s32 1, %s10
  %s13 = scalar_select 0, %s12, %s10
  $region1: #{tpu_custom_call.1} parent=0
    #allocation5 [shape = 'u8[262144]{0}', space=vmem, size = 0x40000, scoped, tag = 'output window, operand 0']
    #allocation6 [shape = 's32[2]{0}', space=sflag, size = 0x8, scoped, tag = 'scoped memory for tpu_custom_call.1']
    %14 = vsyncpa [#allocation6], 0
    %s15 = scalar_lea.sflag [#allocation6], 1
    %16 = vsyncpa %s15, 0
    loop: start=0, step=1, limit=4
    $region2: #{tpu_custom_call.1} parent=1 // loop_pre_header
      _
    $region3: #{tpu_custom_call.1} parent=1 // loop_header
      %s18 = sphi 0, %s22
      %p19 = scmp.ge.s32.totalorder %s18, 4
      %s28 = sphi 0, %s30
      %s31 = sphi 0, %s28
      %s32 = sphi 0, %s31
      %s48 = sphi 0, %s32
      %s52 = sphi 0, %s52
      %s54 = sphi 0, %s52
      %s55 = sphi 0, %s54
      %s69 = sphi 0, %s55
      %s73 = sphi 0, %s73
      %s75 = sphi 0, %s73
      %s76 = sphi 0, %s75
      %s90 = sphi 0, %s76
      %s94 = sphi 0, %s94
      %s96 = sphi 0, %s94
      %s97 = sphi 0, %s96
      %s111 = sphi 0, %s97
      %s115 = sphi 0, %s115
      %s117 = sphi 0, %s115
      %s118 = sphi 0, %s117
      %s132 = sphi 0, %s118
      %s136 = sphi 0, %s136
      %s138 = sphi 0, %s136
      %s139 = sphi 0, %s138
      %s153 = sphi 0, %s139
      %s157 = sphi 0, %s157
      %s159 = sphi 0, %s157
      %s160 = sphi 0, %s159
      %s174 = sphi 0, %s160
      %s178 = sphi 0, %s178
      %s180 = sphi 0, %s178
      %s181 = sphi 0, %s180
      %s195 = sphi 0, %s181
      %s199 = sphi 0, %s199
      %s201 = sphi 0, %s199
      %s202 = sphi 0, %s201
      %s216 = sphi 0, %s202
      %s222 = sphi 0, %s224
      %s225 = sphi 0, %s222
      %s226 = sphi 0, %s225
      %s242 = sphi 0, %s226
    $region4: #{tpu_custom_call.1} parent=1 // loop_header_branch
      %21 = sbr.rel (%p19) target = $region8
    $region5: #{tpu_custom_call.1} parent=1 // loop_body
      %s23 = ssub.s32 %s18, 1
      %s24 = ssub.s32 %s18, 2
      %s25 = sadd.s32 %s18, 1
      %s26 = ssub.s32 %s18, %s25
      %p27 = scmp.eq.s32.totalorder %s26, 0
      %s29 = sadd.s32 %s28, 1
      %s30 = scalar_select %p27, %s28, %s29
      %p33 = pneg %p27
      %p34 = scmp.eq.s32.totalorder %s18, 1
      %p35 = por %p33, %p34
      %p36 = scmp.ne.s32.totalorder %s28, %s31
      %p37 = scmp.eq.s32.totalorder %s18, 0
      %p38 = por %p36, %p37
      %p39 = scmp.ne.s32.totalorder %s28, %s31
      %p40 = scmp.eq.s32.totalorder %s23, 1
      %p41 = por %p39, %p40
      %p42 = scmp.ne.s32.totalorder %s31, %s32
      %p43 = scmp.eq.s32.totalorder %s23, 0
      %p44 = por %p42, %p43
      %p45 = scmp.ne.s32.totalorder %s31, %s32
      %p46 = scmp.eq.s32.totalorder %s24, 1
      %p47 = por %p45, %p46
      %p49 = scmp.ne.s32.totalorder %s32, %s48
      %p50 = scmp.eq.s32.totalorder %s24, 0
      %p51 = por %p49, %p50
      %s53 = sadd.s32 %s52, 1
      %p56 = scmp.eq.s32.totalorder %s18, 1
      %p57 = scmp.ne.s32.totalorder %s52, %s54
      %p58 = scmp.eq.s32.totalorder %s18, 0
      %p59 = por %p57, %p58
      %p60 = scmp.ne.s32.totalorder %s52, %s54
      %p61 = scmp.eq.s32.totalorder %s23, 1
      %p62 = por %p60, %p61
      %p63 = scmp.ne.s32.totalorder %s54, %s55
      %p64 = scmp.eq.s32.totalorder %s23, 0
      %p65 = por %p63, %p64
      %p66 = scmp.ne.s32.totalorder %s54, %s55
      %p67 = scmp.eq.s32.totalorder %s24, 1
      %p68 = por %p66, %p67
      %p70 = scmp.ne.s32.totalorder %s55, %s69
      %p71 = scmp.eq.s32.totalorder %s24, 0
      %p72 = por %p70, %p71
      %s74 = sadd.s32 %s73, 1
      %p77 = scmp.eq.s32.totalorder %s18, 1
      %p78 = scmp.ne.s32.totalorder %s73, %s75
      %p79 = scmp.eq.s32.totalorder %s18, 0
      %p80 = por %p78, %p79
      %p81 = scmp.ne.s32.totalorder %s73, %s75
      %p82 = scmp.eq.s32.totalorder %s23, 1
      %p83 = por %p81, %p82
      %p84 = scmp.ne.s32.totalorder %s75, %s76
      %p85 = scmp.eq.s32.totalorder %s23, 0
      %p86 = por %p84, %p85
      %p87 = scmp.ne.s32.totalorder %s75, %s76
      %p88 = scmp.eq.s32.totalorder %s24, 1
      %p89 = por %p87, %p88
      %p91 = scmp.ne.s32.totalorder %s76, %s90
      %p92 = scmp.eq.s32.totalorder %s24, 0
      %p93 = por %p91, %p92
      %s95 = sadd.s32 %s94, 1
      %p98 = scmp.eq.s32.totalorder %s18, 1
      %p99 = scmp.ne.s32.totalorder %s94, %s96
      %p100 = scmp.eq.s32.totalorder %s18, 0
      %p101 = por %p99, %p100
      %p102 = scmp.ne.s32.totalorder %s94, %s96
      %p103 = scmp.eq.s32.totalorder %s23, 1
      %p104 = por %p102, %p103
      %p105 = scmp.ne.s32.totalorder %s96, %s97
      %p106 = scmp.eq.s32.totalorder %s23, 0
      %p107 = por %p105, %p106
      %p108 = scmp.ne.s32.totalorder %s96, %s97
      %p109 = scmp.eq.s32.totalorder %s24, 1
      %p110 = por %p108, %p109
      %p112 = scmp.ne.s32.totalorder %s97, %s111
      %p113 = scmp.eq.s32.totalorder %s24, 0
      %p114 = por %p112, %p113
      %s116 = sadd.s32 %s115, 1
      %p119 = scmp.eq.s32.totalorder %s18, 1
      %p120 = scmp.ne.s32.totalorder %s115, %s117
      %p121 = scmp.eq.s32.totalorder %s18, 0
      %p122 = por %p120, %p121
      %p123 = scmp.ne.s32.totalorder %s115, %s117
      %p124 = scmp.eq.s32.totalorder %s23, 1
      %p125 = por %p123, %p124
      %p126 = scmp.ne.s32.totalorder %s117, %s118
      %p127 = scmp.eq.s32.totalorder %s23, 0
      %p128 = por %p126, %p127
      %p129 = scmp.ne.s32.totalorder %s117, %s118
      %p130 = scmp.eq.s32.totalorder %s24, 1
      %p131 = por %p129, %p130
      %p133 = scmp.ne.s32.totalorder %s118, %s132
      %p134 = scmp.eq.s32.totalorder %s24, 0
      %p135 = por %p133, %p134
      %s137 = sadd.s32 %s136, 1
      %p140 = scmp.eq.s32.totalorder %s18, 1
      %p141 = scmp.ne.s32.totalorder %s136, %s138
      %p142 = scmp.eq.s32.totalorder %s18, 0
      %p143 = por %p141, %p142
      %p144 = scmp.ne.s32.totalorder %s136, %s138
      %p145 = scmp.eq.s32.totalorder %s23, 1
      %p146 = por %p144, %p145
      %p147 = scmp.ne.s32.totalorder %s138, %s139
      %p148 = scmp.eq.s32.totalorder %s23, 0
      %p149 = por %p147, %p148
      %p150 = scmp.ne.s32.totalorder %s138, %s139
      %p151 = scmp.eq.s32.totalorder %s24, 1
      %p152 = por %p150, %p151
      %p154 = scmp.ne.s32.totalorder %s139, %s153
      %p155 = scmp.eq.s32.totalorder %s24, 0
      %p156 = por %p154, %p155
      %s158 = sadd.s32 %s157, 1
      %p161 = scmp.eq.s32.totalorder %s18, 1
      %p162 = scmp.ne.s32.totalorder %s157, %s159
      %p163 = scmp.eq.s32.totalorder %s18, 0
      %p164 = por %p162, %p163
      %p165 = scmp.ne.s32.totalorder %s157, %s159
      %p166 = scmp.eq.s32.totalorder %s23, 1
      %p167 = por %p165, %p166
      %p168 = scmp.ne.s32.totalorder %s159, %s160
      %p169 = scmp.eq.s32.totalorder %s23, 0
      %p170 = por %p168, %p169
      %p171 = scmp.ne.s32.totalorder %s159, %s160
      %p172 = scmp.eq.s32.totalorder %s24, 1
      %p173 = por %p171, %p172
      %p175 = scmp.ne.s32.totalorder %s160, %s174
      %p176 = scmp.eq.s32.totalorder %s24, 0
      %p177 = por %p175, %p176
      %s179 = sadd.s32 %s178, 1
      %p182 = scmp.eq.s32.totalorder %s18, 1
      %p183 = scmp.ne.s32.totalorder %s178, %s180
      %p184 = scmp.eq.s32.totalorder %s18, 0
      %p185 = por %p183, %p184
      %p186 = scmp.ne.s32.totalorder %s178, %s180
      %p187 = scmp.eq.s32.totalorder %s23, 1
      %p188 = por %p186, %p187
      %p189 = scmp.ne.s32.totalorder %s180, %s181
      %p190 = scmp.eq.s32.totalorder %s23, 0
      %p191 = por %p189, %p190
      %p192 = scmp.ne.s32.totalorder %s180, %s181
      %p193 = scmp.eq.s32.totalorder %s24, 1
      %p194 = por %p192, %p193
      %p196 = scmp.ne.s32.totalorder %s181, %s195
      %p197 = scmp.eq.s32.totalorder %s24, 0
      %p198 = por %p196, %p197
      %s200 = sadd.s32 %s199, 1
      %p203 = scmp.eq.s32.totalorder %s18, 1
      %p204 = scmp.ne.s32.totalorder %s199, %s201
      %p205 = scmp.eq.s32.totalorder %s18, 0
      %p206 = por %p204, %p205
      %p207 = scmp.ne.s32.totalorder %s199, %s201
      %p208 = scmp.eq.s32.totalorder %s23, 1
      %p209 = por %p207, %p208
      %p210 = scmp.ne.s32.totalorder %s201, %s202
      %p211 = scmp.eq.s32.totalorder %s23, 0
      %p212 = por %p210, %p211
      %p213 = scmp.ne.s32.totalorder %s201, %s202
      %p214 = scmp.eq.s32.totalorder %s24, 1
      %p215 = por %p213, %p214
      %p217 = scmp.ne.s32.totalorder %s202, %s216
      %p218 = scmp.eq.s32.totalorder %s24, 0
      %p219 = por %p217, %p218
      %s220 = ssub.s32 %s18, %s25
      %p221 = scmp.eq.s32.totalorder %s220, 0
      %s223 = sadd.s32 %s222, 1
      %s224 = scalar_select %p221, %s222, %s223
      %p227 = pneg %p221
      %p228 = scmp.eq.s32.totalorder %s18, 1
      %p229 = por %p227, %p228
      %p230 = scmp.ne.s32.totalorder %s222, %s225
      %p231 = scmp.eq.s32.totalorder %s18, 0
      %p232 = por %p230, %p231
      %p233 = scmp.ne.s32.totalorder %s222, %s225
      %p234 = scmp.eq.s32.totalorder %s23, 1
      %p235 = por %p233, %p234
      %p236 = scmp.ne.s32.totalorder %s225, %s226
      %p237 = scmp.eq.s32.totalorder %s23, 0
      %p238 = por %p236, %p237
      %p239 = scmp.ne.s32.totalorder %s225, %s226
      %p240 = scmp.eq.s32.totalorder %s24, 1
      %p241 = por %p239, %p240
      %p243 = scmp.ne.s32.totalorder %s226, %s242
      %p244 = scmp.eq.s32.totalorder %s24, 0
      %p245 = por %p243, %p244
      %p246 = scmp.le.s32.totalorder 1, %s18
      %p247 = scmp.lt.s32.totalorder %s18, 3
      %p248 = pnand %p246, %p247
      %p249 = pneg %p248
      // Predicated region
      $region9: #{tpu_custom_call.1} parent=5 // pred_check
        _
      $region10: #{tpu_custom_call.1} parent=5 // pred_check_branch
        %251 = sbr.rel (%p248) target = $region12
      $region11: #{tpu_custom_call.1} parent=5 // pred_region
        %s252 = ssub.s32 %s18, 1
        // Predicated region
        $region13: #{tpu_custom_call.1} parent=11 // pred_check
          %p253 = pneg %p65
        $region14: #{tpu_custom_call.1} parent=11 // pred_check_branch
          %255 = sbr.rel (%p253) target = $region16
        $region15: #{tpu_custom_call.1} parent=11 // pred_region
          _
        $region16: #{tpu_custom_call.1} parent=11 // pred_fallthru
          _
        // Predicated region
        $region17: #{tpu_custom_call.1} parent=11 // pred_check
          %p256 = pneg %p86
        $region18: #{tpu_custom_call.1} parent=11 // pred_check_branch
          %258 = sbr.rel (%p256) target = $region20
        $region19: #{tpu_custom_call.1} parent=11 // pred_region
          _
        $region20: #{tpu_custom_call.1} parent=11 // pred_fallthru
          _
        // Predicated region
        $region21: #{tpu_custom_call.1} parent=11 // pred_check
          %p259 = pneg %p107
        $region22: #{tpu_custom_call.1} parent=11 // pred_check_branch
          %261 = sbr.rel (%p259) target = $region24
        $region23: #{tpu_custom_call.1} parent=11 // pred_region
          _
        $region24: #{tpu_custom_call.1} parent=11 // pred_fallthru
          _
        // Predicated region
        $region25: #{tpu_custom_call.1} parent=11 // pred_check
          %p262 = pneg %p128
        $region26: #{tpu_custom_call.1} parent=11 // pred_check_branch
          %264 = sbr.rel (%p262) target = $region28
        $region27: #{tpu_custom_call.1} parent=11 // pred_region
          _
        $region28: #{tpu_custom_call.1} parent=11 // pred_fallthru
          _
        // Predicated region
        $region29: #{tpu_custom_call.1} parent=11 // pred_check
          %p265 = pneg %p149
        $region30: #{tpu_custom_call.1} parent=11 // pred_check_branch
          %267 = sbr.rel (%p265) target = $region32
        $region31: #{tpu_custom_call.1} parent=11 // pred_region
          _
        $region32: #{tpu_custom_call.1} parent=11 // pred_fallthru
          _
        // Predicated region
        $region33: #{tpu_custom_call.1} parent=11 // pred_check
          %p268 = pneg %p170
        $region34: #{tpu_custom_call.1} parent=11 // pred_check_branch
          %270 = sbr.rel (%p268) target = $region36
        $region35: #{tpu_custom_call.1} parent=11 // pred_region
          _
        $region36: #{tpu_custom_call.1} parent=11 // pred_fallthru
          _
        // Predicated region
        $region37: #{tpu_custom_call.1} parent=11 // pred_check
          %p271 = pneg %p191
        $region38: #{tpu_custom_call.1} parent=11 // pred_check_branch
          %273 = sbr.rel (%p271) target = $region40
        $region39: #{tpu_custom_call.1} parent=11 // pred_region
          _
        $region40: #{tpu_custom_call.1} parent=11 // pred_fallthru
          _
        // Predicated region
        $region41: #{tpu_custom_call.1} parent=11 // pred_check
          %p274 = pneg %p212
        $region42: #{tpu_custom_call.1} parent=11 // pred_check_branch
          %276 = sbr.rel (%p274) target = $region44
        $region43: #{tpu_custom_call.1} parent=11 // pred_region
          _
        $region44: #{tpu_custom_call.1} parent=11 // pred_fallthru
          _
      $region12: #{tpu_custom_call.1} parent=5 // pred_fallthru
        _
      %p277 = scmp.lt.s32.totalorder %s18, 2
      // Predicated region
      $region45: #{tpu_custom_call.1} parent=5 // pred_check
        %p278 = pneg %p277
      $region46: #{tpu_custom_call.1} parent=5 // pred_check_branch
        %280 = sbr.rel (%p278) target = $region48
      $region47: #{tpu_custom_call.1} parent=5 // pred_region
        // Predicated region
        $region49: #{tpu_custom_call.1} parent=47 // pred_check
          %p281 = pneg %p38
        $region50: #{tpu_custom_call.1} parent=47 // pred_check_branch
          %283 = sbr.rel (%p281) target = $region52
        $region51: #{tpu_custom_call.1} parent=47 // pred_region
          %p284 = scmp.lt.s32.totalorder %s18, 1
          %s285 = scalar_select %p284, %s18, 1
          %s286 = smul.addr %s285, 32
          %s287 = smul.addr %s286, 8
          %s288 = scalar_lea.vmem %s0, %s287
        $region52: #{tpu_custom_call.1} parent=47 // pred_fallthru
          _
      $region48: #{tpu_custom_call.1} parent=5 // pred_fallthru
        _
      %p289 = scmp.le.s32.totalorder 1, %s18
      %p290 = scmp.lt.s32.totalorder %s18, 3
      %p291 = pnand %p289, %p290
      %p292 = pneg %p291
      // Predicated region
      $region53: #{tpu_custom_call.1} parent=5 // pred_check
        _
      $region54: #{tpu_custom_call.1} parent=5 // pred_check_branch
        %294 = sbr.rel (%p291) target = $region56
      $region55: #{tpu_custom_call.1} parent=5 // pred_region
        %s295 = ssub.s32 %s18, 1
        %p296 = scmp.lt.s32.totalorder %s23, 1
        %s297 = scalar_select %p296, %s23, 1
        %s298 = smul.addr %s297, 32
        %s299 = smul.addr %s298, 8
        %s300 = scalar_lea.vmem %s0, %s299
        %p301 = pneg %p44
        %p302 = pneg %p41
        %p303 = pneg %p65
        %p304 = pneg %p62
        %p305 = pneg %p86
        %p306 = pneg %p83
        %p307 = pneg %p107
        %p308 = pneg %p104
        %p309 = pneg %p128
        %p310 = pneg %p125
        %p311 = pneg %p149
        %p312 = pneg %p146
        %p313 = pneg %p170
        %p314 = pneg %p167
        %p315 = pneg %p191
        %p316 = pneg %p188
        %p317 = pneg %p212
        %p318 = pneg %p209
        %p319 = pneg %p238
        %p320 = pneg %p235
        %s321 = sand.u32 %s225, 1
        %s322 = scalar_lea.sflag [#allocation6], %s321
        %s323 = sand.u32 %s225, 1
        %s324 = smul.addr %s323, 256
        %s325 = scalar_lea.vmem [#allocation5], %s324
        %p326 = scmp.lt.s32.totalorder %s23, 1
        %s327 = scalar_select %p326, %s23, 1
        %s328 = smul.addr %s327, 32
        %s329 = smul.addr %s328, 8
        %s330 = scalar_lea.vmem %s0, %s329
        %vm332 = vcmask 48128
        %333 = vst.msk [vmem:[#allocation2] sm:$0xff] %vm332, 0.0
        %334 = vst.msk [vmem:[#allocation2 + $0x8] sm:$0xff] %vm332, 0.0
        %vm335 = vcmask 41984
        %336 = vst.msk [vmem:[#allocation2 + $0x10] sm:$0x3] %vm335, 0.0
        %337 = vst.msk [vmem:[#allocation2 + $0x18] sm:$0xff] %vm332, 0.0
        %338 = vst.msk [vmem:[#allocation2 + $0x20] sm:$0xff] %vm332, 0.0
        %339 = vst.msk [vmem:[#allocation2 + $0x28] sm:$0x3] %vm335, 0.0
        %340 = vst.msk [vmem:[#allocation2 + $0x30] sm:$0xff] %vm332, 0.0
        %341 = vst.msk [vmem:[#allocation2 + $0x38] sm:$0xff] %vm332, 0.0
        %342 = vst.msk [vmem:[#allocation2 + $0x40] sm:$0x3] %vm335, 0.0
        %343 = vst.msk [vmem:[#allocation2 + $0x48] sm:$0xff] %vm332, 0.0
        %344 = vst.msk [vmem:[#allocation2 + $0x50] sm:$0xff] %vm332, 0.0
        %345 = vst.msk [vmem:[#allocation2 + $0x58] sm:$0x3] %vm335, 0.0
        %346 = vst.msk [vmem:[#allocation2 + $0x60] sm:$0xff] %vm332, 0.0
        %347 = vst.msk [vmem:[#allocation2 + $0x68] sm:$0xff] %vm332, 0.0
        %348 = vst.msk [vmem:[#allocation2 + $0x70] sm:$0x3] %vm335, 0.0
        %349 = vst.msk [vmem:[#allocation2 + $0x78] sm:$0xff] %vm332, 0.0
        %350 = vst.msk [vmem:[#allocation2 + $0x80] sm:$0xff] %vm332, 0.0
        %351 = vst.msk [vmem:[#allocation2 + $0x88] sm:$0x3] %vm335, 0.0
        %352 = vst.msk [vmem:[#allocation2 + $0x90] sm:$0xff] %vm332, 0.0
        %353 = vst.msk [vmem:[#allocation2 + $0x98] sm:$0xff] %vm332, 0.0
        %354 = vst.msk [vmem:[#allocation2 + $0xa0] sm:$0x3] %vm335, 0.0
        %355 = vst.msk [vmem:[#allocation2 + $0xa8] sm:$0xff] %vm332, 0.0
        %356 = vst.msk [vmem:[#allocation2 + $0xb0] sm:$0xff] %vm332, 0.0
        %357 = vst.msk [vmem:[#allocation2 + $0xb8] sm:$0x3] %vm335, 0.0
        %358 = vst.msk [vmem:[#allocation2 + $0xc0] sm:$0xff] %vm332, 0.0
        %359 = vst.msk [vmem:[#allocation2 + $0xc8] sm:$0xff] %vm332, 0.0
        %360 = vst.msk [vmem:[#allocation2 + $0xd0] sm:$0x3] %vm335, 0.0
        %361 = vst.msk [vmem:[#allocation2 + $0xd8] sm:$0xff] %vm332, 0.0
        %362 = vst.msk [vmem:[#allocation2 + $0xe0] sm:$0xff] %vm332, 0.0
        %363 = vst.msk [vmem:[#allocation2 + $0xe8] sm:$0x3] %vm335, 0.0
        %364 = vst.msk [vmem:[#allocation2 + $0xf0] sm:$0xff] %vm332, 0.0
        %365 = vst.msk [vmem:[#allocation2 + $0xf8] sm:$0xff] %vm332, 0.0
        %366 = vst.msk [vmem:[#allocation2 + $0x100] sm:$0x3] %vm335, 0.0
        %367 = vst.msk [vmem:[#allocation2 + $0x108] sm:$0xff] %vm332, 0.0
        %368 = vst.msk [vmem:[#allocation2 + $0x110] sm:$0xff] %vm332, 0.0
        %369 = vst.msk [vmem:[#allocation2 + $0x118] sm:$0x3] %vm335, 0.0
        %370 = vst.msk [vmem:[#allocation2 + $0x120] sm:$0xff] %vm332, 0.0
        %371 = vst.msk [vmem:[#allocation2 + $0x128] sm:$0xff] %vm332, 0.0
        %372 = vst.msk [vmem:[#allocation2 + $0x130] sm:$0x3] %vm335, 0.0
        %373 = vst.msk [vmem:[#allocation2 + $0x138] sm:$0xff] %vm332, 0.0
        %374 = vst.msk [vmem:[#allocation2 + $0x140] sm:$0xff] %vm332, 0.0
        %375 = vst.msk [vmem:[#allocation2 + $0x148] sm:$0x3] %vm335, 0.0
        %376 = vst.msk [vmem:[#allocation2 + $0x150] sm:$0xff] %vm332, 0.0
        %377 = vst.msk [vmem:[#allocation2 + $0x158] sm:$0xff] %vm332, 0.0
        %378 = vst.msk [vmem:[#allocation2 + $0x160] sm:$0x3] %vm335, 0.0
        %379 = vst.msk [vmem:[#allocation2 + $0x168] sm:$0xff] %vm332, 0.0
        %380 = vst.msk [vmem:[#allocation2 + $0x170] sm:$0xff] %vm332, 0.0
        %381 = vst.msk [vmem:[#allocation2 + $0x178] sm:$0x3] %vm335, 0.0
        %382 = vst.msk [vmem:[#allocation2 + $0x180] sm:$0xff] %vm332, 0.0
        %383 = vst.msk [vmem:[#allocation2 + $0x188] sm:$0xff] %vm332, 0.0
        %384 = vst.msk [vmem:[#allocation2 + $0x190] sm:$0x3] %vm335, 0.0
        %385 = vst.msk [vmem:[#allocation2 + $0x198] sm:$0xff] %vm332, 0.0
        %386 = vst.msk [vmem:[#allocation2 + $0x1a0] sm:$0xff] %vm332, 0.0
        %387 = vst.msk [vmem:[#allocation2 + $0x1a8] sm:$0x3] %vm335, 0.0
        %vm388 = vcmask 64512
        %389 = vst.msk [vmem:[#allocation3] sm:$0xff] %vm388, 0.0
        %390 = vst.msk [vmem:[#allocation3 + $0x8] sm:$0xff] %vm388, 0.0
        %vm391 = vcmask 58368
        %392 = vst.msk [vmem:[#allocation3 + $0x10] sm:$0x3] %vm391, 0.0
        %393 = vst.msk [vmem:[#allocation3 + $0x18] sm:$0xff] %vm388, 0.0
        %394 = vst.msk [vmem:[#allocation3 + $0x20] sm:$0xff] %vm388, 0.0
        %395 = vst.msk [vmem:[#allocation3 + $0x28] sm:$0x3] %vm391, 0.0
        %396 = vst.msk [vmem:[#allocation3 + $0x30] sm:$0xff] %vm388, 0.0
        %397 = vst.msk [vmem:[#allocation3 + $0x38] sm:$0xff] %vm388, 0.0
        %398 = vst.msk [vmem:[#allocation3 + $0x40] sm:$0x3] %vm391, 0.0
        %399 = vst.msk [vmem:[#allocation3 + $0x48] sm:$0xff] %vm388, 0.0
        %400 = vst.msk [vmem:[#allocation3 + $0x50] sm:$0xff] %vm388, 0.0
        %401 = vst.msk [vmem:[#allocation3 + $0x58] sm:$0x3] %vm391, 0.0
        %402 = vst.msk [vmem:[#allocation3 + $0x60] sm:$0xff] %vm388, 0.0
        %403 = vst.msk [vmem:[#allocation3 + $0x68] sm:$0xff] %vm388, 0.0
        %404 = vst.msk [vmem:[#allocation3 + $0x70] sm:$0x3] %vm391, 0.0
        %405 = vst.msk [vmem:[#allocation3 + $0x78] sm:$0xff] %vm388, 0.0
        %406 = vst.msk [vmem:[#allocation3 + $0x80] sm:$0xff] %vm388, 0.0
        %407 = vst.msk [vmem:[#allocation3 + $0x88] sm:$0x3] %vm391, 0.0
        %408 = vst.msk [vmem:[#allocation3 + $0x90] sm:$0xff] %vm388, 0.0
        %409 = vst.msk [vmem:[#allocation3 + $0x98] sm:$0xff] %vm388, 0.0
        %410 = vst.msk [vmem:[#allocation3 + $0xa0] sm:$0x3] %vm391, 0.0
        %411 = vst.msk [vmem:[#allocation3 + $0xa8] sm:$0xff] %vm388, 0.0
        %412 = vst.msk [vmem:[#allocation3 + $0xb0] sm:$0xff] %vm388, 0.0
        %413 = vst.msk [vmem:[#allocation3 + $0xb8] sm:$0x3] %vm391, 0.0
        %414 = vst.msk [vmem:[#allocation3 + $0xc0] sm:$0xff] %vm388, 0.0
        %415 = vst.msk [vmem:[#allocation3 + $0xc8] sm:$0xff] %vm388, 0.0
        %416 = vst.msk [vmem:[#allocation3 + $0xd0] sm:$0x3] %vm391, 0.0
        %417 = vst.msk [vmem:[#allocation3 + $0xd8] sm:$0xff] %vm388, 0.0
        %418 = vst.msk [vmem:[#allocation3 + $0xe0] sm:$0xff] %vm388, 0.0
        %419 = vst.msk [vmem:[#allocation3 + $0xe8] sm:$0x3] %vm391, 0.0
        %420 = vst.msk [vmem:[#allocation3 + $0xf0] sm:$0xff] %vm388, 0.0
        %421 = vst.msk [vmem:[#allocation3 + $0xf8] sm:$0xff] %vm388, 0.0
        %422 = vst.msk [vmem:[#allocation3 + $0x100] sm:$0x3] %vm391, 0.0
        %423 = vst.msk [vmem:[#allocation3 + $0x108] sm:$0xff] %vm388, 0.0
        %424 = vst.msk [vmem:[#allocation3 + $0x110] sm:$0xff] %vm388, 0.0
        %425 = vst.msk [vmem:[#allocation3 + $0x118] sm:$0x3] %vm391, 0.0
        %426 = vst.msk [vmem:[#allocation3 + $0x120] sm:$0xff] %vm388, 0.0
        %427 = vst.msk [vmem:[#allocation3 + $0x128] sm:$0xff] %vm388, 0.0
        %428 = vst.msk [vmem:[#allocation3 + $0x130] sm:$0x3] %vm391, 0.0
        %429 = vst.msk [vmem:[#allocation3 + $0x138] sm:$0xff] %vm388, 0.0
        %430 = vst.msk [vmem:[#allocation3 + $0x140] sm:$0xff] %vm388, 0.0
        %431 = vst.msk [vmem:[#allocation3 + $0x148] sm:$0x3] %vm391, 0.0
        %432 = vst.msk [vmem:[#allocation3 + $0x150] sm:$0xff] %vm388, 0.0
        %433 = vst.msk [vmem:[#allocation3 + $0x158] sm:$0xff] %vm388, 0.0
        %434 = vst.msk [vmem:[#allocation3 + $0x160] sm:$0x3] %vm391, 0.0
        %435 = vst.msk [vmem:[#allocation3 + $0x168] sm:$0xff] %vm388, 0.0
        %436 = vst.msk [vmem:[#allocation3 + $0x170] sm:$0xff] %vm388, 0.0
        %437 = vst.msk [vmem:[#allocation3 + $0x178] sm:$0x3] %vm391, 0.0
        %438 = vst.msk [vmem:[#allocation3 + $0x180] sm:$0xff] %vm388, 0.0
        %439 = vst.msk [vmem:[#allocation3 + $0x188] sm:$0xff] %vm388, 0.0
        %440 = vst.msk [vmem:[#allocation3 + $0x190] sm:$0x3] %vm391, 0.0
        %441 = vst.msk [vmem:[#allocation3 + $0x198] sm:$0xff] %vm388, 0.0
        %442 = vst.msk [vmem:[#allocation3 + $0x1a0] sm:$0xff] %vm388, 0.0
        %443 = vst.msk [vmem:[#allocation3 + $0x1a8] sm:$0x3] %vm391, 0.0
        %vm444 = vcmask 130048
        %445 = vst.msk [vmem:[#allocation4] sm:$0xff] %vm444, 0.0
        %446 = vst.msk [vmem:[#allocation4 + $0x8] sm:$0xff] %vm444, 0.0
        %vm447 = vcmask 123904
        %448 = vst.msk [vmem:[#allocation4 + $0x10] sm:$0x3] %vm447, 0.0
        %449 = vst.msk [vmem:[#allocation4 + $0x18] sm:$0xff] %vm444, 0.0
        %450 = vst.msk [vmem:[#allocation4 + $0x20] sm:$0xff] %vm444, 0.0
        %451 = vst.msk [vmem:[#allocation4 + $0x28] sm:$0x3] %vm447, 0.0
        %452 = vst.msk [vmem:[#allocation4 + $0x30] sm:$0xff] %vm444, 0.0
        %453 = vst.msk [vmem:[#allocation4 + $0x38] sm:$0xff] %vm444, 0.0
        %454 = vst.msk [vmem:[#allocation4 + $0x40] sm:$0x3] %vm447, 0.0
        %455 = vst.msk [vmem:[#allocation4 + $0x48] sm:$0xff] %vm444, 0.0
        %456 = vst.msk [vmem:[#allocation4 + $0x50] sm:$0xff] %vm444, 0.0
        %457 = vst.msk [vmem:[#allocation4 + $0x58] sm:$0x3] %vm447, 0.0
        %458 = vst.msk [vmem:[#allocation4 + $0x60] sm:$0xff] %vm444, 0.0
        %459 = vst.msk [vmem:[#allocation4 + $0x68] sm:$0xff] %vm444, 0.0
        %460 = vst.msk [vmem:[#allocation4 + $0x70] sm:$0x3] %vm447, 0.0
        %461 = vst.msk [vmem:[#allocation4 + $0x78] sm:$0xff] %vm444, 0.0
        %462 = vst.msk [vmem:[#allocation4 + $0x80] sm:$0xff] %vm444, 0.0
        %463 = vst.msk [vmem:[#allocation4 + $0x88] sm:$0x3] %vm447, 0.0
        %464 = vst.msk [vmem:[#allocation4 + $0x90] sm:$0xff] %vm444, 0.0
        %465 = vst.msk [vmem:[#allocation4 + $0x98] sm:$0xff] %vm444, 0.0
        %466 = vst.msk [vmem:[#allocation4 + $0xa0] sm:$0x3] %vm447, 0.0
        %467 = vst.msk [vmem:[#allocation4 + $0xa8] sm:$0xff] %vm444, 0.0
        %468 = vst.msk [vmem:[#allocation4 + $0xb0] sm:$0xff] %vm444, 0.0
        %469 = vst.msk [vmem:[#allocation4 + $0xb8] sm:$0x3] %vm447, 0.0
        %470 = vst.msk [vmem:[#allocation4 + $0xc0] sm:$0xff] %vm444, 0.0
        %471 = vst.msk [vmem:[#allocation4 + $0xc8] sm:$0xff] %vm444, 0.0
        %472 = vst.msk [vmem:[#allocation4 + $0xd0] sm:$0x3] %vm447, 0.0
        %473 = vst.msk [vmem:[#allocation4 + $0xd8] sm:$0xff] %vm444, 0.0
        %474 = vst.msk [vmem:[#allocation4 + $0xe0] sm:$0xff] %vm444, 0.0
        %475 = vst.msk [vmem:[#allocation4 + $0xe8] sm:$0x3] %vm447, 0.0
        %476 = vst.msk [vmem:[#allocation4 + $0xf0] sm:$0xff] %vm444, 0.0
        %477 = vst.msk [vmem:[#allocation4 + $0xf8] sm:$0xff] %vm444, 0.0
        %478 = vst.msk [vmem:[#allocation4 + $0x100] sm:$0x3] %vm447, 0.0
        %479 = vst.msk [vmem:[#allocation4 + $0x108] sm:$0xff] %vm444, 0.0
        %480 = vst.msk [vmem:[#allocation4 + $0x110] sm:$0xff] %vm444, 0.0
        %481 = vst.msk [vmem:[#allocation4 + $0x118] sm:$0x3] %vm447, 0.0
        %482 = vst.msk [vmem:[#allocation4 + $0x120] sm:$0xff] %vm444, 0.0
        %483 = vst.msk [vmem:[#allocation4 + $0x128] sm:$0xff] %vm444, 0.0
        %484 = vst.msk [vmem:[#allocation4 + $0x130] sm:$0x3] %vm447, 0.0
        %485 = vst.msk [vmem:[#allocation4 + $0x138] sm:$0xff] %vm444, 0.0
        %486 = vst.msk [vmem:[#allocation4 + $0x140] sm:$0xff] %vm444, 0.0
        %487 = vst.msk [vmem:[#allocation4 + $0x148] sm:$0x3] %vm447, 0.0
        %488 = vst.msk [vmem:[#allocation4 + $0x150] sm:$0xff] %vm444, 0.0
        %489 = vst.msk [vmem:[#allocation4 + $0x158] sm:$0xff] %vm444, 0.0
        %490 = vst.msk [vmem:[#allocation4 + $0x160] sm:$0x3] %vm447, 0.0
        %491 = vst.msk [vmem:[#allocation4 + $0x168] sm:$0xff] %vm444, 0.0
        %492 = vst.msk [vmem:[#allocation4 + $0x170] sm:$0xff] %vm444, 0.0
        %493 = vst.msk [vmem:[#allocation4 + $0x178] sm:$0x3] %vm447, 0.0
        %494 = vst.msk [vmem:[#allocation4 + $0x180] sm:$0xff] %vm444, 0.0
        %495 = vst.msk [vmem:[#allocation4 + $0x188] sm:$0xff] %vm444, 0.0
        %496 = vst.msk [vmem:[#allocation4 + $0x190] sm:$0x3] %vm447, 0.0
        %497 = vst.msk [vmem:[#allocation4 + $0x198] sm:$0xff] %vm444, 0.0
        %498 = vst.msk [vmem:[#allocation4 + $0x1a0] sm:$0xff] %vm444, 0.0
        %499 = vst.msk [vmem:[#allocation4 + $0x1a8] sm:$0x3] %vm447, 0.0
        %v500 = vld [vmem:[%s330] sm:$0xff]
        %v501 = vld [vmem:[%s330 + $0x8] sm:$0xff]
        %v502 = vld [vmem:[%s330 + $0x10] sm:$0xff]
        %v503 = vld [vmem:[%s330 + $0x18] sm:$0xff]
        %v504 = vld [vmem:[%s330 + $0x20] sm:$0xff]
        %v505 = vld [vmem:[%s330 + $0x28] sm:$0xff]
        %v506 = vld [vmem:[%s330 + $0x30] sm:$0xff]
        %v507 = vld [vmem:[%s330 + $0x38] sm:$0xff]
        %v508 = vld [vmem:[%s330 + $0x40] sm:$0xff]
        %v509 = vld [vmem:[%s330 + $0x48] sm:$0xff]
        %v510 = vld [vmem:[%s330 + $0x50] sm:$0xff]
        %v511 = vld [vmem:[%s330 + $0x58] sm:$0xff]
        %v512 = vld [vmem:[%s330 + $0x60] sm:$0xff]
        %v513 = vld [vmem:[%s330 + $0x68] sm:$0xff]
        %v514 = vld [vmem:[%s330 + $0x70] sm:$0xff]
        %v515 = vld [vmem:[%s330 + $0x78] sm:$0xff]
        %v516 = vld [vmem:[%s330 + $0x80] sm:$0xff]
        %v517 = vld [vmem:[%s330 + $0x88] sm:$0xff]
        %v518 = vld [vmem:[%s330 + $0x90] sm:$0xff]
        %v519 = vld [vmem:[%s330 + $0x98] sm:$0xff]
        %v520 = vld [vmem:[%s330 + $0xa0] sm:$0xff]
        %v521 = vld [vmem:[%s330 + $0xa8] sm:$0xff]
        %v522 = vld [vmem:[%s330 + $0xb0] sm:$0xff]
        %v523 = vld [vmem:[%s330 + $0xb8] sm:$0xff]
        %v524 = vld [vmem:[%s330 + $0xc0] sm:$0xff]
        %v525 = vld [vmem:[%s330 + $0xc8] sm:$0xff]
        %v526 = vld [vmem:[%s330 + $0xd0] sm:$0xff]
        %v527 = vld [vmem:[%s330 + $0xd8] sm:$0xff]
        %v528 = vld [vmem:[%s330 + $0xe0] sm:$0xff]
        %v529 = vld [vmem:[%s330 + $0xe8] sm:$0xff]
        %v530 = vld [vmem:[%s330 + $0xf0] sm:$0xff]
        %v531 = vld [vmem:[%s330 + $0xf8] sm:$0xff]
        %s532 = scalar_lea.vmem [#allocation2], 24
        %533 = vst.msk [vmem:[%s532 + $0x1] sm:$0xff] %vm332, %v500
        %534 = vst.msk [vmem:[%s532 + $0x9] sm:$0xff] %vm332, %v501
        %535 = vst.msk [vmem:[%s532 + $0x19] sm:$0xff] %vm332, %v502
        %536 = vst.msk [vmem:[%s532 + $0x21] sm:$0xff] %vm332, %v503
        %537 = vst.msk [vmem:[%s532 + $0x31] sm:$0xff] %vm332, %v504
        %538 = vst.msk [vmem:[%s532 + $0x39] sm:$0xff] %vm332, %v505
        %539 = vst.msk [vmem:[%s532 + $0x49] sm:$0xff] %vm332, %v506
        %540 = vst.msk [vmem:[%s532 + $0x51] sm:$0xff] %vm332, %v507
        %541 = vst.msk [vmem:[%s532 + $0x61] sm:$0xff] %vm332, %v508
        %542 = vst.msk [vmem:[%s532 + $0x69] sm:$0xff] %vm332, %v509
        %543 = vst.msk [vmem:[%s532 + $0x79] sm:$0xff] %vm332, %v510
        %544 = vst.msk [vmem:[%s532 + $0x81] sm:$0xff] %vm332, %v511
        %545 = vst.msk [vmem:[%s532 + $0x91] sm:$0xff] %vm332, %v512
        %546 = vst.msk [vmem:[%s532 + $0x99] sm:$0xff] %vm332, %v513
        %547 = vst.msk [vmem:[%s532 + $0xa9] sm:$0xff] %vm332, %v514
        %548 = vst.msk [vmem:[%s532 + $0xb1] sm:$0xff] %vm332, %v515
        %549 = vst.msk [vmem:[%s532 + $0xc1] sm:$0xff] %vm332, %v516
        %550 = vst.msk [vmem:[%s532 + $0xc9] sm:$0xff] %vm332, %v517
        %551 = vst.msk [vmem:[%s532 + $0xd9] sm:$0xff] %vm332, %v518
        %552 = vst.msk [vmem:[%s532 + $0xe1] sm:$0xff] %vm332, %v519
        %553 = vst.msk [vmem:[%s532 + $0xf1] sm:$0xff] %vm332, %v520
        %554 = vst.msk [vmem:[%s532 + $0xf9] sm:$0xff] %vm332, %v521
        %555 = vst.msk [vmem:[%s532 + $0x109] sm:$0xff] %vm332, %v522
        %556 = vst.msk [vmem:[%s532 + $0x111] sm:$0xff] %vm332, %v523
        %557 = vst.msk [vmem:[%s532 + $0x121] sm:$0xff] %vm332, %v524
        %558 = vst.msk [vmem:[%s532 + $0x129] sm:$0xff] %vm332, %v525
        %559 = vst.msk [vmem:[%s532 + $0x139] sm:$0xff] %vm332, %v526
        %560 = vst.msk [vmem:[%s532 + $0x141] sm:$0xff] %vm332, %v527
        %561 = vst.msk [vmem:[%s532 + $0x151] sm:$0xff] %vm332, %v528
        %562 = vst.msk [vmem:[%s532 + $0x159] sm:$0xff] %vm332, %v529
        %563 = vst.msk [vmem:[%s532 + $0x169] sm:$0xff] %vm332, %v530
        %564 = vst.msk [vmem:[%s532 + $0x171] sm:$0xff] %vm332, %v531
        %v565 = vld [vmem:[#allocation2] sm:$0xff]
        %v566 = vld [vmem:[#allocation2 + $0x8] sm:$0xff]
        %v567 = vld [vmem:[#allocation2 + $0x18] sm:$0xff]
        %v568 = vld [vmem:[#allocation2 + $0x20] sm:$0xff]
        %v569 = vld [vmem:[#allocation2 + $0x30] sm:$0xff]
        %v570 = vld [vmem:[#allocation2 + $0x38] sm:$0xff]
        %v571 = vld [vmem:[#allocation2 + $0x48] sm:$0xff]
        %v572 = vld [vmem:[#allocation2 + $0x50] sm:$0xff]
        %v573 = vld [vmem:[#allocation2 + $0x60] sm:$0xff]
        %v574 = vld [vmem:[#allocation2 + $0x68] sm:$0xff]
        %v575 = vld [vmem:[#allocation2 + $0x78] sm:$0xff]
        %v576 = vld [vmem:[#allocation2 + $0x80] sm:$0xff]
        %v577 = vld [vmem:[#allocation2 + $0x90] sm:$0xff]
        %v578 = vld [vmem:[#allocation2 + $0x98] sm:$0xff]
        %v579 = vld [vmem:[#allocation2 + $0xa8] sm:$0xff]
        %v580 = vld [vmem:[#allocation2 + $0xb0] sm:$0xff]
        %v581 = vld [vmem:[#allocation2 + $0xc0] sm:$0xff]
        %v582 = vld [vmem:[#allocation2 + $0xc8] sm:$0xff]
        %v583 = vld [vmem:[#allocation2 + $0xd8] sm:$0xff]
        %v584 = vld [vmem:[#allocation2 + $0xe0] sm:$0xff]
        %v585 = vld [vmem:[#allocation2 + $0xf0] sm:$0xff]
        %v586 = vld [vmem:[#allocation2 + $0xf8] sm:$0xff]
        %v587 = vld [vmem:[#allocation2 + $0x108] sm:$0xff]
        %v588 = vld [vmem:[#allocation2 + $0x110] sm:$0xff]
        %v589 = vld [vmem:[#allocation2 + $0x120] sm:$0xff]
        %v590 = vld [vmem:[#allocation2 + $0x128] sm:$0xff]
        %v591 = vld [vmem:[#allocation2 + $0x138] sm:$0xff]
        %v592 = vld [vmem:[#allocation2 + $0x140] sm:$0xff]
        %v593 = vld [vmem:[#allocation2 + $0x150] sm:$0xff]
        %v594 = vld [vmem:[#allocation2 + $0x158] sm:$0xff]
        %v595 = vld [vmem:[#allocation2 + $0x168] sm:$0xff]
        %v596 = vld [vmem:[#allocation2 + $0x170] sm:$0xff]
        %v597 = vld [vmem:[#allocation2 + $0x1] sm:$0xff]
        %v598 = vld [vmem:[#allocation2 + $0x9] sm:$0xff]
        %v599 = vld [vmem:[#allocation2 + $0x19] sm:$0xff]
        %v600 = vld [vmem:[#allocation2 + $0x21] sm:$0xff]
        %v601 = vld [vmem:[#allocation2 + $0x31] sm:$0xff]
        %v602 = vld [vmem:[#allocation2 + $0x39] sm:$0xff]
        %v603 = vld [vmem:[#allocation2 + $0x49] sm:$0xff]
        %v604 = vld [vmem:[#allocation2 + $0x51] sm:$0xff]
        %v605 = vld [vmem:[#allocation2 + $0x61] sm:$0xff]
        %v606 = vld [vmem:[#allocation2 + $0x69] sm:$0xff]
        %v607 = vld [vmem:[#allocation2 + $0x79] sm:$0xff]
        %v608 = vld [vmem:[#allocation2 + $0x81] sm:$0xff]
        %v609 = vld [vmem:[#allocation2 + $0x91] sm:$0xff]
        %v610 = vld [vmem:[#allocation2 + $0x99] sm:$0xff]
        %v611 = vld [vmem:[#allocation2 + $0xa9] sm:$0xff]
        %v612 = vld [vmem:[#allocation2 + $0xb1] sm:$0xff]
        %v613 = vld [vmem:[#allocation2 + $0xc1] sm:$0xff]
        %v614 = vld [vmem:[#allocation2 + $0xc9] sm:$0xff]
        %v615 = vld [vmem:[#allocation2 + $0xd9] sm:$0xff]
        %v616 = vld [vmem:[#allocation2 + $0xe1] sm:$0xff]
        %v617 = vld [vmem:[#allocation2 + $0xf1] sm:$0xff]
        %v618 = vld [vmem:[#allocation2 + $0xf9] sm:$0xff]
        %v619 = vld [vmem:[#allocation2 + $0x109] sm:$0xff]
        %v620 = vld [vmem:[#allocation2 + $0x111] sm:$0xff]
        %v621 = vld [vmem:[#allocation2 + $0x121] sm:$0xff]
        %v622 = vld [vmem:[#allocation2 + $0x129] sm:$0xff]
        %v623 = vld [vmem:[#allocation2 + $0x139] sm:$0xff]
        %v624 = vld [vmem:[#allocation2 + $0x141] sm:$0xff]
        %v625 = vld [vmem:[#allocation2 + $0x151] sm:$0xff]
        %v626 = vld [vmem:[#allocation2 + $0x159] sm:$0xff]
        %v627 = vld [vmem:[#allocation2 + $0x169] sm:$0xff]
        %v628 = vld [vmem:[#allocation2 + $0x171] sm:$0xff]
        %v629 = vld [vmem:[#allocation2 + $0x2] sm:$0xff]
        %v630 = vld [vmem:[#allocation2 + $0xa] sm:$0xff]
        %v631 = vld [vmem:[#allocation2 + $0x1a] sm:$0xff]
        %v632 = vld [vmem:[#allocation2 + $0x22] sm:$0xff]
        %v633 = vld [vmem:[#allocation2 + $0x32] sm:$0xff]
        %v634 = vld [vmem:[#allocation2 + $0x3a] sm:$0xff]
        %v635 = vld [vmem:[#allocation2 + $0x4a] sm:$0xff]
        %v636 = vld [vmem:[#allocation2 + $0x52] sm:$0xff]
        %v637 = vld [vmem:[#allocation2 + $0x62] sm:$0xff]
        %v638 = vld [vmem:[#allocation2 + $0x6a] sm:$0xff]
        %v639 = vld [vmem:[#allocation2 + $0x7a] sm:$0xff]
        %v640 = vld [vmem:[#allocation2 + $0x82] sm:$0xff]
        %v641 = vld [vmem:[#allocation2 + $0x92] sm:$0xff]
        %v642 = vld [vmem:[#allocation2 + $0x9a] sm:$0xff]
        %v643 = vld [vmem:[#allocation2 + $0xaa] sm:$0xff]
        %v644 = vld [vmem:[#allocation2 + $0xb2] sm:$0xff]
        %v645 = vld [vmem:[#allocation2 + $0xc2] sm:$0xff]
        %v646 = vld [vmem:[#allocation2 + $0xca] sm:$0xff]
        %v647 = vld [vmem:[#allocation2 + $0xda] sm:$0xff]
        %v648 = vld [vmem:[#allocation2 + $0xe2] sm:$0xff]
        %v649 = vld [vmem:[#allocation2 + $0xf2] sm:$0xff]
        %v650 = vld [vmem:[#allocation2 + $0xfa] sm:$0xff]
        %v651 = vld [vmem:[#allocation2 + $0x10a] sm:$0xff]
        %v652 = vld [vmem:[#allocation2 + $0x112] sm:$0xff]
        %v653 = vld [vmem:[#allocation2 + $0x122] sm:$0xff]
        %v654 = vld [vmem:[#allocation2 + $0x12a] sm:$0xff]
        %v655 = vld [vmem:[#allocation2 + $0x13a] sm:$0xff]
        %v656 = vld [vmem:[#allocation2 + $0x142] sm:$0xff]
        %v657 = vld [vmem:[#allocation2 + $0x152] sm:$0xff]
        %v658 = vld [vmem:[#allocation2 + $0x15a] sm:$0xff]
        %v659 = vld [vmem:[#allocation2 + $0x16a] sm:$0xff]
        %v660 = vld [vmem:[#allocation2 + $0x172] sm:$0xff]
        %v661 = vld [vmem:[%s532] sm:$0xff]
        %v662 = vld [vmem:[%s532 + $0x8] sm:$0xff]
        %v663 = vld [vmem:[%s532 + $0x18] sm:$0xff]
        %v664 = vld [vmem:[%s532 + $0x20] sm:$0xff]
        %v665 = vld [vmem:[%s532 + $0x30] sm:$0xff]
        %v666 = vld [vmem:[%s532 + $0x38] sm:$0xff]
        %v667 = vld [vmem:[%s532 + $0x48] sm:$0xff]
        %v668 = vld [vmem:[%s532 + $0x50] sm:$0xff]
        %v669 = vld [vmem:[%s532 + $0x60] sm:$0xff]
        %v670 = vld [vmem:[%s532 + $0x68] sm:$0xff]
        %v671 = vld [vmem:[%s532 + $0x78] sm:$0xff]
        %v672 = vld [vmem:[%s532 + $0x80] sm:$0xff]
        %v673 = vld [vmem:[%s532 + $0x90] sm:$0xff]
        %v674 = vld [vmem:[%s532 + $0x98] sm:$0xff]
        %v675 = vld [vmem:[%s532 + $0xa8] sm:$0xff]
        %v676 = vld [vmem:[%s532 + $0xb0] sm:$0xff]
        %v677 = vld [vmem:[%s532 + $0xc0] sm:$0xff]
        %v678 = vld [vmem:[%s532 + $0xc8] sm:$0xff]
        %v679 = vld [vmem:[%s532 + $0xd8] sm:$0xff]
        %v680 = vld [vmem:[%s532 + $0xe0] sm:$0xff]
        %v681 = vld [vmem:[%s532 + $0xf0] sm:$0xff]
        %v682 = vld [vmem:[%s532 + $0xf8] sm:$0xff]
        %v683 = vld [vmem:[%s532 + $0x108] sm:$0xff]
        %v684 = vld [vmem:[%s532 + $0x110] sm:$0xff]
        %v685 = vld [vmem:[%s532 + $0x120] sm:$0xff]
        %v686 = vld [vmem:[%s532 + $0x128] sm:$0xff]
        %v687 = vld [vmem:[%s532 + $0x138] sm:$0xff]
        %v688 = vld [vmem:[%s532 + $0x140] sm:$0xff]
        %v689 = vld [vmem:[%s532 + $0x150] sm:$0xff]
        %v690 = vld [vmem:[%s532 + $0x158] sm:$0xff]
        %v691 = vld [vmem:[%s532 + $0x168] sm:$0xff]
        %v692 = vld [vmem:[%s532 + $0x170] sm:$0xff]
        %v693 = vld [vmem:[%s532 + $0x1] sm:$0xff]
        %v694 = vld [vmem:[%s532 + $0x9] sm:$0xff]
        %v695 = vld [vmem:[%s532 + $0x19] sm:$0xff]
        %v696 = vld [vmem:[%s532 + $0x21] sm:$0xff]
        %v697 = vld [vmem:[%s532 + $0x31] sm:$0xff]
        %v698 = vld [vmem:[%s532 + $0x39] sm:$0xff]
        %v699 = vld [vmem:[%s532 + $0x49] sm:$0xff]
        %v700 = vld [vmem:[%s532 + $0x51] sm:$0xff]
        %v701 = vld [vmem:[%s532 + $0x61] sm:$0xff]
        %v702 = vld [vmem:[%s532 + $0x69] sm:$0xff]
        %v703 = vld [vmem:[%s532 + $0x79] sm:$0xff]
        %v704 = vld [vmem:[%s532 + $0x81] sm:$0xff]
        %v705 = vld [vmem:[%s532 + $0x91] sm:$0xff]
        %v706 = vld [vmem:[%s532 + $0x99] sm:$0xff]
        %v707 = vld [vmem:[%s532 + $0xa9] sm:$0xff]
        %v708 = vld [vmem:[%s532 + $0xb1] sm:$0xff]
        %v709 = vld [vmem:[%s532 + $0xc1] sm:$0xff]
        %v710 = vld [vmem:[%s532 + $0xc9] sm:$0xff]
        %v711 = vld [vmem:[%s532 + $0xd9] sm:$0xff]
        %v712 = vld [vmem:[%s532 + $0xe1] sm:$0xff]
        %v713 = vld [vmem:[%s532 + $0xf1] sm:$0xff]
        %v714 = vld [vmem:[%s532 + $0xf9] sm:$0xff]
        %v715 = vld [vmem:[%s532 + $0x109] sm:$0xff]
        %v716 = vld [vmem:[%s532 + $0x111] sm:$0xff]
        %v717 = vld [vmem:[%s532 + $0x121] sm:$0xff]
        %v718 = vld [vmem:[%s532 + $0x129] sm:$0xff]
        %v719 = vld [vmem:[%s532 + $0x139] sm:$0xff]
        %v720 = vld [vmem:[%s532 + $0x141] sm:$0xff]
        %v721 = vld [vmem:[%s532 + $0x151] sm:$0xff]
        %v722 = vld [vmem:[%s532 + $0x159] sm:$0xff]
        %v723 = vld [vmem:[%s532 + $0x169] sm:$0xff]
        %v724 = vld [vmem:[%s532 + $0x171] sm:$0xff]
        %v725 = vld [vmem:[%s532 + $0x2] sm:$0xff]
        %v726 = vld [vmem:[%s532 + $0xa] sm:$0xff]
        %v727 = vld [vmem:[%s532 + $0x1a] sm:$0xff]
        %v728 = vld [vmem:[%s532 + $0x22] sm:$0xff]
        %v729 = vld [vmem:[%s532 + $0x32] sm:$0xff]
        %v730 = vld [vmem:[%s532 + $0x3a] sm:$0xff]
        %v731 = vld [vmem:[%s532 + $0x4a] sm:$0xff]
        %v732 = vld [vmem:[%s532 + $0x52] sm:$0xff]
        %v733 = vld [vmem:[%s532 + $0x62] sm:$0xff]
        %v734 = vld [vmem:[%s532 + $0x6a] sm:$0xff]
        %v735 = vld [vmem:[%s532 + $0x7a] sm:$0xff]
        %v736 = vld [vmem:[%s532 + $0x82] sm:$0xff]
        %v737 = vld [vmem:[%s532 + $0x92] sm:$0xff]
        %v738 = vld [vmem:[%s532 + $0x9a] sm:$0xff]
        %v739 = vld [vmem:[%s532 + $0xaa] sm:$0xff]
        %v740 = vld [vmem:[%s532 + $0xb2] sm:$0xff]
        %v741 = vld [vmem:[%s532 + $0xc2] sm:$0xff]
        %v742 = vld [vmem:[%s532 + $0xca] sm:$0xff]
        %v743 = vld [vmem:[%s532 + $0xda] sm:$0xff]
        %v744 = vld [vmem:[%s532 + $0xe2] sm:$0xff]
        %v745 = vld [vmem:[%s532 + $0xf2] sm:$0xff]
        %v746 = vld [vmem:[%s532 + $0xfa] sm:$0xff]
        %v747 = vld [vmem:[%s532 + $0x10a] sm:$0xff]
        %v748 = vld [vmem:[%s532 + $0x112] sm:$0xff]
        %v749 = vld [vmem:[%s532 + $0x122] sm:$0xff]
        %v750 = vld [vmem:[%s532 + $0x12a] sm:$0xff]
        %v751 = vld [vmem:[%s532 + $0x13a] sm:$0xff]
        %v752 = vld [vmem:[%s532 + $0x142] sm:$0xff]
        %v753 = vld [vmem:[%s532 + $0x152] sm:$0xff]
        %v754 = vld [vmem:[%s532 + $0x15a] sm:$0xff]
        %v755 = vld [vmem:[%s532 + $0x16a] sm:$0xff]
        %v756 = vld [vmem:[%s532 + $0x172] sm:$0xff]
        %s757 = scalar_lea.vmem [#allocation2], 48
        %v758 = vld [vmem:[%s757] sm:$0xff]
        %v759 = vld [vmem:[%s757 + $0x8] sm:$0xff]
        %v760 = vld [vmem:[%s757 + $0x18] sm:$0xff]
        %v761 = vld [vmem:[%s757 + $0x20] sm:$0xff]
        %v762 = vld [vmem:[%s757 + $0x30] sm:$0xff]
        %v763 = vld [vmem:[%s757 + $0x38] sm:$0xff]
        %v764 = vld [vmem:[%s757 + $0x48] sm:$0xff]
        %v765 = vld [vmem:[%s757 + $0x50] sm:$0xff]
        %v766 = vld [vmem:[%s757 + $0x60] sm:$0xff]
        %v767 = vld [vmem:[%s757 + $0x68] sm:$0xff]
        %v768 = vld [vmem:[%s757 + $0x78] sm:$0xff]
        %v769 = vld [vmem:[%s757 + $0x80] sm:$0xff]
        %v770 = vld [vmem:[%s757 + $0x90] sm:$0xff]
        %v771 = vld [vmem:[%s757 + $0x98] sm:$0xff]
        %v772 = vld [vmem:[%s757 + $0xa8] sm:$0xff]
        %v773 = vld [vmem:[%s757 + $0xb0] sm:$0xff]
        %v774 = vld [vmem:[%s757 + $0xc0] sm:$0xff]
        %v775 = vld [vmem:[%s757 + $0xc8] sm:$0xff]
        %v776 = vld [vmem:[%s757 + $0xd8] sm:$0xff]
        %v777 = vld [vmem:[%s757 + $0xe0] sm:$0xff]
        %v778 = vld [vmem:[%s757 + $0xf0] sm:$0xff]
        %v779 = vld [vmem:[%s757 + $0xf8] sm:$0xff]
        %v780 = vld [vmem:[%s757 + $0x108] sm:$0xff]
        %v781 = vld [vmem:[%s757 + $0x110] sm:$0xff]
        %v782 = vld [vmem:[%s757 + $0x120] sm:$0xff]
        %v783 = vld [vmem:[%s757 + $0x128] sm:$0xff]
        %v784 = vld [vmem:[%s757 + $0x138] sm:$0xff]
        %v785 = vld [vmem:[%s757 + $0x140] sm:$0xff]
        %v786 = vld [vmem:[%s757 + $0x150] sm:$0xff]
        %v787 = vld [vmem:[%s757 + $0x158] sm:$0xff]
        %v788 = vld [vmem:[%s757 + $0x168] sm:$0xff]
        %v789 = vld [vmem:[%s757 + $0x170] sm:$0xff]
        %v790 = vld [vmem:[%s757 + $0x1] sm:$0xff]
        %v791 = vld [vmem:[%s757 + $0x9] sm:$0xff]
        %v792 = vld [vmem:[%s757 + $0x19] sm:$0xff]
        %v793 = vld [vmem:[%s757 + $0x21] sm:$0xff]
        %v794 = vld [vmem:[%s757 + $0x31] sm:$0xff]
        %v795 = vld [vmem:[%s757 + $0x39] sm:$0xff]
        %v796 = vld [vmem:[%s757 + $0x49] sm:$0xff]
        %v797 = vld [vmem:[%s757 + $0x51] sm:$0xff]
        %v798 = vld [vmem:[%s757 + $0x61] sm:$0xff]
        %v799 = vld [vmem:[%s757 + $0x69] sm:$0xff]
        %v800 = vld [vmem:[%s757 + $0x79] sm:$0xff]
        %v801 = vld [vmem:[%s757 + $0x81] sm:$0xff]
        %v802 = vld [vmem:[%s757 + $0x91] sm:$0xff]
        %v803 = vld [vmem:[%s757 + $0x99] sm:$0xff]
        %v804 = vld [vmem:[%s757 + $0xa9] sm:$0xff]
        %v805 = vld [vmem:[%s757 + $0xb1] sm:$0xff]
        %v806 = vld [vmem:[%s757 + $0xc1] sm:$0xff]
        %v807 = vld [vmem:[%s757 + $0xc9] sm:$0xff]
        %v808 = vld [vmem:[%s757 + $0xd9] sm:$0xff]
        %v809 = vld [vmem:[%s757 + $0xe1] sm:$0xff]
        %v810 = vld [vmem:[%s757 + $0xf1] sm:$0xff]
        %v811 = vld [vmem:[%s757 + $0xf9] sm:$0xff]
        %v812 = vld [vmem:[%s757 + $0x109] sm:$0xff]
        %v813 = vld [vmem:[%s757 + $0x111] sm:$0xff]
        %v814 = vld [vmem:[%s757 + $0x121] sm:$0xff]
        %v815 = vld [vmem:[%s757 + $0x129] sm:$0xff]
        %v816 = vld [vmem:[%s757 + $0x139] sm:$0xff]
        %v817 = vld [vmem:[%s757 + $0x141] sm:$0xff]
        %v818 = vld [vmem:[%s757 + $0x151] sm:$0xff]
        %v819 = vld [vmem:[%s757 + $0x159] sm:$0xff]
        %v820 = vld [vmem:[%s757 + $0x169] sm:$0xff]
        %v821 = vld [vmem:[%s757 + $0x171] sm:$0xff]
        %v822 = vld [vmem:[%s757 + $0x2] sm:$0xff]
        %v823 = vld [vmem:[%s757 + $0xa] sm:$0xff]
        %v824 = vld [vmem:[%s757 + $0x1a] sm:$0xff]
        %v825 = vld [vmem:[%s757 + $0x22] sm:$0xff]
        %v826 = vld [vmem:[%s757 + $0x32] sm:$0xff]
        %v827 = vld [vmem:[%s757 + $0x3a] sm:$0xff]
        %v828 = vld [vmem:[%s757 + $0x4a] sm:$0xff]
        %v829 = vld [vmem:[%s757 + $0x52] sm:$0xff]
        %v830 = vld [vmem:[%s757 + $0x62] sm:$0xff]
        %v831 = vld [vmem:[%s757 + $0x6a] sm:$0xff]
        %v832 = vld [vmem:[%s757 + $0x7a] sm:$0xff]
        %v833 = vld [vmem:[%s757 + $0x82] sm:$0xff]
        %v834 = vld [vmem:[%s757 + $0x92] sm:$0xff]
        %v835 = vld [vmem:[%s757 + $0x9a] sm:$0xff]
        %v836 = vld [vmem:[%s757 + $0xaa] sm:$0xff]
        %v837 = vld [vmem:[%s757 + $0xb2] sm:$0xff]
        %v838 = vld [vmem:[%s757 + $0xc2] sm:$0xff]
        %v839 = vld [vmem:[%s757 + $0xca] sm:$0xff]
        %v840 = vld [vmem:[%s757 + $0xda] sm:$0xff]
        %v841 = vld [vmem:[%s757 + $0xe2] sm:$0xff]
        %v842 = vld [vmem:[%s757 + $0xf2] sm:$0xff]
        %v843 = vld [vmem:[%s757 + $0xfa] sm:$0xff]
        %v844 = vld [vmem:[%s757 + $0x10a] sm:$0xff]
        %v845 = vld [vmem:[%s757 + $0x112] sm:$0xff]
        %v846 = vld [vmem:[%s757 + $0x122] sm:$0xff]
        %v847 = vld [vmem:[%s757 + $0x12a] sm:$0xff]
        %v848 = vld [vmem:[%s757 + $0x13a] sm:$0xff]
        %v849 = vld [vmem:[%s757 + $0x142] sm:$0xff]
        %v850 = vld [vmem:[%s757 + $0x152] sm:$0xff]
        %v851 = vld [vmem:[%s757 + $0x15a] sm:$0xff]
        %v852 = vld [vmem:[%s757 + $0x16a] sm:$0xff]
        %v853 = vld [vmem:[%s757 + $0x172] sm:$0xff]
        %886 = vrot.lane.b32.xlu0 %v597, 6
        %v887 = vpop.permute.xlu0 %886
        %888 = vrot.lane.b32.xlu0 %v598, 6
        %v889 = vpop.permute.xlu0 %888
        %890 = vrot.lane.b32.xlu0 %v599, 6
        %v891 = vpop.permute.xlu0 %890
        %892 = vrot.lane.b32.xlu0 %v600, 6
        %v893 = vpop.permute.xlu0 %892
        %894 = vrot.lane.b32.xlu0 %v601, 6
        %v895 = vpop.permute.xlu0 %894
        %896 = vrot.lane.b32.xlu0 %v602, 6
        %v897 = vpop.permute.xlu0 %896
        %898 = vrot.lane.b32.xlu0 %v603, 6
        %v899 = vpop.permute.xlu0 %898
        %900 = vrot.lane.b32.xlu0 %v604, 6
        %v901 = vpop.permute.xlu0 %900
        %902 = vrot.lane.b32.xlu0 %v605, 6
        %v903 = vpop.permute.xlu0 %902
        %904 = vrot.lane.b32.xlu0 %v606, 6
        %v905 = vpop.permute.xlu0 %904
        %906 = vrot.lane.b32.xlu0 %v607, 6
        %v907 = vpop.permute.xlu0 %906
        %908 = vrot.lane.b32.xlu0 %v608, 6
        %v909 = vpop.permute.xlu0 %908
        %910 = vrot.lane.b32.xlu0 %v609, 6
        %v911 = vpop.permute.xlu0 %910
        %912 = vrot.lane.b32.xlu0 %v610, 6
        %v913 = vpop.permute.xlu0 %912
        %914 = vrot.lane.b32.xlu0 %v611, 6
        %v915 = vpop.permute.xlu0 %914
        %916 = vrot.lane.b32.xlu0 %v612, 6
        %v917 = vpop.permute.xlu0 %916
        %918 = vrot.lane.b32.xlu0 %v613, 6
        %v919 = vpop.permute.xlu0 %918
        %920 = vrot.lane.b32.xlu0 %v614, 6
        %v921 = vpop.permute.xlu0 %920
        %922 = vrot.lane.b32.xlu0 %v615, 6
        %v923 = vpop.permute.xlu0 %922
        %924 = vrot.lane.b32.xlu0 %v616, 6
        %v925 = vpop.permute.xlu0 %924
        %926 = vrot.lane.b32.xlu0 %v617, 6
        %v927 = vpop.permute.xlu0 %926
        %928 = vrot.lane.b32.xlu0 %v618, 6
        %v929 = vpop.permute.xlu0 %928
        %930 = vrot.lane.b32.xlu0 %v619, 6
        %v931 = vpop.permute.xlu0 %930
        %932 = vrot.lane.b32.xlu0 %v620, 6
        %v933 = vpop.permute.xlu0 %932
        %934 = vrot.lane.b32.xlu0 %v621, 6
        %v935 = vpop.permute.xlu0 %934
        %936 = vrot.lane.b32.xlu0 %v622, 6
        %v937 = vpop.permute.xlu0 %936
        %938 = vrot.lane.b32.xlu0 %v623, 6
        %v939 = vpop.permute.xlu0 %938
        %940 = vrot.lane.b32.xlu0 %v624, 6
        %v941 = vpop.permute.xlu0 %940
        %942 = vrot.lane.b32.xlu0 %v625, 6
        %v943 = vpop.permute.xlu0 %942
        %944 = vrot.lane.b32.xlu0 %v626, 6
        %v945 = vpop.permute.xlu0 %944
        %946 = vrot.lane.b32.xlu0 %v627, 6
        %v947 = vpop.permute.xlu0 %946
        %948 = vrot.lane.b32.xlu0 %v628, 6
        %v949 = vpop.permute.xlu0 %948
        %1014 = vrot.lane.b32.xlu0 %v629, 12
        %v1015 = vpop.permute.xlu0 %1014
        %1016 = vrot.lane.b32.xlu0 %v630, 12
        %v1017 = vpop.permute.xlu0 %1016
        %1018 = vrot.lane.b32.xlu0 %v631, 12
        %v1019 = vpop.permute.xlu0 %1018
        %1020 = vrot.lane.b32.xlu0 %v632, 12
        %v1021 = vpop.permute.xlu0 %1020
        %1022 = vrot.lane.b32.xlu0 %v633, 12
        %v1023 = vpop.permute.xlu0 %1022
        %1024 = vrot.lane.b32.xlu0 %v634, 12
        %v1025 = vpop.permute.xlu0 %1024
        %1026 = vrot.lane.b32.xlu0 %v635, 12
        %v1027 = vpop.permute.xlu0 %1026
        %1028 = vrot.lane.b32.xlu0 %v636, 12
        %v1029 = vpop.permute.xlu0 %1028
        %1030 = vrot.lane.b32.xlu0 %v637, 12
        %v1031 = vpop.permute.xlu0 %1030
        %1032 = vrot.lane.b32.xlu0 %v638, 12
        %v1033 = vpop.permute.xlu0 %1032
        %1034 = vrot.lane.b32.xlu0 %v639, 12
        %v1035 = vpop.permute.xlu0 %1034
        %1036 = vrot.lane.b32.xlu0 %v640, 12
        %v1037 = vpop.permute.xlu0 %1036
        %1038 = vrot.lane.b32.xlu0 %v641, 12
        %v1039 = vpop.permute.xlu0 %1038
        %1040 = vrot.lane.b32.xlu0 %v642, 12
        %v1041 = vpop.permute.xlu0 %1040
        %1042 = vrot.lane.b32.xlu0 %v643, 12
        %v1043 = vpop.permute.xlu0 %1042
        %1044 = vrot.lane.b32.xlu0 %v644, 12
        %v1045 = vpop.permute.xlu0 %1044
        %1046 = vrot.lane.b32.xlu0 %v645, 12
        %v1047 = vpop.permute.xlu0 %1046
        %1048 = vrot.lane.b32.xlu0 %v646, 12
        %v1049 = vpop.permute.xlu0 %1048
        %1050 = vrot.lane.b32.xlu0 %v647, 12
        %v1051 = vpop.permute.xlu0 %1050
        %1052 = vrot.lane.b32.xlu0 %v648, 12
        %v1053 = vpop.permute.xlu0 %1052
        %1054 = vrot.lane.b32.xlu0 %v649, 12
        %v1055 = vpop.permute.xlu0 %1054
        %1056 = vrot.lane.b32.xlu0 %v650, 12
        %v1057 = vpop.permute.xlu0 %1056
        %1058 = vrot.lane.b32.xlu0 %v651, 12
        %v1059 = vpop.permute.xlu0 %1058
        %1060 = vrot.lane.b32.xlu0 %v652, 12
        %v1061 = vpop.permute.xlu0 %1060
        %1062 = vrot.lane.b32.xlu0 %v653, 12
        %v1063 = vpop.permute.xlu0 %1062
        %1064 = vrot.lane.b32.xlu0 %v654, 12
        %v1065 = vpop.permute.xlu0 %1064
        %1066 = vrot.lane.b32.xlu0 %v655, 12
        %v1067 = vpop.permute.xlu0 %1066
        %1068 = vrot.lane.b32.xlu0 %v656, 12
        %v1069 = vpop.permute.xlu0 %1068
        %1070 = vrot.lane.b32.xlu0 %v657, 12
        %v1071 = vpop.permute.xlu0 %1070
        %1072 = vrot.lane.b32.xlu0 %v658, 12
        %v1073 = vpop.permute.xlu0 %1072
        %1074 = vrot.lane.b32.xlu0 %v659, 12
        %v1075 = vpop.permute.xlu0 %1074
        %1076 = vrot.lane.b32.xlu0 %v660, 12
        %v1077 = vpop.permute.xlu0 %1076
        %1142 = vrot.lane.b32.xlu0 %v661, 18
        %v1143 = vpop.permute.xlu0 %1142
        %1144 = vrot.lane.b32.xlu0 %v662, 18
        %v1145 = vpop.permute.xlu0 %1144
        %1146 = vrot.lane.b32.xlu0 %v663, 18
        %v1147 = vpop.permute.xlu0 %1146
        %1148 = vrot.lane.b32.xlu0 %v664, 18
        %v1149 = vpop.permute.xlu0 %1148
        %1150 = vrot.lane.b32.xlu0 %v665, 18
        %v1151 = vpop.permute.xlu0 %1150
        %1152 = vrot.lane.b32.xlu0 %v666, 18
        %v1153 = vpop.permute.xlu0 %1152
        %1154 = vrot.lane.b32.xlu0 %v667, 18
        %v1155 = vpop.permute.xlu0 %1154
        %1156 = vrot.lane.b32.xlu0 %v668, 18
        %v1157 = vpop.permute.xlu0 %1156
        %1158 = vrot.lane.b32.xlu0 %v669, 18
        %v1159 = vpop.permute.xlu0 %1158
        %1160 = vrot.lane.b32.xlu0 %v670, 18
        %v1161 = vpop.permute.xlu0 %1160
        %1162 = vrot.lane.b32.xlu0 %v671, 18
        %v1163 = vpop.permute.xlu0 %1162
        %1164 = vrot.lane.b32.xlu0 %v672, 18
        %v1165 = vpop.permute.xlu0 %1164
        %1166 = vrot.lane.b32.xlu0 %v673, 18
        %v1167 = vpop.permute.xlu0 %1166
        %1168 = vrot.lane.b32.xlu0 %v674, 18
        %v1169 = vpop.permute.xlu0 %1168
        %1170 = vrot.lane.b32.xlu0 %v675, 18
        %v1171 = vpop.permute.xlu0 %1170
        %1172 = vrot.lane.b32.xlu0 %v676, 18
        %v1173 = vpop.permute.xlu0 %1172
        %1174 = vrot.lane.b32.xlu0 %v677, 18
        %v1175 = vpop.permute.xlu0 %1174
        %1176 = vrot.lane.b32.xlu0 %v678, 18
        %v1177 = vpop.permute.xlu0 %1176
        %1178 = vrot.lane.b32.xlu0 %v679, 18
        %v1179 = vpop.permute.xlu0 %1178
        %1180 = vrot.lane.b32.xlu0 %v680, 18
        %v1181 = vpop.permute.xlu0 %1180
        %1182 = vrot.lane.b32.xlu0 %v681, 18
        %v1183 = vpop.permute.xlu0 %1182
        %1184 = vrot.lane.b32.xlu0 %v682, 18
        %v1185 = vpop.permute.xlu0 %1184
        %1186 = vrot.lane.b32.xlu0 %v683, 18
        %v1187 = vpop.permute.xlu0 %1186
        %1188 = vrot.lane.b32.xlu0 %v684, 18
        %v1189 = vpop.permute.xlu0 %1188
        %1190 = vrot.lane.b32.xlu0 %v685, 18
        %v1191 = vpop.permute.xlu0 %1190
        %1192 = vrot.lane.b32.xlu0 %v686, 18
        %v1193 = vpop.permute.xlu0 %1192
        %1194 = vrot.lane.b32.xlu0 %v687, 18
        %v1195 = vpop.permute.xlu0 %1194
        %1196 = vrot.lane.b32.xlu0 %v688, 18
        %v1197 = vpop.permute.xlu0 %1196
        %1198 = vrot.lane.b32.xlu0 %v689, 18
        %v1199 = vpop.permute.xlu0 %1198
        %1200 = vrot.lane.b32.xlu0 %v690, 18
        %v1201 = vpop.permute.xlu0 %1200
        %1202 = vrot.lane.b32.xlu0 %v691, 18
        %v1203 = vpop.permute.xlu0 %1202
        %1204 = vrot.lane.b32.xlu0 %v692, 18
        %v1205 = vpop.permute.xlu0 %1204
        %1270 = vrot.lane.b32.xlu0 %v693, 24
        %v1271 = vpop.permute.xlu0 %1270
        %1272 = vrot.lane.b32.xlu0 %v694, 24
        %v1273 = vpop.permute.xlu0 %1272
        %1274 = vrot.lane.b32.xlu0 %v695, 24
        %v1275 = vpop.permute.xlu0 %1274
        %1276 = vrot.lane.b32.xlu0 %v696, 24
        %v1277 = vpop.permute.xlu0 %1276
        %1278 = vrot.lane.b32.xlu0 %v697, 24
        %v1279 = vpop.permute.xlu0 %1278
        %1280 = vrot.lane.b32.xlu0 %v698, 24
        %v1281 = vpop.permute.xlu0 %1280
        %1282 = vrot.lane.b32.xlu0 %v699, 24
        %v1283 = vpop.permute.xlu0 %1282
        %1284 = vrot.lane.b32.xlu0 %v700, 24
        %v1285 = vpop.permute.xlu0 %1284
        %1286 = vrot.lane.b32.xlu0 %v701, 24
        %v1287 = vpop.permute.xlu0 %1286
        %1288 = vrot.lane.b32.xlu0 %v702, 24
        %v1289 = vpop.permute.xlu0 %1288
        %1290 = vrot.lane.b32.xlu0 %v703, 24
        %v1291 = vpop.permute.xlu0 %1290
        %1292 = vrot.lane.b32.xlu0 %v704, 24
        %v1293 = vpop.permute.xlu0 %1292
        %1294 = vrot.lane.b32.xlu0 %v705, 24
        %v1295 = vpop.permute.xlu0 %1294
        %1296 = vrot.lane.b32.xlu0 %v706, 24
        %v1297 = vpop.permute.xlu0 %1296
        %1298 = vrot.lane.b32.xlu0 %v707, 24
        %v1299 = vpop.permute.xlu0 %1298
        %1300 = vrot.lane.b32.xlu0 %v708, 24
        %v1301 = vpop.permute.xlu0 %1300
        %1302 = vrot.lane.b32.xlu0 %v709, 24
        %v1303 = vpop.permute.xlu0 %1302
        %1304 = vrot.lane.b32.xlu0 %v710, 24
        %v1305 = vpop.permute.xlu0 %1304
        %1306 = vrot.lane.b32.xlu0 %v711, 24
        %v1307 = vpop.permute.xlu0 %1306
        %1308 = vrot.lane.b32.xlu0 %v712, 24
        %v1309 = vpop.permute.xlu0 %1308
        %1310 = vrot.lane.b32.xlu0 %v713, 24
        %v1311 = vpop.permute.xlu0 %1310
        %1312 = vrot.lane.b32.xlu0 %v714, 24
        %v1313 = vpop.permute.xlu0 %1312
        %1314 = vrot.lane.b32.xlu0 %v715, 24
        %v1315 = vpop.permute.xlu0 %1314
        %1316 = vrot.lane.b32.xlu0 %v716, 24
        %v1317 = vpop.permute.xlu0 %1316
        %1318 = vrot.lane.b32.xlu0 %v717, 24
        %v1319 = vpop.permute.xlu0 %1318
        %1320 = vrot.lane.b32.xlu0 %v718, 24
        %v1321 = vpop.permute.xlu0 %1320
        %1322 = vrot.lane.b32.xlu0 %v719, 24
        %v1323 = vpop.permute.xlu0 %1322
        %1324 = vrot.lane.b32.xlu0 %v720, 24
        %v1325 = vpop.permute.xlu0 %1324
        %1326 = vrot.lane.b32.xlu0 %v721, 24
        %v1327 = vpop.permute.xlu0 %1326
        %1328 = vrot.lane.b32.xlu0 %v722, 24
        %v1329 = vpop.permute.xlu0 %1328
        %1330 = vrot.lane.b32.xlu0 %v723, 24
        %v1331 = vpop.permute.xlu0 %1330
        %1332 = vrot.lane.b32.xlu0 %v724, 24
        %v1333 = vpop.permute.xlu0 %1332
        %1398 = vrot.lane.b32.xlu0 %v725, 30
        %v1399 = vpop.permute.xlu0 %1398
        %1400 = vrot.lane.b32.xlu0 %v726, 30
        %v1401 = vpop.permute.xlu0 %1400
        %1402 = vrot.lane.b32.xlu0 %v727, 30
        %v1403 = vpop.permute.xlu0 %1402
        %1404 = vrot.lane.b32.xlu0 %v728, 30
        %v1405 = vpop.permute.xlu0 %1404
        %1406 = vrot.lane.b32.xlu0 %v729, 30
        %v1407 = vpop.permute.xlu0 %1406
        %1408 = vrot.lane.b32.xlu0 %v730, 30
        %v1409 = vpop.permute.xlu0 %1408
        %1410 = vrot.lane.b32.xlu0 %v731, 30
        %v1411 = vpop.permute.xlu0 %1410
        %1412 = vrot.lane.b32.xlu0 %v732, 30
        %v1413 = vpop.permute.xlu0 %1412
        %1414 = vrot.lane.b32.xlu0 %v733, 30
        %v1415 = vpop.permute.xlu0 %1414
        %1416 = vrot.lane.b32.xlu0 %v734, 30
        %v1417 = vpop.permute.xlu0 %1416
        %1418 = vrot.lane.b32.xlu0 %v735, 30
        %v1419 = vpop.permute.xlu0 %1418
        %1420 = vrot.lane.b32.xlu0 %v736, 30
        %v1421 = vpop.permute.xlu0 %1420
        %1422 = vrot.lane.b32.xlu0 %v737, 30
        %v1423 = vpop.permute.xlu0 %1422
        %1424 = vrot.lane.b32.xlu0 %v738, 30
        %v1425 = vpop.permute.xlu0 %1424
        %1426 = vrot.lane.b32.xlu0 %v739, 30
        %v1427 = vpop.permute.xlu0 %1426
        %1428 = vrot.lane.b32.xlu0 %v740, 30
        %v1429 = vpop.permute.xlu0 %1428
        %1430 = vrot.lane.b32.xlu0 %v741, 30
        %v1431 = vpop.permute.xlu0 %1430
        %1432 = vrot.lane.b32.xlu0 %v742, 30
        %v1433 = vpop.permute.xlu0 %1432
        %1434 = vrot.lane.b32.xlu0 %v743, 30
        %v1435 = vpop.permute.xlu0 %1434
        %1436 = vrot.lane.b32.xlu0 %v744, 30
        %v1437 = vpop.permute.xlu0 %1436
        %1438 = vrot.lane.b32.xlu0 %v745, 30
        %v1439 = vpop.permute.xlu0 %1438
        %1440 = vrot.lane.b32.xlu0 %v746, 30
        %v1441 = vpop.permute.xlu0 %1440
        %1442 = vrot.lane.b32.xlu0 %v747, 30
        %v1443 = vpop.permute.xlu0 %1442
        %1444 = vrot.lane.b32.xlu0 %v748, 30
        %v1445 = vpop.permute.xlu0 %1444
        %1446 = vrot.lane.b32.xlu0 %v749, 30
        %v1447 = vpop.permute.xlu0 %1446
        %1448 = vrot.lane.b32.xlu0 %v750, 30
        %v1449 = vpop.permute.xlu0 %1448
        %1450 = vrot.lane.b32.xlu0 %v751, 30
        %v1451 = vpop.permute.xlu0 %1450
        %1452 = vrot.lane.b32.xlu0 %v752, 30
        %v1453 = vpop.permute.xlu0 %1452
        %1454 = vrot.lane.b32.xlu0 %v753, 30
        %v1455 = vpop.permute.xlu0 %1454
        %1456 = vrot.lane.b32.xlu0 %v754, 30
        %v1457 = vpop.permute.xlu0 %1456
        %1458 = vrot.lane.b32.xlu0 %v755, 30
        %v1459 = vpop.permute.xlu0 %1458
        %1460 = vrot.lane.b32.xlu0 %v756, 30
        %v1461 = vpop.permute.xlu0 %1460
        %1526 = vrot.lane.b32.xlu0 %v758, 36
        %v1527 = vpop.permute.xlu0 %1526
        %1528 = vrot.lane.b32.xlu0 %v759, 36
        %v1529 = vpop.permute.xlu0 %1528
        %1530 = vrot.lane.b32.xlu0 %v760, 36
        %v1531 = vpop.permute.xlu0 %1530
        %1532 = vrot.lane.b32.xlu0 %v761, 36
        %v1533 = vpop.permute.xlu0 %1532
        %1534 = vrot.lane.b32.xlu0 %v762, 36
        %v1535 = vpop.permute.xlu0 %1534
        %1536 = vrot.lane.b32.xlu0 %v763, 36
        %v1537 = vpop.permute.xlu0 %1536
        %1538 = vrot.lane.b32.xlu0 %v764, 36
        %v1539 = vpop.permute.xlu0 %1538
        %1540 = vrot.lane.b32.xlu0 %v765, 36
        %v1541 = vpop.permute.xlu0 %1540
        %1542 = vrot.lane.b32.xlu0 %v766, 36
        %v1543 = vpop.permute.xlu0 %1542
        %1544 = vrot.lane.b32.xlu0 %v767, 36
        %v1545 = vpop.permute.xlu0 %1544
        %1546 = vrot.lane.b32.xlu0 %v768, 36
        %v1547 = vpop.permute.xlu0 %1546
        %1548 = vrot.lane.b32.xlu0 %v769, 36
        %v1549 = vpop.permute.xlu0 %1548
        %1550 = vrot.lane.b32.xlu0 %v770, 36
        %v1551 = vpop.permute.xlu0 %1550
        %1552 = vrot.lane.b32.xlu0 %v771, 36
        %v1553 = vpop.permute.xlu0 %1552
        %1554 = vrot.lane.b32.xlu0 %v772, 36
        %v1555 = vpop.permute.xlu0 %1554
        %1556 = vrot.lane.b32.xlu0 %v773, 36
        %v1557 = vpop.permute.xlu0 %1556
        %1558 = vrot.lane.b32.xlu0 %v774, 36
        %v1559 = vpop.permute.xlu0 %1558
        %1560 = vrot.lane.b32.xlu0 %v775, 36
        %v1561 = vpop.permute.xlu0 %1560
        %1562 = vrot.lane.b32.xlu0 %v776, 36
        %v1563 = vpop.permute.xlu0 %1562
        %1564 = vrot.lane.b32.xlu0 %v777, 36
        %v1565 = vpop.permute.xlu0 %1564
        %1566 = vrot.lane.b32.xlu0 %v778, 36
        %v1567 = vpop.permute.xlu0 %1566
        %1568 = vrot.lane.b32.xlu0 %v779, 36
        %v1569 = vpop.permute.xlu0 %1568
        %1570 = vrot.lane.b32.xlu0 %v780, 36
        %v1571 = vpop.permute.xlu0 %1570
        %1572 = vrot.lane.b32.xlu0 %v781, 36
        %v1573 = vpop.permute.xlu0 %1572
        %1574 = vrot.lane.b32.xlu0 %v782, 36
        %v1575 = vpop.permute.xlu0 %1574
        %1576 = vrot.lane.b32.xlu0 %v783, 36
        %v1577 = vpop.permute.xlu0 %1576
        %1578 = vrot.lane.b32.xlu0 %v784, 36
        %v1579 = vpop.permute.xlu0 %1578
        %1580 = vrot.lane.b32.xlu0 %v785, 36
        %v1581 = vpop.permute.xlu0 %1580
        %1582 = vrot.lane.b32.xlu0 %v786, 36
        %v1583 = vpop.permute.xlu0 %1582
        %1584 = vrot.lane.b32.xlu0 %v787, 36
        %v1585 = vpop.permute.xlu0 %1584
        %1586 = vrot.lane.b32.xlu0 %v788, 36
        %v1587 = vpop.permute.xlu0 %1586
        %1588 = vrot.lane.b32.xlu0 %v789, 36
        %v1589 = vpop.permute.xlu0 %1588
        %1654 = vrot.lane.b32.xlu0 %v790, 42
        %v1655 = vpop.permute.xlu0 %1654
        %1656 = vrot.lane.b32.xlu0 %v791, 42
        %v1657 = vpop.permute.xlu0 %1656
        %1658 = vrot.lane.b32.xlu0 %v792, 42
        %v1659 = vpop.permute.xlu0 %1658
        %1660 = vrot.lane.b32.xlu0 %v793, 42
        %v1661 = vpop.permute.xlu0 %1660
        %1662 = vrot.lane.b32.xlu0 %v794, 42
        %v1663 = vpop.permute.xlu0 %1662
        %1664 = vrot.lane.b32.xlu0 %v795, 42
        %v1665 = vpop.permute.xlu0 %1664
        %1666 = vrot.lane.b32.xlu0 %v796, 42
        %v1667 = vpop.permute.xlu0 %1666
        %1668 = vrot.lane.b32.xlu0 %v797, 42
        %v1669 = vpop.permute.xlu0 %1668
        %1670 = vrot.lane.b32.xlu0 %v798, 42
        %v1671 = vpop.permute.xlu0 %1670
        %1672 = vrot.lane.b32.xlu0 %v799, 42
        %v1673 = vpop.permute.xlu0 %1672
        %1674 = vrot.lane.b32.xlu0 %v800, 42
        %v1675 = vpop.permute.xlu0 %1674
        %1676 = vrot.lane.b32.xlu0 %v801, 42
        %v1677 = vpop.permute.xlu0 %1676
        %1678 = vrot.lane.b32.xlu0 %v802, 42
        %v1679 = vpop.permute.xlu0 %1678
        %1680 = vrot.lane.b32.xlu0 %v803, 42
        %v1681 = vpop.permute.xlu0 %1680
        %1682 = vrot.lane.b32.xlu0 %v804, 42
        %v1683 = vpop.permute.xlu0 %1682
        %1684 = vrot.lane.b32.xlu0 %v805, 42
        %v1685 = vpop.permute.xlu0 %1684
        %1686 = vrot.lane.b32.xlu0 %v806, 42
        %v1687 = vpop.permute.xlu0 %1686
        %1688 = vrot.lane.b32.xlu0 %v807, 42
        %v1689 = vpop.permute.xlu0 %1688
        %1690 = vrot.lane.b32.xlu0 %v808, 42
        %v1691 = vpop.permute.xlu0 %1690
        %1692 = vrot.lane.b32.xlu0 %v809, 42
        %v1693 = vpop.permute.xlu0 %1692
        %1694 = vrot.lane.b32.xlu0 %v810, 42
        %v1695 = vpop.permute.xlu0 %1694
        %1696 = vrot.lane.b32.xlu0 %v811, 42
        %v1697 = vpop.permute.xlu0 %1696
        %1698 = vrot.lane.b32.xlu0 %v812, 42
        %v1699 = vpop.permute.xlu0 %1698
        %1700 = vrot.lane.b32.xlu0 %v813, 42
        %v1701 = vpop.permute.xlu0 %1700
        %1702 = vrot.lane.b32.xlu0 %v814, 42
        %v1703 = vpop.permute.xlu0 %1702
        %1704 = vrot.lane.b32.xlu0 %v815, 42
        %v1705 = vpop.permute.xlu0 %1704
        %1706 = vrot.lane.b32.xlu0 %v816, 42
        %v1707 = vpop.permute.xlu0 %1706
        %1708 = vrot.lane.b32.xlu0 %v817, 42
        %v1709 = vpop.permute.xlu0 %1708
        %1710 = vrot.lane.b32.xlu0 %v818, 42
        %v1711 = vpop.permute.xlu0 %1710
        %1712 = vrot.lane.b32.xlu0 %v819, 42
        %v1713 = vpop.permute.xlu0 %1712
        %1714 = vrot.lane.b32.xlu0 %v820, 42
        %v1715 = vpop.permute.xlu0 %1714
        %1716 = vrot.lane.b32.xlu0 %v821, 42
        %v1717 = vpop.permute.xlu0 %1716
        %1782 = vrot.lane.b32.xlu0 %v822, 48
        %v1783 = vpop.permute.xlu0 %1782
        %1784 = vrot.lane.b32.xlu0 %v823, 48
        %v1785 = vpop.permute.xlu0 %1784
        %1786 = vrot.lane.b32.xlu0 %v824, 48
        %v1787 = vpop.permute.xlu0 %1786
        %1788 = vrot.lane.b32.xlu0 %v825, 48
        %v1789 = vpop.permute.xlu0 %1788
        %1790 = vrot.lane.b32.xlu0 %v826, 48
        %v1791 = vpop.permute.xlu0 %1790
        %1792 = vrot.lane.b32.xlu0 %v827, 48
        %v1793 = vpop.permute.xlu0 %1792
        %1794 = vrot.lane.b32.xlu0 %v828, 48
        %v1795 = vpop.permute.xlu0 %1794
        %1796 = vrot.lane.b32.xlu0 %v829, 48
        %v1797 = vpop.permute.xlu0 %1796
        %1798 = vrot.lane.b32.xlu0 %v830, 48
        %v1799 = vpop.permute.xlu0 %1798
        %1800 = vrot.lane.b32.xlu0 %v831, 48
        %v1801 = vpop.permute.xlu0 %1800
        %1802 = vrot.lane.b32.xlu0 %v832, 48
        %v1803 = vpop.permute.xlu0 %1802
        %1804 = vrot.lane.b32.xlu0 %v833, 48
        %v1805 = vpop.permute.xlu0 %1804
        %1806 = vrot.lane.b32.xlu0 %v834, 48
        %v1807 = vpop.permute.xlu0 %1806
        %1808 = vrot.lane.b32.xlu0 %v835, 48
        %v1809 = vpop.permute.xlu0 %1808
        %1810 = vrot.lane.b32.xlu0 %v836, 48
        %v1811 = vpop.permute.xlu0 %1810
        %1812 = vrot.lane.b32.xlu0 %v837, 48
        %v1813 = vpop.permute.xlu0 %1812
        %1814 = vrot.lane.b32.xlu0 %v838, 48
        %v1815 = vpop.permute.xlu0 %1814
        %1816 = vrot.lane.b32.xlu0 %v839, 48
        %v1817 = vpop.permute.xlu0 %1816
        %1818 = vrot.lane.b32.xlu0 %v840, 48
        %v1819 = vpop.permute.xlu0 %1818
        %1820 = vrot.lane.b32.xlu0 %v841, 48
        %v1821 = vpop.permute.xlu0 %1820
        %1822 = vrot.lane.b32.xlu0 %v842, 48
        %v1823 = vpop.permute.xlu0 %1822
        %1824 = vrot.lane.b32.xlu0 %v843, 48
        %v1825 = vpop.permute.xlu0 %1824
        %1826 = vrot.lane.b32.xlu0 %v844, 48
        %v1827 = vpop.permute.xlu0 %1826
        %1828 = vrot.lane.b32.xlu0 %v845, 48
        %v1829 = vpop.permute.xlu0 %1828
        %1830 = vrot.lane.b32.xlu0 %v846, 48
        %v1831 = vpop.permute.xlu0 %1830
        %1832 = vrot.lane.b32.xlu0 %v847, 48
        %v1833 = vpop.permute.xlu0 %1832
        %1834 = vrot.lane.b32.xlu0 %v848, 48
        %v1835 = vpop.permute.xlu0 %1834
        %1836 = vrot.lane.b32.xlu0 %v849, 48
        %v1837 = vpop.permute.xlu0 %1836
        %1838 = vrot.lane.b32.xlu0 %v850, 48
        %v1839 = vpop.permute.xlu0 %1838
        %1840 = vrot.lane.b32.xlu0 %v851, 48
        %v1841 = vpop.permute.xlu0 %1840
        %1842 = vrot.lane.b32.xlu0 %v852, 48
        %v1843 = vpop.permute.xlu0 %1842
        %1844 = vrot.lane.b32.xlu0 %v853, 48
        %v1845 = vpop.permute.xlu0 %1844
        %v1878 = vsel %vm332, %v565, %v887
        %v1879 = vsel %vm332, %v566, %v889
        %v1880 = vsel %vm332, %v567, %v891
        %v1881 = vsel %vm332, %v568, %v893
        %v1882 = vsel %vm332, %v569, %v895
        %v1883 = vsel %vm332, %v570, %v897
        %v1884 = vsel %vm332, %v571, %v899
        %v1885 = vsel %vm332, %v572, %v901
        %v1886 = vsel %vm332, %v573, %v903
        %v1887 = vsel %vm332, %v574, %v905
        %v1888 = vsel %vm332, %v575, %v907
        %v1889 = vsel %vm332, %v576, %v909
        %v1890 = vsel %vm332, %v577, %v911
        %v1891 = vsel %vm332, %v578, %v913
        %v1892 = vsel %vm332, %v579, %v915
        %v1893 = vsel %vm332, %v580, %v917
        %v1894 = vsel %vm332, %v581, %v919
        %v1895 = vsel %vm332, %v582, %v921
        %v1896 = vsel %vm332, %v583, %v923
        %v1897 = vsel %vm332, %v584, %v925
        %v1898 = vsel %vm332, %v585, %v927
        %v1899 = vsel %vm332, %v586, %v929
        %v1900 = vsel %vm332, %v587, %v931
        %v1901 = vsel %vm332, %v588, %v933
        %v1902 = vsel %vm332, %v589, %v935
        %v1903 = vsel %vm332, %v590, %v937
        %v1904 = vsel %vm332, %v591, %v939
        %v1905 = vsel %vm332, %v592, %v941
        %v1906 = vsel %vm332, %v593, %v943
        %v1907 = vsel %vm332, %v594, %v945
        %v1908 = vsel %vm332, %v595, %v947
        %v1909 = vsel %vm332, %v596, %v949
        %vm1910 = vcmask 97280
        %v1911 = vsel %vm1910, %v1878, %v1015
        %v1912 = vsel %vm1910, %v1879, %v1017
        %v1913 = vsel %vm1910, %v1880, %v1019
        %v1914 = vsel %vm1910, %v1881, %v1021
        %v1915 = vsel %vm1910, %v1882, %v1023
        %v1916 = vsel %vm1910, %v1883, %v1025
        %v1917 = vsel %vm1910, %v1884, %v1027
        %v1918 = vsel %vm1910, %v1885, %v1029
        %v1919 = vsel %vm1910, %v1886, %v1031
        %v1920 = vsel %vm1910, %v1887, %v1033
        %v1921 = vsel %vm1910, %v1888, %v1035
        %v1922 = vsel %vm1910, %v1889, %v1037
        %v1923 = vsel %vm1910, %v1890, %v1039
        %v1924 = vsel %vm1910, %v1891, %v1041
        %v1925 = vsel %vm1910, %v1892, %v1043
        %v1926 = vsel %vm1910, %v1893, %v1045
        %v1927 = vsel %vm1910, %v1894, %v1047
        %v1928 = vsel %vm1910, %v1895, %v1049
        %v1929 = vsel %vm1910, %v1896, %v1051
        %v1930 = vsel %vm1910, %v1897, %v1053
        %v1931 = vsel %vm1910, %v1898, %v1055
        %v1932 = vsel %vm1910, %v1899, %v1057
        %v1933 = vsel %vm1910, %v1900, %v1059
        %v1934 = vsel %vm1910, %v1901, %v1061
        %v1935 = vsel %vm1910, %v1902, %v1063
        %v1936 = vsel %vm1910, %v1903, %v1065
        %v1937 = vsel %vm1910, %v1904, %v1067
        %v1938 = vsel %vm1910, %v1905, %v1069
        %v1939 = vsel %vm1910, %v1906, %v1071
        %v1940 = vsel %vm1910, %v1907, %v1073
        %v1941 = vsel %vm1910, %v1908, %v1075
        %v1942 = vsel %vm1910, %v1909, %v1077
        %vm1943 = vcmask 146432
        %v1944 = vsel %vm1943, %v1911, %v1143
        %v1945 = vsel %vm1943, %v1912, %v1145
        %v1946 = vsel %vm1943, %v1913, %v1147
        %v1947 = vsel %vm1943, %v1914, %v1149
        %v1948 = vsel %vm1943, %v1915, %v1151
        %v1949 = vsel %vm1943, %v1916, %v1153
        %v1950 = vsel %vm1943, %v1917, %v1155
        %v1951 = vsel %vm1943, %v1918, %v1157
        %v1952 = vsel %vm1943, %v1919, %v1159
        %v1953 = vsel %vm1943, %v1920, %v1161
        %v1954 = vsel %vm1943, %v1921, %v1163
        %v1955 = vsel %vm1943, %v1922, %v1165
        %v1956 = vsel %vm1943, %v1923, %v1167
        %v1957 = vsel %vm1943, %v1924, %v1169
        %v1958 = vsel %vm1943, %v1925, %v1171
        %v1959 = vsel %vm1943, %v1926, %v1173
        %v1960 = vsel %vm1943, %v1927, %v1175
        %v1961 = vsel %vm1943, %v1928, %v1177
        %v1962 = vsel %vm1943, %v1929, %v1179
        %v1963 = vsel %vm1943, %v1930, %v1181
        %v1964 = vsel %vm1943, %v1931, %v1183
        %v1965 = vsel %vm1943, %v1932, %v1185
        %v1966 = vsel %vm1943, %v1933, %v1187
        %v1967 = vsel %vm1943, %v1934, %v1189
        %v1968 = vsel %vm1943, %v1935, %v1191
        %v1969 = vsel %vm1943, %v1936, %v1193
        %v1970 = vsel %vm1943, %v1937, %v1195
        %v1971 = vsel %vm1943, %v1938, %v1197
        %v1972 = vsel %vm1943, %v1939, %v1199
        %v1973 = vsel %vm1943, %v1940, %v1201
        %v1974 = vsel %vm1943, %v1941, %v1203
        %v1975 = vsel %vm1943, %v1942, %v1205
        %vm1976 = vcmask 195584
        %v1977 = vsel %vm1976, %v1944, %v1271
        %v1978 = vsel %vm1976, %v1945, %v1273
        %v1979 = vsel %vm1976, %v1946, %v1275
        %v1980 = vsel %vm1976, %v1947, %v1277
        %v1981 = vsel %vm1976, %v1948, %v1279
        %v1982 = vsel %vm1976, %v1949, %v1281
        %v1983 = vsel %vm1976, %v1950, %v1283
        %v1984 = vsel %vm1976, %v1951, %v1285
        %v1985 = vsel %vm1976, %v1952, %v1287
        %v1986 = vsel %vm1976, %v1953, %v1289
        %v1987 = vsel %vm1976, %v1954, %v1291
        %v1988 = vsel %vm1976, %v1955, %v1293
        %v1989 = vsel %vm1976, %v1956, %v1295
        %v1990 = vsel %vm1976, %v1957, %v1297
        %v1991 = vsel %vm1976, %v1958, %v1299
        %v1992 = vsel %vm1976, %v1959, %v1301
        %v1993 = vsel %vm1976, %v1960, %v1303
        %v1994 = vsel %vm1976, %v1961, %v1305
        %v1995 = vsel %vm1976, %v1962, %v1307
        %v1996 = vsel %vm1976, %v1963, %v1309
        %v1997 = vsel %vm1976, %v1964, %v1311
        %v1998 = vsel %vm1976, %v1965, %v1313
        %v1999 = vsel %vm1976, %v1966, %v1315
        %v2000 = vsel %vm1976, %v1967, %v1317
        %v2001 = vsel %vm1976, %v1968, %v1319
        %v2002 = vsel %vm1976, %v1969, %v1321
        %v2003 = vsel %vm1976, %v1970, %v1323
        %v2004 = vsel %vm1976, %v1971, %v1325
        %v2005 = vsel %vm1976, %v1972, %v1327
        %v2006 = vsel %vm1976, %v1973, %v1329
        %v2007 = vsel %vm1976, %v1974, %v1331
        %v2008 = vsel %vm1976, %v1975, %v1333
        %vm2009 = vcmask 244736
        %v2010 = vsel %vm2009, %v1977, %v1399
        %v2011 = vsel %vm2009, %v1978, %v1401
        %v2012 = vsel %vm2009, %v1979, %v1403
        %v2013 = vsel %vm2009, %v1980, %v1405
        %v2014 = vsel %vm2009, %v1981, %v1407
        %v2015 = vsel %vm2009, %v1982, %v1409
        %v2016 = vsel %vm2009, %v1983, %v1411
        %v2017 = vsel %vm2009, %v1984, %v1413
        %v2018 = vsel %vm2009, %v1985, %v1415
        %v2019 = vsel %vm2009, %v1986, %v1417
        %v2020 = vsel %vm2009, %v1987, %v1419
        %v2021 = vsel %vm2009, %v1988, %v1421
        %v2022 = vsel %vm2009, %v1989, %v1423
        %v2023 = vsel %vm2009, %v1990, %v1425
        %v2024 = vsel %vm2009, %v1991, %v1427
        %v2025 = vsel %vm2009, %v1992, %v1429
        %v2026 = vsel %vm2009, %v1993, %v1431
        %v2027 = vsel %vm2009, %v1994, %v1433
        %v2028 = vsel %vm2009, %v1995, %v1435
        %v2029 = vsel %vm2009, %v1996, %v1437
        %v2030 = vsel %vm2009, %v1997, %v1439
        %v2031 = vsel %vm2009, %v1998, %v1441
        %v2032 = vsel %vm2009, %v1999, %v1443
        %v2033 = vsel %vm2009, %v2000, %v1445
        %v2034 = vsel %vm2009, %v2001, %v1447
        %v2035 = vsel %vm2009, %v2002, %v1449
        %v2036 = vsel %vm2009, %v2003, %v1451
        %v2037 = vsel %vm2009, %v2004, %v1453
        %v2038 = vsel %vm2009, %v2005, %v1455
        %v2039 = vsel %vm2009, %v2006, %v1457
        %v2040 = vsel %vm2009, %v2007, %v1459
        %v2041 = vsel %vm2009, %v2008, %v1461
        %vm2042 = vcmask 293888
        %v2043 = vsel %vm2042, %v2010, %v1527
        %v2044 = vsel %vm2042, %v2011, %v1529
        %v2045 = vsel %vm2042, %v2012, %v1531
        %v2046 = vsel %vm2042, %v2013, %v1533
        %v2047 = vsel %vm2042, %v2014, %v1535
        %v2048 = vsel %vm2042, %v2015, %v1537
        %v2049 = vsel %vm2042, %v2016, %v1539
        %v2050 = vsel %vm2042, %v2017, %v1541
        %v2051 = vsel %vm2042, %v2018, %v1543
        %v2052 = vsel %vm2042, %v2019, %v1545
        %v2053 = vsel %vm2042, %v2020, %v1547
        %v2054 = vsel %vm2042, %v2021, %v1549
        %v2055 = vsel %vm2042, %v2022, %v1551
        %v2056 = vsel %vm2042, %v2023, %v1553
        %v2057 = vsel %vm2042, %v2024, %v1555
        %v2058 = vsel %vm2042, %v2025, %v1557
        %v2059 = vsel %vm2042, %v2026, %v1559
        %v2060 = vsel %vm2042, %v2027, %v1561
        %v2061 = vsel %vm2042, %v2028, %v1563
        %v2062 = vsel %vm2042, %v2029, %v1565
        %v2063 = vsel %vm2042, %v2030, %v1567
        %v2064 = vsel %vm2042, %v2031, %v1569
        %v2065 = vsel %vm2042, %v2032, %v1571
        %v2066 = vsel %vm2042, %v2033, %v1573
        %v2067 = vsel %vm2042, %v2034, %v1575
        %v2068 = vsel %vm2042, %v2035, %v1577
        %v2069 = vsel %vm2042, %v2036, %v1579
        %v2070 = vsel %vm2042, %v2037, %v1581
        %v2071 = vsel %vm2042, %v2038, %v1583
        %v2072 = vsel %vm2042, %v2039, %v1585
        %v2073 = vsel %vm2042, %v2040, %v1587
        %v2074 = vsel %vm2042, %v2041, %v1589
        %vm2075 = vcmask 343040
        %v2076 = vsel %vm2075, %v2043, %v1655
        %v2077 = vsel %vm2075, %v2044, %v1657
        %v2078 = vsel %vm2075, %v2045, %v1659
        %v2079 = vsel %vm2075, %v2046, %v1661
        %v2080 = vsel %vm2075, %v2047, %v1663
        %v2081 = vsel %vm2075, %v2048, %v1665
        %v2082 = vsel %vm2075, %v2049, %v1667
        %v2083 = vsel %vm2075, %v2050, %v1669
        %v2084 = vsel %vm2075, %v2051, %v1671
        %v2085 = vsel %vm2075, %v2052, %v1673
        %v2086 = vsel %vm2075, %v2053, %v1675
        %v2087 = vsel %vm2075, %v2054, %v1677
        %v2088 = vsel %vm2075, %v2055, %v1679
        %v2089 = vsel %vm2075, %v2056, %v1681
        %v2090 = vsel %vm2075, %v2057, %v1683
        %v2091 = vsel %vm2075, %v2058, %v1685
        %v2092 = vsel %vm2075, %v2059, %v1687
        %v2093 = vsel %vm2075, %v2060, %v1689
        %v2094 = vsel %vm2075, %v2061, %v1691
        %v2095 = vsel %vm2075, %v2062, %v1693
        %v2096 = vsel %vm2075, %v2063, %v1695
        %v2097 = vsel %vm2075, %v2064, %v1697
        %v2098 = vsel %vm2075, %v2065, %v1699
        %v2099 = vsel %vm2075, %v2066, %v1701
        %v2100 = vsel %vm2075, %v2067, %v1703
        %v2101 = vsel %vm2075, %v2068, %v1705
        %v2102 = vsel %vm2075, %v2069, %v1707
        %v2103 = vsel %vm2075, %v2070, %v1709
        %v2104 = vsel %vm2075, %v2071, %v1711
        %v2105 = vsel %vm2075, %v2072, %v1713
        %v2106 = vsel %vm2075, %v2073, %v1715
        %v2107 = vsel %vm2075, %v2074, %v1717
        %vm2108 = vcmask 392192
        %v2109 = vsel %vm2108, %v2076, %v1783
        %v2110 = vsel %vm2108, %v2077, %v1785
        %v2111 = vsel %vm2108, %v2078, %v1787
        %v2112 = vsel %vm2108, %v2079, %v1789
        %v2113 = vsel %vm2108, %v2080, %v1791
        %v2114 = vsel %vm2108, %v2081, %v1793
        %v2115 = vsel %vm2108, %v2082, %v1795
        %v2116 = vsel %vm2108, %v2083, %v1797
        %v2117 = vsel %vm2108, %v2084, %v1799
        %v2118 = vsel %vm2108, %v2085, %v1801
        %v2119 = vsel %vm2108, %v2086, %v1803
        %v2120 = vsel %vm2108, %v2087, %v1805
        %v2121 = vsel %vm2108, %v2088, %v1807
        %v2122 = vsel %vm2108, %v2089, %v1809
        %v2123 = vsel %vm2108, %v2090, %v1811
        %v2124 = vsel %vm2108, %v2091, %v1813
        %v2125 = vsel %vm2108, %v2092, %v1815
        %v2126 = vsel %vm2108, %v2093, %v1817
        %v2127 = vsel %vm2108, %v2094, %v1819
        %v2128 = vsel %vm2108, %v2095, %v1821
        %v2129 = vsel %vm2108, %v2096, %v1823
        %v2130 = vsel %vm2108, %v2097, %v1825
        %v2131 = vsel %vm2108, %v2098, %v1827
        %v2132 = vsel %vm2108, %v2099, %v1829
        %v2133 = vsel %vm2108, %v2100, %v1831
        %v2134 = vsel %vm2108, %v2101, %v1833
        %v2135 = vsel %vm2108, %v2102, %v1835
        %v2136 = vsel %vm2108, %v2103, %v1837
        %v2137 = vsel %vm2108, %v2104, %v1839
        %v2138 = vsel %vm2108, %v2105, %v1841
        %v2139 = vsel %vm2108, %v2106, %v1843
        %v2140 = vsel %vm2108, %v2107, %v1845
        %v2141 = vpack.c.bf16 %v2110, %v2109
        %v2142 = vpack.c.bf16 %v2112, %v2111
        %v2143 = vpack.c.bf16 %v2114, %v2113
        %v2144 = vpack.c.bf16 %v2116, %v2115
        %v2145 = vpack.c.bf16 %v2118, %v2117
        %v2146 = vpack.c.bf16 %v2120, %v2119
        %v2147 = vpack.c.bf16 %v2122, %v2121
        %v2148 = vpack.c.bf16 %v2124, %v2123
        %v2149 = vpack.c.bf16 %v2126, %v2125
        %v2150 = vpack.c.bf16 %v2128, %v2127
        %v2151 = vpack.c.bf16 %v2130, %v2129
        %v2152 = vpack.c.bf16 %v2132, %v2131
        %v2153 = vpack.c.bf16 %v2134, %v2133
        %v2154 = vpack.c.bf16 %v2136, %v2135
        %v2155 = vpack.c.bf16 %v2138, %v2137
        %v2156 = vpack.c.bf16 %v2140, %v2139
        %v2157 = vld [vmem:[%s1] sm:$0xff]
        %v2158 = vld [vmem:[%s1 + $0x8] sm:$0xff]
        %v2159 = vld [vmem:[%s1 + $0x10] sm:$0xff]
        %v2160 = vld [vmem:[%s1 + $0x18] sm:$0xff]
        %v2161 = vld [vmem:[%s1 + $0x20] sm:$0xff]
        %v2162 = vld [vmem:[%s1 + $0x28] sm:$0xff]
        %v2163 = vld [vmem:[%s1 + $0x30] sm:$0x3f]
        %v2164 = vpack.c.bf16 %v2158, %v2157
        %v2165 = vpack.c.bf16 %v2160, %v2159
        %v2166 = vpack.c.bf16 %v2162, %v2161
        %v2167 = vpack.c.bf16 %v2163, %v2163
        %v2168 = vld [vmem:[%s2] sm:$0x1]
        %v2170 = vlaneseq
        %v2171 = vshrl.u32 %v2170, 7
        %v2172 = vsub.s32 0, %v2171
        %v2173 = vrot.slane %v2168, %v2172
        %vm2175 = vcmask 441344
        %v2177 = vsel %vm2175, %v2141, 0
        %v2180 = vsel %vm2175, %v2142, 0
        %v2183 = vsel %vm2175, %v2143, 0
        %v2186 = vsel %vm2175, %v2144, 0
        %v2189 = vsel %vm2175, %v2145, 0
        %v2192 = vsel %vm2175, %v2146, 0
        %v2195 = vsel %vm2175, %v2147, 0
        %v2198 = vsel %vm2175, %v2148, 0
        %v2201 = vsel %vm2175, %v2149, 0
        %v2204 = vsel %vm2175, %v2150, 0
        %v2207 = vsel %vm2175, %v2151, 0
        %v2210 = vsel %vm2175, %v2152, 0
        %v2213 = vsel %vm2175, %v2153, 0
        %v2216 = vsel %vm2175, %v2154, 0
        %v2219 = vsel %vm2175, %v2155, 0
        %v2222 = vsel %vm2175, %v2156, 0
        %vm2224 = vcmask 1042432
        %v2226 = vsel %vm2224, %v2167, 0
        %2228 = vmatprep.subr.bf16.mxu0 0
        %2229 = vmatpush1.bf16.msra.mxu0 0
        %2230 = vmatprep.subr.bf16.mxu0 0
        %2231 = vmatpush1.bf16.msra.mxu0 0
        %2232 = vmatprep.subr.bf16.mxu0 0
        %2233 = vmatpush1.bf16.msra.mxu0 0
        %2234 = vmatprep.subr.bf16.mxu0 0
        %2235 = vmatpush1.bf16.msra.mxu0 0
        %2236 = vmatprep.subr.bf16.mxu0 0
        %2237 = vmatpush1.bf16.msra.mxu0 %v2226
        %2238 = vmatprep.subr.bf16.mxu0 0
        %2239 = vmatpush1.bf16.msra.mxu0 %v2166
        %2240 = vmatprep.subr.bf16.mxu0 0
        %2241 = vmatpush1.bf16.msra.mxu0 %v2165
        %2242 = vmatprep.subr.bf16.mxu0 0
        %2243 = vmatpush1.bf16.msra.mxu0 %v2164
        %2244 = vmatprep.subr.bf16.mxu0 0
        %2245 = vmatpush2.bf16.msra.mxu0 0
        %2246 = vmatprep.subr.bf16.mxu0 0
        %2247 = vmatpush2.bf16.msra.mxu0 0
        %2248 = vmatprep.subr.bf16.mxu0 0
        %2249 = vmatpush2.bf16.msra.mxu0 0
        %2250 = vmatprep.subr.bf16.mxu0 0
        %2251 = vmatpush2.bf16.msra.mxu0 0
        %2252 = vmatprep.subr.bf16.mxu0 0
        %2253 = vmatpush2.bf16.msra.mxu0 0
        %2254 = vmatprep.subr.bf16.mxu0 0
        %2255 = vmatpush2.bf16.msra.mxu0 0
        %2256 = vmatprep.subr.bf16.mxu0 0
        %2257 = vmatpush2.bf16.msra.mxu0 0
        %2258 = vmatprep.subr.bf16.mxu0 0
        %2259 = vmatpush2.bf16.msra.mxu0 0
        %2260 = vmatprep.mubr.bf16.mxu0 0
        %2261 = vmatmul.mubr.bf16.gmra.mxu0 %v2177
        %v2262 = vpop.f32.mrf.mxu0
        %v2263 = vadd.f32 %v2173, %v2262
        %v2264 = vpop.f32.mrf.mxu0
        %v2265 = vpop.f32.mrf.mxu0
        %v2266 = vadd.f32 %v2173, %v2265
        %v2267 = vpop.f32.mrf.mxu0
        %2268 = vmatprep.mubr.bf16.mxu0 0
        %2269 = vmatmul.mubr.bf16.gmra.mxu0 %v2180
        %v2270 = vpop.f32.mrf.mxu0
        %v2271 = vadd.f32 %v2173, %v2270
        %v2272 = vpop.f32.mrf.mxu0
        %v2273 = vpop.f32.mrf.mxu0
        %v2274 = vadd.f32 %v2173, %v2273
        %v2275 = vpop.f32.mrf.mxu0
        %2276 = vmatprep.mubr.bf16.mxu0 0
        %2277 = vmatmul.mubr.bf16.gmra.mxu0 %v2183
        %v2278 = vpop.f32.mrf.mxu0
        %v2279 = vadd.f32 %v2173, %v2278
        %v2280 = vpop.f32.mrf.mxu0
        %v2281 = vpop.f32.mrf.mxu0
        %v2282 = vadd.f32 %v2173, %v2281
        %v2283 = vpop.f32.mrf.mxu0
        %2284 = vmatprep.mubr.bf16.mxu0 0
        %2285 = vmatmul.mubr.bf16.gmra.mxu0 %v2186
        %v2286 = vpop.f32.mrf.mxu0
        %v2287 = vadd.f32 %v2173, %v2286
        %v2288 = vpop.f32.mrf.mxu0
        %v2289 = vpop.f32.mrf.mxu0
        %v2290 = vadd.f32 %v2173, %v2289
        %v2291 = vpop.f32.mrf.mxu0
        %2292 = vmatprep.mubr.bf16.mxu0 0
        %2293 = vmatmul.mubr.bf16.gmra.mxu0 %v2189
        %v2294 = vpop.f32.mrf.mxu0
        %v2295 = vadd.f32 %v2173, %v2294
        %v2296 = vpop.f32.mrf.mxu0
        %v2297 = vpop.f32.mrf.mxu0
        %v2298 = vadd.f32 %v2173, %v2297
        %v2299 = vpop.f32.mrf.mxu0
        %2300 = vmatprep.mubr.bf16.mxu0 0
        %2301 = vmatmul.mubr.bf16.gmra.mxu0 %v2192
        %v2302 = vpop.f32.mrf.mxu0
        %v2303 = vadd.f32 %v2173, %v2302
        %v2304 = vpop.f32.mrf.mxu0
        %v2305 = vpop.f32.mrf.mxu0
        %v2306 = vadd.f32 %v2173, %v2305
        %v2307 = vpop.f32.mrf.mxu0
        %2308 = vmatprep.mubr.bf16.mxu0 0
        %2309 = vmatmul.mubr.bf16.gmra.mxu0 %v2195
        %v2310 = vpop.f32.mrf.mxu0
        %v2311 = vadd.f32 %v2173, %v2310
        %v2312 = vpop.f32.mrf.mxu0
        %v2313 = vpop.f32.mrf.mxu0
        %v2314 = vadd.f32 %v2173, %v2313
        %v2315 = vpop.f32.mrf.mxu0
        %2316 = vmatprep.mubr.bf16.mxu0 0
        %2317 = vmatmul.mubr.bf16.gmra.mxu0 %v2198
        %v2318 = vpop.f32.mrf.mxu0
        %v2319 = vadd.f32 %v2173, %v2318
        %v2320 = vpop.f32.mrf.mxu0
        %v2321 = vpop.f32.mrf.mxu0
        %v2322 = vadd.f32 %v2173, %v2321
        %v2323 = vpop.f32.mrf.mxu0
        %2324 = vmatprep.mubr.bf16.mxu0 0
        %2325 = vmatmul.mubr.bf16.gmra.mxu0 %v2201
        %v2326 = vpop.f32.mrf.mxu0
        %v2327 = vadd.f32 %v2173, %v2326
        %v2328 = vpop.f32.mrf.mxu0
        %v2329 = vpop.f32.mrf.mxu0
        %v2330 = vadd.f32 %v2173, %v2329
        %v2331 = vpop.f32.mrf.mxu0
        %2332 = vmatprep.mubr.bf16.mxu0 0
        %2333 = vmatmul.mubr.bf16.gmra.mxu0 %v2204
        %v2334 = vpop.f32.mrf.mxu0
        %v2335 = vadd.f32 %v2173, %v2334
        %v2336 = vpop.f32.mrf.mxu0
        %v2337 = vpop.f32.mrf.mxu0
        %v2338 = vadd.f32 %v2173, %v2337
        %v2339 = vpop.f32.mrf.mxu0
        %2340 = vmatprep.mubr.bf16.mxu0 0
        %2341 = vmatmul.mubr.bf16.gmra.mxu0 %v2207
        %v2342 = vpop.f32.mrf.mxu0
        %v2343 = vadd.f32 %v2173, %v2342
        %v2344 = vpop.f32.mrf.mxu0
        %v2345 = vpop.f32.mrf.mxu0
        %v2346 = vadd.f32 %v2173, %v2345
        %v2347 = vpop.f32.mrf.mxu0
        %2348 = vmatprep.mubr.bf16.mxu0 0
        %2349 = vmatmul.mubr.bf16.gmra.mxu0 %v2210
        %v2350 = vpop.f32.mrf.mxu0
        %v2351 = vadd.f32 %v2173, %v2350
        %v2352 = vpop.f32.mrf.mxu0
        %v2353 = vpop.f32.mrf.mxu0
        %v2354 = vadd.f32 %v2173, %v2353
        %v2355 = vpop.f32.mrf.mxu0
        %2356 = vmatprep.mubr.bf16.mxu0 0
        %2357 = vmatmul.mubr.bf16.gmra.mxu0 %v2213
        %v2358 = vpop.f32.mrf.mxu0
        %v2359 = vadd.f32 %v2173, %v2358
        %v2360 = vpop.f32.mrf.mxu0
        %v2361 = vpop.f32.mrf.mxu0
        %v2362 = vadd.f32 %v2173, %v2361
        %v2363 = vpop.f32.mrf.mxu0
        %2364 = vmatprep.mubr.bf16.mxu0 0
        %2365 = vmatmul.mubr.bf16.gmra.mxu0 %v2216
        %v2366 = vpop.f32.mrf.mxu0
        %v2367 = vadd.f32 %v2173, %v2366
        %v2368 = vpop.f32.mrf.mxu0
        %v2369 = vpop.f32.mrf.mxu0
        %v2370 = vadd.f32 %v2173, %v2369
        %v2371 = vpop.f32.mrf.mxu0
        %2372 = vmatprep.mubr.bf16.mxu0 0
        %2373 = vmatmul.mubr.bf16.gmra.mxu0 %v2219
        %v2374 = vpop.f32.mrf.mxu0
        %v2375 = vadd.f32 %v2173, %v2374
        %v2376 = vpop.f32.mrf.mxu0
        %v2377 = vpop.f32.mrf.mxu0
        %v2378 = vadd.f32 %v2173, %v2377
        %v2379 = vpop.f32.mrf.mxu0
        %2380 = vmatprep.mubr.bf16.mxu0 0
        %2381 = vmatmul.mubr.bf16.gmra.mxu0 %v2222
        %v2382 = vpop.f32.mrf.mxu0
        %v2383 = vadd.f32 %v2173, %v2382
        %v2384 = vpop.f32.mrf.mxu0
        %v2385 = vpop.f32.mrf.mxu0
        %v2386 = vadd.f32 %v2173, %v2385
        %v2387 = vpop.f32.mrf.mxu0
        %2388 = vdwg.mxu0
        %vm2389 = vcmp.ge.f32.partialorder %v2263, 0.0
        %vm2390 = vcmp.ge.f32.partialorder %v2266, 0.0
        %vm2391 = vcmp.ge.f32.partialorder %v2271, 0.0
        %vm2392 = vcmp.ge.f32.partialorder %v2274, 0.0
        %vm2393 = vcmp.ge.f32.partialorder %v2279, 0.0
        %vm2394 = vcmp.ge.f32.partialorder %v2282, 0.0
        %vm2395 = vcmp.ge.f32.partialorder %v2287, 0.0
        %vm2396 = vcmp.ge.f32.partialorder %v2290, 0.0
        %vm2397 = vcmp.ge.f32.partialorder %v2295, 0.0
        %vm2398 = vcmp.ge.f32.partialorder %v2298, 0.0
        %vm2399 = vcmp.ge.f32.partialorder %v2303, 0.0
        %vm2400 = vcmp.ge.f32.partialorder %v2306, 0.0
        %vm2401 = vcmp.ge.f32.partialorder %v2311, 0.0
        %vm2402 = vcmp.ge.f32.partialorder %v2314, 0.0
        %vm2403 = vcmp.ge.f32.partialorder %v2319, 0.0
        %vm2404 = vcmp.ge.f32.partialorder %v2322, 0.0
        %vm2405 = vcmp.ge.f32.partialorder %v2327, 0.0
        %vm2406 = vcmp.ge.f32.partialorder %v2330, 0.0
        %vm2407 = vcmp.ge.f32.partialorder %v2335, 0.0
        %vm2408 = vcmp.ge.f32.partialorder %v2338, 0.0
        %vm2409 = vcmp.ge.f32.partialorder %v2343, 0.0
        %vm2410 = vcmp.ge.f32.partialorder %v2346, 0.0
        %vm2411 = vcmp.ge.f32.partialorder %v2351, 0.0
        %vm2412 = vcmp.ge.f32.partialorder %v2354, 0.0
        %vm2413 = vcmp.ge.f32.partialorder %v2359, 0.0
        %vm2414 = vcmp.ge.f32.partialorder %v2362, 0.0
        %vm2415 = vcmp.ge.f32.partialorder %v2367, 0.0
        %vm2416 = vcmp.ge.f32.partialorder %v2370, 0.0
        %vm2417 = vcmp.ge.f32.partialorder %v2375, 0.0
        %vm2418 = vcmp.ge.f32.partialorder %v2378, 0.0
        %vm2419 = vcmp.ge.f32.partialorder %v2383, 0.0
        %vm2420 = vcmp.ge.f32.partialorder %v2386, 0.0
        %v2421 = vmul.f32 %v2263, 0.2
        %v2422 = vmul.f32 %v2266, 0.2
        %v2423 = vmul.f32 %v2271, 0.2
        %v2424 = vmul.f32 %v2274, 0.2
        %v2425 = vmul.f32 %v2279, 0.2
        %v2426 = vmul.f32 %v2282, 0.2
        %v2427 = vmul.f32 %v2287, 0.2
        %v2428 = vmul.f32 %v2290, 0.2
        %v2429 = vmul.f32 %v2295, 0.2
        %v2430 = vmul.f32 %v2298, 0.2
        %v2431 = vmul.f32 %v2303, 0.2
        %v2432 = vmul.f32 %v2306, 0.2
        %v2433 = vmul.f32 %v2311, 0.2
        %v2434 = vmul.f32 %v2314, 0.2
        %v2435 = vmul.f32 %v2319, 0.2
        %v2436 = vmul.f32 %v2322, 0.2
        %v2437 = vmul.f32 %v2327, 0.2
        %v2438 = vmul.f32 %v2330, 0.2
        %v2439 = vmul.f32 %v2335, 0.2
        %v2440 = vmul.f32 %v2338, 0.2
        %v2441 = vmul.f32 %v2343, 0.2
        %v2442 = vmul.f32 %v2346, 0.2
        %v2443 = vmul.f32 %v2351, 0.2
        %v2444 = vmul.f32 %v2354, 0.2
        %v2445 = vmul.f32 %v2359, 0.2
        %v2446 = vmul.f32 %v2362, 0.2
        %v2447 = vmul.f32 %v2367, 0.2
        %v2448 = vmul.f32 %v2370, 0.2
        %v2449 = vmul.f32 %v2375, 0.2
        %v2450 = vmul.f32 %v2378, 0.2
        %v2451 = vmul.f32 %v2383, 0.2
        %v2452 = vmul.f32 %v2386, 0.2
        %v2453 = vsel %vm2389, %v2263, %v2421
        %v2454 = vsel %vm2390, %v2266, %v2422
        %v2455 = vsel %vm2391, %v2271, %v2423
        %v2456 = vsel %vm2392, %v2274, %v2424
        %v2457 = vsel %vm2393, %v2279, %v2425
        %v2458 = vsel %vm2394, %v2282, %v2426
        %v2459 = vsel %vm2395, %v2287, %v2427
        %v2460 = vsel %vm2396, %v2290, %v2428
        %v2461 = vsel %vm2397, %v2295, %v2429
        %v2462 = vsel %vm2398, %v2298, %v2430
        %v2463 = vsel %vm2399, %v2303, %v2431
        %v2464 = vsel %vm2400, %v2306, %v2432
        %v2465 = vsel %vm2401, %v2311, %v2433
        %v2466 = vsel %vm2402, %v2314, %v2434
        %v2467 = vsel %vm2403, %v2319, %v2435
        %v2468 = vsel %vm2404, %v2322, %v2436
        %v2469 = vsel %vm2405, %v2327, %v2437
        %v2470 = vsel %vm2406, %v2330, %v2438
        %v2471 = vsel %vm2407, %v2335, %v2439
        %v2472 = vsel %vm2408, %v2338, %v2440
        %v2473 = vsel %vm2409, %v2343, %v2441
        %v2474 = vsel %vm2410, %v2346, %v2442
        %v2475 = vsel %vm2411, %v2351, %v2443
        %v2476 = vsel %vm2412, %v2354, %v2444
        %v2477 = vsel %vm2413, %v2359, %v2445
        %v2478 = vsel %vm2414, %v2362, %v2446
        %v2479 = vsel %vm2415, %v2367, %v2447
        %v2480 = vsel %vm2416, %v2370, %v2448
        %v2481 = vsel %vm2417, %v2375, %v2449
        %v2482 = vsel %vm2418, %v2378, %v2450
        %v2483 = vsel %vm2419, %v2383, %v2451
        %v2484 = vsel %vm2420, %v2386, %v2452
        %s2485 = scalar_lea.vmem [#allocation3], 24
        %2486 = vst.msk [vmem:[%s2485 + $0x1] sm:$0xff] %vm388, %v2453
        %2487 = vst.msk [vmem:[%s2485 + $0x9] sm:$0xff] %vm388, %v2454
        %2488 = vst.msk [vmem:[%s2485 + $0x19] sm:$0xff] %vm388, %v2455
        %2489 = vst.msk [vmem:[%s2485 + $0x21] sm:$0xff] %vm388, %v2456
        %2490 = vst.msk [vmem:[%s2485 + $0x31] sm:$0xff] %vm388, %v2457
        %2491 = vst.msk [vmem:[%s2485 + $0x39] sm:$0xff] %vm388, %v2458
        %2492 = vst.msk [vmem:[%s2485 + $0x49] sm:$0xff] %vm388, %v2459
        %2493 = vst.msk [vmem:[%s2485 + $0x51] sm:$0xff] %vm388, %v2460
        %2494 = vst.msk [vmem:[%s2485 + $0x61] sm:$0xff] %vm388, %v2461
        %2495 = vst.msk [vmem:[%s2485 + $0x69] sm:$0xff] %vm388, %v2462
        %2496 = vst.msk [vmem:[%s2485 + $0x79] sm:$0xff] %vm388, %v2463
        %2497 = vst.msk [vmem:[%s2485 + $0x81] sm:$0xff] %vm388, %v2464
        %2498 = vst.msk [vmem:[%s2485 + $0x91] sm:$0xff] %vm388, %v2465
        %2499 = vst.msk [vmem:[%s2485 + $0x99] sm:$0xff] %vm388, %v2466
        %2500 = vst.msk [vmem:[%s2485 + $0xa9] sm:$0xff] %vm388, %v2467
        %2501 = vst.msk [vmem:[%s2485 + $0xb1] sm:$0xff] %vm388, %v2468
        %2502 = vst.msk [vmem:[%s2485 + $0xc1] sm:$0xff] %vm388, %v2469
        %2503 = vst.msk [vmem:[%s2485 + $0xc9] sm:$0xff] %vm388, %v2470
        %2504 = vst.msk [vmem:[%s2485 + $0xd9] sm:$0xff] %vm388, %v2471
        %2505 = vst.msk [vmem:[%s2485 + $0xe1] sm:$0xff] %vm388, %v2472
        %2506 = vst.msk [vmem:[%s2485 + $0xf1] sm:$0xff] %vm388, %v2473
        %2507 = vst.msk [vmem:[%s2485 + $0xf9] sm:$0xff] %vm388, %v2474
        %2508 = vst.msk [vmem:[%s2485 + $0x109] sm:$0xff] %vm388, %v2475
        %2509 = vst.msk [vmem:[%s2485 + $0x111] sm:$0xff] %vm388, %v2476
        %2510 = vst.msk [vmem:[%s2485 + $0x121] sm:$0xff] %vm388, %v2477
        %2511 = vst.msk [vmem:[%s2485 + $0x129] sm:$0xff] %vm388, %v2478
        %2512 = vst.msk [vmem:[%s2485 + $0x139] sm:$0xff] %vm388, %v2479
        %2513 = vst.msk [vmem:[%s2485 + $0x141] sm:$0xff] %vm388, %v2480
        %2514 = vst.msk [vmem:[%s2485 + $0x151] sm:$0xff] %vm388, %v2481
        %2515 = vst.msk [vmem:[%s2485 + $0x159] sm:$0xff] %vm388, %v2482
        %2516 = vst.msk [vmem:[%s2485 + $0x169] sm:$0xff] %vm388, %v2483
        %2517 = vst.msk [vmem:[%s2485 + $0x171] sm:$0xff] %vm388, %v2484
        %v2518 = vld [vmem:[#allocation3] sm:$0xff]
        %v2519 = vld [vmem:[#allocation3 + $0x8] sm:$0xff]
        %v2520 = vld [vmem:[#allocation3 + $0x18] sm:$0xff]
        %v2521 = vld [vmem:[#allocation3 + $0x20] sm:$0xff]
        %v2522 = vld [vmem:[#allocation3 + $0x30] sm:$0xff]
        %v2523 = vld [vmem:[#allocation3 + $0x38] sm:$0xff]
        %v2524 = vld [vmem:[#allocation3 + $0x48] sm:$0xff]
        %v2525 = vld [vmem:[#allocation3 + $0x50] sm:$0xff]
        %v2526 = vld [vmem:[#allocation3 + $0x60] sm:$0xff]
        %v2527 = vld [vmem:[#allocation3 + $0x68] sm:$0xff]
        %v2528 = vld [vmem:[#allocation3 + $0x78] sm:$0xff]
        %v2529 = vld [vmem:[#allocation3 + $0x80] sm:$0xff]
        %v2530 = vld [vmem:[#allocation3 + $0x90] sm:$0xff]
        %v2531 = vld [vmem:[#allocation3 + $0x98] sm:$0xff]
        %v2532 = vld [vmem:[#allocation3 + $0xa8] sm:$0xff]
        %v2533 = vld [vmem:[#allocation3 + $0xb0] sm:$0xff]
        %v2534 = vld [vmem:[#allocation3 + $0xc0] sm:$0xff]
        %v2535 = vld [vmem:[#allocation3 + $0xc8] sm:$0xff]
        %v2536 = vld [vmem:[#allocation3 + $0xd8] sm:$0xff]
        %v2537 = vld [vmem:[#allocation3 + $0xe0] sm:$0xff]
        %v2538 = vld [vmem:[#allocation3 + $0xf0] sm:$0xff]
        %v2539 = vld [vmem:[#allocation3 + $0xf8] sm:$0xff]
        %v2540 = vld [vmem:[#allocation3 + $0x108] sm:$0xff]
        %v2541 = vld [vmem:[#allocation3 + $0x110] sm:$0xff]
        %v2542 = vld [vmem:[#allocation3 + $0x120] sm:$0xff]
        %v2543 = vld [vmem:[#allocation3 + $0x128] sm:$0xff]
        %v2544 = vld [vmem:[#allocation3 + $0x138] sm:$0xff]
        %v2545 = vld [vmem:[#allocation3 + $0x140] sm:$0xff]
        %v2546 = vld [vmem:[#allocation3 + $0x150] sm:$0xff]
        %v2547 = vld [vmem:[#allocation3 + $0x158] sm:$0xff]
        %v2548 = vld [vmem:[#allocation3 + $0x168] sm:$0xff]
        %v2549 = vld [vmem:[#allocation3 + $0x170] sm:$0xff]
        %v2550 = vld [vmem:[#allocation3 + $0x1] sm:$0xff]
        %v2551 = vld [vmem:[#allocation3 + $0x9] sm:$0xff]
        %v2552 = vld [vmem:[#allocation3 + $0x19] sm:$0xff]
        %v2553 = vld [vmem:[#allocation3 + $0x21] sm:$0xff]
        %v2554 = vld [vmem:[#allocation3 + $0x31] sm:$0xff]
        %v2555 = vld [vmem:[#allocation3 + $0x39] sm:$0xff]
        %v2556 = vld [vmem:[#allocation3 + $0x49] sm:$0xff]
        %v2557 = vld [vmem:[#allocation3 + $0x51] sm:$0xff]
        %v2558 = vld [vmem:[#allocation3 + $0x61] sm:$0xff]
        %v2559 = vld [vmem:[#allocation3 + $0x69] sm:$0xff]
        %v2560 = vld [vmem:[#allocation3 + $0x79] sm:$0xff]
        %v2561 = vld [vmem:[#allocation3 + $0x81] sm:$0xff]
        %v2562 = vld [vmem:[#allocation3 + $0x91] sm:$0xff]
        %v2563 = vld [vmem:[#allocation3 + $0x99] sm:$0xff]
        %v2564 = vld [vmem:[#allocation3 + $0xa9] sm:$0xff]
        %v2565 = vld [vmem:[#allocation3 + $0xb1] sm:$0xff]
        %v2566 = vld [vmem:[#allocation3 + $0xc1] sm:$0xff]
        %v2567 = vld [vmem:[#allocation3 + $0xc9] sm:$0xff]
        %v2568 = vld [vmem:[#allocation3 + $0xd9] sm:$0xff]
        %v2569 = vld [vmem:[#allocation3 + $0xe1] sm:$0xff]
        %v2570 = vld [vmem:[#allocation3 + $0xf1] sm:$0xff]
        %v2571 = vld [vmem:[#allocation3 + $0xf9] sm:$0xff]
        %v2572 = vld [vmem:[#allocation3 + $0x109] sm:$0xff]
        %v2573 = vld [vmem:[#allocation3 + $0x111] sm:$0xff]
        %v2574 = vld [vmem:[#allocation3 + $0x121] sm:$0xff]
        %v2575 = vld [vmem:[#allocation3 + $0x129] sm:$0xff]
        %v2576 = vld [vmem:[#allocation3 + $0x139] sm:$0xff]
        %v2577 = vld [vmem:[#allocation3 + $0x141] sm:$0xff]
        %v2578 = vld [vmem:[#allocation3 + $0x151] sm:$0xff]
        %v2579 = vld [vmem:[#allocation3 + $0x159] sm:$0xff]
        %v2580 = vld [vmem:[#allocation3 + $0x169] sm:$0xff]
        %v2581 = vld [vmem:[#allocation3 + $0x171] sm:$0xff]
        %v2582 = vld [vmem:[#allocation3 + $0x2] sm:$0xff]
        %v2583 = vld [vmem:[#allocation3 + $0xa] sm:$0xff]
        %v2584 = vld [vmem:[#allocation3 + $0x1a] sm:$0xff]
        %v2585 = vld [vmem:[#allocation3 + $0x22] sm:$0xff]
        %v2586 = vld [vmem:[#allocation3 + $0x32] sm:$0xff]
        %v2587 = vld [vmem:[#allocation3 + $0x3a] sm:$0xff]
        %v2588 = vld [vmem:[#allocation3 + $0x4a] sm:$0xff]
        %v2589 = vld [vmem:[#allocation3 + $0x52] sm:$0xff]
        %v2590 = vld [vmem:[#allocation3 + $0x62] sm:$0xff]
        %v2591 = vld [vmem:[#allocation3 + $0x6a] sm:$0xff]
        %v2592 = vld [vmem:[#allocation3 + $0x7a] sm:$0xff]
        %v2593 = vld [vmem:[#allocation3 + $0x82] sm:$0xff]
        %v2594 = vld [vmem:[#allocation3 + $0x92] sm:$0xff]
        %v2595 = vld [vmem:[#allocation3 + $0x9a] sm:$0xff]
        %v2596 = vld [vmem:[#allocation3 + $0xaa] sm:$0xff]
        %v2597 = vld [vmem:[#allocation3 + $0xb2] sm:$0xff]
        %v2598 = vld [vmem:[#allocation3 + $0xc2] sm:$0xff]
        %v2599 = vld [vmem:[#allocation3 + $0xca] sm:$0xff]
        %v2600 = vld [vmem:[#allocation3 + $0xda] sm:$0xff]
        %v2601 = vld [vmem:[#allocation3 + $0xe2] sm:$0xff]
        %v2602 = vld [vmem:[#allocation3 + $0xf2] sm:$0xff]
        %v2603 = vld [vmem:[#allocation3 + $0xfa] sm:$0xff]
        %v2604 = vld [vmem:[#allocation3 + $0x10a] sm:$0xff]
        %v2605 = vld [vmem:[#allocation3 + $0x112] sm:$0xff]
        %v2606 = vld [vmem:[#allocation3 + $0x122] sm:$0xff]
        %v2607 = vld [vmem:[#allocation3 + $0x12a] sm:$0xff]
        %v2608 = vld [vmem:[#allocation3 + $0x13a] sm:$0xff]
        %v2609 = vld [vmem:[#allocation3 + $0x142] sm:$0xff]
        %v2610 = vld [vmem:[#allocation3 + $0x152] sm:$0xff]
        %v2611 = vld [vmem:[#allocation3 + $0x15a] sm:$0xff]
        %v2612 = vld [vmem:[#allocation3 + $0x16a] sm:$0xff]
        %v2613 = vld [vmem:[#allocation3 + $0x172] sm:$0xff]
        %v2614 = vld [vmem:[%s2485] sm:$0xff]
        %v2615 = vld [vmem:[%s2485 + $0x8] sm:$0xff]
        %v2616 = vld [vmem:[%s2485 + $0x18] sm:$0xff]
        %v2617 = vld [vmem:[%s2485 + $0x20] sm:$0xff]
        %v2618 = vld [vmem:[%s2485 + $0x30] sm:$0xff]
        %v2619 = vld [vmem:[%s2485 + $0x38] sm:$0xff]
        %v2620 = vld [vmem:[%s2485 + $0x48] sm:$0xff]
        %v2621 = vld [vmem:[%s2485 + $0x50] sm:$0xff]
        %v2622 = vld [vmem:[%s2485 + $0x60] sm:$0xff]
        %v2623 = vld [vmem:[%s2485 + $0x68] sm:$0xff]
        %v2624 = vld [vmem:[%s2485 + $0x78] sm:$0xff]
        %v2625 = vld [vmem:[%s2485 + $0x80] sm:$0xff]
        %v2626 = vld [vmem:[%s2485 + $0x90] sm:$0xff]
        %v2627 = vld [vmem:[%s2485 + $0x98] sm:$0xff]
        %v2628 = vld [vmem:[%s2485 + $0xa8] sm:$0xff]
        %v2629 = vld [vmem:[%s2485 + $0xb0] sm:$0xff]
        %v2630 = vld [vmem:[%s2485 + $0xc0] sm:$0xff]
        %v2631 = vld [vmem:[%s2485 + $0xc8] sm:$0xff]
        %v2632 = vld [vmem:[%s2485 + $0xd8] sm:$0xff]
        %v2633 = vld [vmem:[%s2485 + $0xe0] sm:$0xff]
        %v2634 = vld [vmem:[%s2485 + $0xf0] sm:$0xff]
        %v2635 = vld [vmem:[%s2485 + $0xf8] sm:$0xff]
        %v2636 = vld [vmem:[%s2485 + $0x108] sm:$0xff]
        %v2637 = vld [vmem:[%s2485 + $0x110] sm:$0xff]
        %v2638 = vld [vmem:[%s2485 + $0x120] sm:$0xff]
        %v2639 = vld [vmem:[%s2485 + $0x128] sm:$0xff]
        %v2640 = vld [vmem:[%s2485 + $0x138] sm:$0xff]
        %v2641 = vld [vmem:[%s2485 + $0x140] sm:$0xff]
        %v2642 = vld [vmem:[%s2485 + $0x150] sm:$0xff]
        %v2643 = vld [vmem:[%s2485 + $0x158] sm:$0xff]
        %v2644 = vld [vmem:[%s2485 + $0x168] sm:$0xff]
        %v2645 = vld [vmem:[%s2485 + $0x170] sm:$0xff]
        %v2646 = vld [vmem:[%s2485 + $0x1] sm:$0xff]
        %v2647 = vld [vmem:[%s2485 + $0x9] sm:$0xff]
        %v2648 = vld [vmem:[%s2485 + $0x19] sm:$0xff]
        %v2649 = vld [vmem:[%s2485 + $0x21] sm:$0xff]
        %v2650 = vld [vmem:[%s2485 + $0x31] sm:$0xff]
        %v2651 = vld [vmem:[%s2485 + $0x39] sm:$0xff]
        %v2652 = vld [vmem:[%s2485 + $0x49] sm:$0xff]
        %v2653 = vld [vmem:[%s2485 + $0x51] sm:$0xff]
        %v2654 = vld [vmem:[%s2485 + $0x61] sm:$0xff]
        %v2655 = vld [vmem:[%s2485 + $0x69] sm:$0xff]
        %v2656 = vld [vmem:[%s2485 + $0x79] sm:$0xff]
        %v2657 = vld [vmem:[%s2485 + $0x81] sm:$0xff]
        %v2658 = vld [vmem:[%s2485 + $0x91] sm:$0xff]
        %v2659 = vld [vmem:[%s2485 + $0x99] sm:$0xff]
        %v2660 = vld [vmem:[%s2485 + $0xa9] sm:$0xff]
        %v2661 = vld [vmem:[%s2485 + $0xb1] sm:$0xff]
        %v2662 = vld [vmem:[%s2485 + $0xc1] sm:$0xff]
        %v2663 = vld [vmem:[%s2485 + $0xc9] sm:$0xff]
        %v2664 = vld [vmem:[%s2485 + $0xd9] sm:$0xff]
        %v2665 = vld [vmem:[%s2485 + $0xe1] sm:$0xff]
        %v2666 = vld [vmem:[%s2485 + $0xf1] sm:$0xff]
        %v2667 = vld [vmem:[%s2485 + $0xf9] sm:$0xff]
        %v2668 = vld [vmem:[%s2485 + $0x109] sm:$0xff]
        %v2669 = vld [vmem:[%s2485 + $0x111] sm:$0xff]
        %v2670 = vld [vmem:[%s2485 + $0x121] sm:$0xff]
        %v2671 = vld [vmem:[%s2485 + $0x129] sm:$0xff]
        %v2672 = vld [vmem:[%s2485 + $0x139] sm:$0xff]
        %v2673 = vld [vmem:[%s2485 + $0x141] sm:$0xff]
        %v2674 = vld [vmem:[%s2485 + $0x151] sm:$0xff]
        %v2675 = vld [vmem:[%s2485 + $0x159] sm:$0xff]
        %v2676 = vld [vmem:[%s2485 + $0x169] sm:$0xff]
        %v2677 = vld [vmem:[%s2485 + $0x171] sm:$0xff]
        %v2678 = vld [vmem:[%s2485 + $0x2] sm:$0xff]
        %v2679 = vld [vmem:[%s2485 + $0xa] sm:$0xff]
        %v2680 = vld [vmem:[%s2485 + $0x1a] sm:$0xff]
        %v2681 = vld [vmem:[%s2485 + $0x22] sm:$0xff]
        %v2682 = vld [vmem:[%s2485 + $0x32] sm:$0xff]
        %v2683 = vld [vmem:[%s2485 + $0x3a] sm:$0xff]
        %v2684 = vld [vmem:[%s2485 + $0x4a] sm:$0xff]
        %v2685 = vld [vmem:[%s2485 + $0x52] sm:$0xff]
        %v2686 = vld [vmem:[%s2485 + $0x62] sm:$0xff]
        %v2687 = vld [vmem:[%s2485 + $0x6a] sm:$0xff]
        %v2688 = vld [vmem:[%s2485 + $0x7a] sm:$0xff]
        %v2689 = vld [vmem:[%s2485 + $0x82] sm:$0xff]
        %v2690 = vld [vmem:[%s2485 + $0x92] sm:$0xff]
        %v2691 = vld [vmem:[%s2485 + $0x9a] sm:$0xff]
        %v2692 = vld [vmem:[%s2485 + $0xaa] sm:$0xff]
        %v2693 = vld [vmem:[%s2485 + $0xb2] sm:$0xff]
        %v2694 = vld [vmem:[%s2485 + $0xc2] sm:$0xff]
        %v2695 = vld [vmem:[%s2485 + $0xca] sm:$0xff]
        %v2696 = vld [vmem:[%s2485 + $0xda] sm:$0xff]
        %v2697 = vld [vmem:[%s2485 + $0xe2] sm:$0xff]
        %v2698 = vld [vmem:[%s2485 + $0xf2] sm:$0xff]
        %v2699 = vld [vmem:[%s2485 + $0xfa] sm:$0xff]
        %v2700 = vld [vmem:[%s2485 + $0x10a] sm:$0xff]
        %v2701 = vld [vmem:[%s2485 + $0x112] sm:$0xff]
        %v2702 = vld [vmem:[%s2485 + $0x122] sm:$0xff]
        %v2703 = vld [vmem:[%s2485 + $0x12a] sm:$0xff]
        %v2704 = vld [vmem:[%s2485 + $0x13a] sm:$0xff]
        %v2705 = vld [vmem:[%s2485 + $0x142] sm:$0xff]
        %v2706 = vld [vmem:[%s2485 + $0x152] sm:$0xff]
        %v2707 = vld [vmem:[%s2485 + $0x15a] sm:$0xff]
        %v2708 = vld [vmem:[%s2485 + $0x16a] sm:$0xff]
        %v2709 = vld [vmem:[%s2485 + $0x172] sm:$0xff]
        %s2710 = scalar_lea.vmem [#allocation3], 48
        %v2711 = vld [vmem:[%s2710] sm:$0xff]
        %v2712 = vld [vmem:[%s2710 + $0x8] sm:$0xff]
        %v2713 = vld [vmem:[%s2710 + $0x18] sm:$0xff]
        %v2714 = vld [vmem:[%s2710 + $0x20] sm:$0xff]
        %v2715 = vld [vmem:[%s2710 + $0x30] sm:$0xff]
        %v2716 = vld [vmem:[%s2710 + $0x38] sm:$0xff]
        %v2717 = vld [vmem:[%s2710 + $0x48] sm:$0xff]
        %v2718 = vld [vmem:[%s2710 + $0x50] sm:$0xff]
        %v2719 = vld [vmem:[%s2710 + $0x60] sm:$0xff]
        %v2720 = vld [vmem:[%s2710 + $0x68] sm:$0xff]
        %v2721 = vld [vmem:[%s2710 + $0x78] sm:$0xff]
        %v2722 = vld [vmem:[%s2710 + $0x80] sm:$0xff]
        %v2723 = vld [vmem:[%s2710 + $0x90] sm:$0xff]
        %v2724 = vld [vmem:[%s2710 + $0x98] sm:$0xff]
        %v2725 = vld [vmem:[%s2710 + $0xa8] sm:$0xff]
        %v2726 = vld [vmem:[%s2710 + $0xb0] sm:$0xff]
        %v2727 = vld [vmem:[%s2710 + $0xc0] sm:$0xff]
        %v2728 = vld [vmem:[%s2710 + $0xc8] sm:$0xff]
        %v2729 = vld [vmem:[%s2710 + $0xd8] sm:$0xff]
        %v2730 = vld [vmem:[%s2710 + $0xe0] sm:$0xff]
        %v2731 = vld [vmem:[%s2710 + $0xf0] sm:$0xff]
        %v2732 = vld [vmem:[%s2710 + $0xf8] sm:$0xff]
        %v2733 = vld [vmem:[%s2710 + $0x108] sm:$0xff]
        %v2734 = vld [vmem:[%s2710 + $0x110] sm:$0xff]
        %v2735 = vld [vmem:[%s2710 + $0x120] sm:$0xff]
        %v2736 = vld [vmem:[%s2710 + $0x128] sm:$0xff]
        %v2737 = vld [vmem:[%s2710 + $0x138] sm:$0xff]
        %v2738 = vld [vmem:[%s2710 + $0x140] sm:$0xff]
        %v2739 = vld [vmem:[%s2710 + $0x150] sm:$0xff]
        %v2740 = vld [vmem:[%s2710 + $0x158] sm:$0xff]
        %v2741 = vld [vmem:[%s2710 + $0x168] sm:$0xff]
        %v2742 = vld [vmem:[%s2710 + $0x170] sm:$0xff]
        %v2743 = vld [vmem:[%s2710 + $0x1] sm:$0xff]
        %v2744 = vld [vmem:[%s2710 + $0x9] sm:$0xff]
        %v2745 = vld [vmem:[%s2710 + $0x19] sm:$0xff]
        %v2746 = vld [vmem:[%s2710 + $0x21] sm:$0xff]
        %v2747 = vld [vmem:[%s2710 + $0x31] sm:$0xff]
        %v2748 = vld [vmem:[%s2710 + $0x39] sm:$0xff]
        %v2749 = vld [vmem:[%s2710 + $0x49] sm:$0xff]
        %v2750 = vld [vmem:[%s2710 + $0x51] sm:$0xff]
        %v2751 = vld [vmem:[%s2710 + $0x61] sm:$0xff]
        %v2752 = vld [vmem:[%s2710 + $0x69] sm:$0xff]
        %v2753 = vld [vmem:[%s2710 + $0x79] sm:$0xff]
        %v2754 = vld [vmem:[%s2710 + $0x81] sm:$0xff]
        %v2755 = vld [vmem:[%s2710 + $0x91] sm:$0xff]
        %v2756 = vld [vmem:[%s2710 + $0x99] sm:$0xff]
        %v2757 = vld [vmem:[%s2710 + $0xa9] sm:$0xff]
        %v2758 = vld [vmem:[%s2710 + $0xb1] sm:$0xff]
        %v2759 = vld [vmem:[%s2710 + $0xc1] sm:$0xff]
        %v2760 = vld [vmem:[%s2710 + $0xc9] sm:$0xff]
        %v2761 = vld [vmem:[%s2710 + $0xd9] sm:$0xff]
        %v2762 = vld [vmem:[%s2710 + $0xe1] sm:$0xff]
        %v2763 = vld [vmem:[%s2710 + $0xf1] sm:$0xff]
        %v2764 = vld [vmem:[%s2710 + $0xf9] sm:$0xff]
        %v2765 = vld [vmem:[%s2710 + $0x109] sm:$0xff]
        %v2766 = vld [vmem:[%s2710 + $0x111] sm:$0xff]
        %v2767 = vld [vmem:[%s2710 + $0x121] sm:$0xff]
        %v2768 = vld [vmem:[%s2710 + $0x129] sm:$0xff]
        %v2769 = vld [vmem:[%s2710 + $0x139] sm:$0xff]
        %v2770 = vld [vmem:[%s2710 + $0x141] sm:$0xff]
        %v2771 = vld [vmem:[%s2710 + $0x151] sm:$0xff]
        %v2772 = vld [vmem:[%s2710 + $0x159] sm:$0xff]
        %v2773 = vld [vmem:[%s2710 + $0x169] sm:$0xff]
        %v2774 = vld [vmem:[%s2710 + $0x171] sm:$0xff]
        %v2775 = vld [vmem:[%s2710 + $0x2] sm:$0xff]
        %v2776 = vld [vmem:[%s2710 + $0xa] sm:$0xff]
        %v2777 = vld [vmem:[%s2710 + $0x1a] sm:$0xff]
        %v2778 = vld [vmem:[%s2710 + $0x22] sm:$0xff]
        %v2779 = vld [vmem:[%s2710 + $0x32] sm:$0xff]
        %v2780 = vld [vmem:[%s2710 + $0x3a] sm:$0xff]
        %v2781 = vld [vmem:[%s2710 + $0x4a] sm:$0xff]
        %v2782 = vld [vmem:[%s2710 + $0x52] sm:$0xff]
        %v2783 = vld [vmem:[%s2710 + $0x62] sm:$0xff]
        %v2784 = vld [vmem:[%s2710 + $0x6a] sm:$0xff]
        %v2785 = vld [vmem:[%s2710 + $0x7a] sm:$0xff]
        %v2786 = vld [vmem:[%s2710 + $0x82] sm:$0xff]
        %v2787 = vld [vmem:[%s2710 + $0x92] sm:$0xff]
        %v2788 = vld [vmem:[%s2710 + $0x9a] sm:$0xff]
        %v2789 = vld [vmem:[%s2710 + $0xaa] sm:$0xff]
        %v2790 = vld [vmem:[%s2710 + $0xb2] sm:$0xff]
        %v2791 = vld [vmem:[%s2710 + $0xc2] sm:$0xff]
        %v2792 = vld [vmem:[%s2710 + $0xca] sm:$0xff]
        %v2793 = vld [vmem:[%s2710 + $0xda] sm:$0xff]
        %v2794 = vld [vmem:[%s2710 + $0xe2] sm:$0xff]
        %v2795 = vld [vmem:[%s2710 + $0xf2] sm:$0xff]
        %v2796 = vld [vmem:[%s2710 + $0xfa] sm:$0xff]
        %v2797 = vld [vmem:[%s2710 + $0x10a] sm:$0xff]
        %v2798 = vld [vmem:[%s2710 + $0x112] sm:$0xff]
        %v2799 = vld [vmem:[%s2710 + $0x122] sm:$0xff]
        %v2800 = vld [vmem:[%s2710 + $0x12a] sm:$0xff]
        %v2801 = vld [vmem:[%s2710 + $0x13a] sm:$0xff]
        %v2802 = vld [vmem:[%s2710 + $0x142] sm:$0xff]
        %v2803 = vld [vmem:[%s2710 + $0x152] sm:$0xff]
        %v2804 = vld [vmem:[%s2710 + $0x15a] sm:$0xff]
        %v2805 = vld [vmem:[%s2710 + $0x16a] sm:$0xff]
        %v2806 = vld [vmem:[%s2710 + $0x172] sm:$0xff]
        %2839 = vrot.lane.b32.xlu0 %v2550, 8
        %v2840 = vpop.permute.xlu0 %2839
        %2841 = vrot.lane.b32.xlu0 %v2551, 8
        %v2842 = vpop.permute.xlu0 %2841
        %2843 = vrot.lane.b32.xlu0 %v2552, 8
        %v2844 = vpop.permute.xlu0 %2843
        %2845 = vrot.lane.b32.xlu0 %v2553, 8
        %v2846 = vpop.permute.xlu0 %2845
        %2847 = vrot.lane.b32.xlu0 %v2554, 8
        %v2848 = vpop.permute.xlu0 %2847
        %2849 = vrot.lane.b32.xlu0 %v2555, 8
        %v2850 = vpop.permute.xlu0 %2849
        %2851 = vrot.lane.b32.xlu0 %v2556, 8
        %v2852 = vpop.permute.xlu0 %2851
        %2853 = vrot.lane.b32.xlu0 %v2557, 8
        %v2854 = vpop.permute.xlu0 %2853
        %2855 = vrot.lane.b32.xlu0 %v2558, 8
        %v2856 = vpop.permute.xlu0 %2855
        %2857 = vrot.lane.b32.xlu0 %v2559, 8
        %v2858 = vpop.permute.xlu0 %2857
        %2859 = vrot.lane.b32.xlu0 %v2560, 8
        %v2860 = vpop.permute.xlu0 %2859
        %2861 = vrot.lane.b32.xlu0 %v2561, 8
        %v2862 = vpop.permute.xlu0 %2861
        %2863 = vrot.lane.b32.xlu0 %v2562, 8
        %v2864 = vpop.permute.xlu0 %2863
        %2865 = vrot.lane.b32.xlu0 %v2563, 8
        %v2866 = vpop.permute.xlu0 %2865
        %2867 = vrot.lane.b32.xlu0 %v2564, 8
        %v2868 = vpop.permute.xlu0 %2867
        %2869 = vrot.lane.b32.xlu0 %v2565, 8
        %v2870 = vpop.permute.xlu0 %2869
        %2871 = vrot.lane.b32.xlu0 %v2566, 8
        %v2872 = vpop.permute.xlu0 %2871
        %2873 = vrot.lane.b32.xlu0 %v2567, 8
        %v2874 = vpop.permute.xlu0 %2873
        %2875 = vrot.lane.b32.xlu0 %v2568, 8
        %v2876 = vpop.permute.xlu0 %2875
        %2877 = vrot.lane.b32.xlu0 %v2569, 8
        %v2878 = vpop.permute.xlu0 %2877
        %2879 = vrot.lane.b32.xlu0 %v2570, 8
        %v2880 = vpop.permute.xlu0 %2879
        %2881 = vrot.lane.b32.xlu0 %v2571, 8
        %v2882 = vpop.permute.xlu0 %2881
        %2883 = vrot.lane.b32.xlu0 %v2572, 8
        %v2884 = vpop.permute.xlu0 %2883
        %2885 = vrot.lane.b32.xlu0 %v2573, 8
        %v2886 = vpop.permute.xlu0 %2885
        %2887 = vrot.lane.b32.xlu0 %v2574, 8
        %v2888 = vpop.permute.xlu0 %2887
        %2889 = vrot.lane.b32.xlu0 %v2575, 8
        %v2890 = vpop.permute.xlu0 %2889
        %2891 = vrot.lane.b32.xlu0 %v2576, 8
        %v2892 = vpop.permute.xlu0 %2891
        %2893 = vrot.lane.b32.xlu0 %v2577, 8
        %v2894 = vpop.permute.xlu0 %2893
        %2895 = vrot.lane.b32.xlu0 %v2578, 8
        %v2896 = vpop.permute.xlu0 %2895
        %2897 = vrot.lane.b32.xlu0 %v2579, 8
        %v2898 = vpop.permute.xlu0 %2897
        %2899 = vrot.lane.b32.xlu0 %v2580, 8
        %v2900 = vpop.permute.xlu0 %2899
        %2901 = vrot.lane.b32.xlu0 %v2581, 8
        %v2902 = vpop.permute.xlu0 %2901
        %2967 = vrot.lane.b32.xlu0 %v2582, 16
        %v2968 = vpop.permute.xlu0 %2967
        %2969 = vrot.lane.b32.xlu0 %v2583, 16
        %v2970 = vpop.permute.xlu0 %2969
        %2971 = vrot.lane.b32.xlu0 %v2584, 16
        %v2972 = vpop.permute.xlu0 %2971
        %2973 = vrot.lane.b32.xlu0 %v2585, 16
        %v2974 = vpop.permute.xlu0 %2973
        %2975 = vrot.lane.b32.xlu0 %v2586, 16
        %v2976 = vpop.permute.xlu0 %2975
        %2977 = vrot.lane.b32.xlu0 %v2587, 16
        %v2978 = vpop.permute.xlu0 %2977
        %2979 = vrot.lane.b32.xlu0 %v2588, 16
        %v2980 = vpop.permute.xlu0 %2979
        %2981 = vrot.lane.b32.xlu0 %v2589, 16
        %v2982 = vpop.permute.xlu0 %2981
        %2983 = vrot.lane.b32.xlu0 %v2590, 16
        %v2984 = vpop.permute.xlu0 %2983
        %2985 = vrot.lane.b32.xlu0 %v2591, 16
        %v2986 = vpop.permute.xlu0 %2985
        %2987 = vrot.lane.b32.xlu0 %v2592, 16
        %v2988 = vpop.permute.xlu0 %2987
        %2989 = vrot.lane.b32.xlu0 %v2593, 16
        %v2990 = vpop.permute.xlu0 %2989
        %2991 = vrot.lane.b32.xlu0 %v2594, 16
        %v2992 = vpop.permute.xlu0 %2991
        %2993 = vrot.lane.b32.xlu0 %v2595, 16
        %v2994 = vpop.permute.xlu0 %2993
        %2995 = vrot.lane.b32.xlu0 %v2596, 16
        %v2996 = vpop.permute.xlu0 %2995
        %2997 = vrot.lane.b32.xlu0 %v2597, 16
        %v2998 = vpop.permute.xlu0 %2997
        %2999 = vrot.lane.b32.xlu0 %v2598, 16
        %v3000 = vpop.permute.xlu0 %2999
        %3001 = vrot.lane.b32.xlu0 %v2599, 16
        %v3002 = vpop.permute.xlu0 %3001
        %3003 = vrot.lane.b32.xlu0 %v2600, 16
        %v3004 = vpop.permute.xlu0 %3003
        %3005 = vrot.lane.b32.xlu0 %v2601, 16
        %v3006 = vpop.permute.xlu0 %3005
        %3007 = vrot.lane.b32.xlu0 %v2602, 16
        %v3008 = vpop.permute.xlu0 %3007
        %3009 = vrot.lane.b32.xlu0 %v2603, 16
        %v3010 = vpop.permute.xlu0 %3009
        %3011 = vrot.lane.b32.xlu0 %v2604, 16
        %v3012 = vpop.permute.xlu0 %3011
        %3013 = vrot.lane.b32.xlu0 %v2605, 16
        %v3014 = vpop.permute.xlu0 %3013
        %3015 = vrot.lane.b32.xlu0 %v2606, 16
        %v3016 = vpop.permute.xlu0 %3015
        %3017 = vrot.lane.b32.xlu0 %v2607, 16
        %v3018 = vpop.permute.xlu0 %3017
        %3019 = vrot.lane.b32.xlu0 %v2608, 16
        %v3020 = vpop.permute.xlu0 %3019
        %3021 = vrot.lane.b32.xlu0 %v2609, 16
        %v3022 = vpop.permute.xlu0 %3021
        %3023 = vrot.lane.b32.xlu0 %v2610, 16
        %v3024 = vpop.permute.xlu0 %3023
        %3025 = vrot.lane.b32.xlu0 %v2611, 16
        %v3026 = vpop.permute.xlu0 %3025
        %3027 = vrot.lane.b32.xlu0 %v2612, 16
        %v3028 = vpop.permute.xlu0 %3027
        %3029 = vrot.lane.b32.xlu0 %v2613, 16
        %v3030 = vpop.permute.xlu0 %3029
        %3095 = vrot.lane.b32.xlu0 %v2614, 24
        %v3096 = vpop.permute.xlu0 %3095
        %3097 = vrot.lane.b32.xlu0 %v2615, 24
        %v3098 = vpop.permute.xlu0 %3097
        %3099 = vrot.lane.b32.xlu0 %v2616, 24
        %v3100 = vpop.permute.xlu0 %3099
        %3101 = vrot.lane.b32.xlu0 %v2617, 24
        %v3102 = vpop.permute.xlu0 %3101
        %3103 = vrot.lane.b32.xlu0 %v2618, 24
        %v3104 = vpop.permute.xlu0 %3103
        %3105 = vrot.lane.b32.xlu0 %v2619, 24
        %v3106 = vpop.permute.xlu0 %3105
        %3107 = vrot.lane.b32.xlu0 %v2620, 24
        %v3108 = vpop.permute.xlu0 %3107
        %3109 = vrot.lane.b32.xlu0 %v2621, 24
        %v3110 = vpop.permute.xlu0 %3109
        %3111 = vrot.lane.b32.xlu0 %v2622, 24
        %v3112 = vpop.permute.xlu0 %3111
        %3113 = vrot.lane.b32.xlu0 %v2623, 24
        %v3114 = vpop.permute.xlu0 %3113
        %3115 = vrot.lane.b32.xlu0 %v2624, 24
        %v3116 = vpop.permute.xlu0 %3115
        %3117 = vrot.lane.b32.xlu0 %v2625, 24
        %v3118 = vpop.permute.xlu0 %3117
        %3119 = vrot.lane.b32.xlu0 %v2626, 24
        %v3120 = vpop.permute.xlu0 %3119
        %3121 = vrot.lane.b32.xlu0 %v2627, 24
        %v3122 = vpop.permute.xlu0 %3121
        %3123 = vrot.lane.b32.xlu0 %v2628, 24
        %v3124 = vpop.permute.xlu0 %3123
        %3125 = vrot.lane.b32.xlu0 %v2629, 24
        %v3126 = vpop.permute.xlu0 %3125
        %3127 = vrot.lane.b32.xlu0 %v2630, 24
        %v3128 = vpop.permute.xlu0 %3127
        %3129 = vrot.lane.b32.xlu0 %v2631, 24
        %v3130 = vpop.permute.xlu0 %3129
        %3131 = vrot.lane.b32.xlu0 %v2632, 24
        %v3132 = vpop.permute.xlu0 %3131
        %3133 = vrot.lane.b32.xlu0 %v2633, 24
        %v3134 = vpop.permute.xlu0 %3133
        %3135 = vrot.lane.b32.xlu0 %v2634, 24
        %v3136 = vpop.permute.xlu0 %3135
        %3137 = vrot.lane.b32.xlu0 %v2635, 24
        %v3138 = vpop.permute.xlu0 %3137
        %3139 = vrot.lane.b32.xlu0 %v2636, 24
        %v3140 = vpop.permute.xlu0 %3139
        %3141 = vrot.lane.b32.xlu0 %v2637, 24
        %v3142 = vpop.permute.xlu0 %3141
        %3143 = vrot.lane.b32.xlu0 %v2638, 24
        %v3144 = vpop.permute.xlu0 %3143
        %3145 = vrot.lane.b32.xlu0 %v2639, 24
        %v3146 = vpop.permute.xlu0 %3145
        %3147 = vrot.lane.b32.xlu0 %v2640, 24
        %v3148 = vpop.permute.xlu0 %3147
        %3149 = vrot.lane.b32.xlu0 %v2641, 24
        %v3150 = vpop.permute.xlu0 %3149
        %3151 = vrot.lane.b32.xlu0 %v2642, 24
        %v3152 = vpop.permute.xlu0 %3151
        %3153 = vrot.lane.b32.xlu0 %v2643, 24
        %v3154 = vpop.permute.xlu0 %3153
        %3155 = vrot.lane.b32.xlu0 %v2644, 24
        %v3156 = vpop.permute.xlu0 %3155
        %3157 = vrot.lane.b32.xlu0 %v2645, 24
        %v3158 = vpop.permute.xlu0 %3157
        %3223 = vrot.lane.b32.xlu0 %v2646, 32
        %v3224 = vpop.permute.xlu0 %3223
        %3225 = vrot.lane.b32.xlu0 %v2647, 32
        %v3226 = vpop.permute.xlu0 %3225
        %3227 = vrot.lane.b32.xlu0 %v2648, 32
        %v3228 = vpop.permute.xlu0 %3227
        %3229 = vrot.lane.b32.xlu0 %v2649, 32
        %v3230 = vpop.permute.xlu0 %3229
        %3231 = vrot.lane.b32.xlu0 %v2650, 32
        %v3232 = vpop.permute.xlu0 %3231
        %3233 = vrot.lane.b32.xlu0 %v2651, 32
        %v3234 = vpop.permute.xlu0 %3233
        %3235 = vrot.lane.b32.xlu0 %v2652, 32
        %v3236 = vpop.permute.xlu0 %3235
        %3237 = vrot.lane.b32.xlu0 %v2653, 32
        %v3238 = vpop.permute.xlu0 %3237
        %3239 = vrot.lane.b32.xlu0 %v2654, 32
        %v3240 = vpop.permute.xlu0 %3239
        %3241 = vrot.lane.b32.xlu0 %v2655, 32
        %v3242 = vpop.permute.xlu0 %3241
        %3243 = vrot.lane.b32.xlu0 %v2656, 32
        %v3244 = vpop.permute.xlu0 %3243
        %3245 = vrot.lane.b32.xlu0 %v2657, 32
        %v3246 = vpop.permute.xlu0 %3245
        %3247 = vrot.lane.b32.xlu0 %v2658, 32
        %v3248 = vpop.permute.xlu0 %3247
        %3249 = vrot.lane.b32.xlu0 %v2659, 32
        %v3250 = vpop.permute.xlu0 %3249
        %3251 = vrot.lane.b32.xlu0 %v2660, 32
        %v3252 = vpop.permute.xlu0 %3251
        %3253 = vrot.lane.b32.xlu0 %v2661, 32
        %v3254 = vpop.permute.xlu0 %3253
        %3255 = vrot.lane.b32.xlu0 %v2662, 32
        %v3256 = vpop.permute.xlu0 %3255
        %3257 = vrot.lane.b32.xlu0 %v2663, 32
        %v3258 = vpop.permute.xlu0 %3257
        %3259 = vrot.lane.b32.xlu0 %v2664, 32
        %v3260 = vpop.permute.xlu0 %3259
        %3261 = vrot.lane.b32.xlu0 %v2665, 32
        %v3262 = vpop.permute.xlu0 %3261
        %3263 = vrot.lane.b32.xlu0 %v2666, 32
        %v3264 = vpop.permute.xlu0 %3263
        %3265 = vrot.lane.b32.xlu0 %v2667, 32
        %v3266 = vpop.permute.xlu0 %3265
        %3267 = vrot.lane.b32.xlu0 %v2668, 32
        %v3268 = vpop.permute.xlu0 %3267
        %3269 = vrot.lane.b32.xlu0 %v2669, 32
        %v3270 = vpop.permute.xlu0 %3269
        %3271 = vrot.lane.b32.xlu0 %v2670, 32
        %v3272 = vpop.permute.xlu0 %3271
        %3273 = vrot.lane.b32.xlu0 %v2671, 32
        %v3274 = vpop.permute.xlu0 %3273
        %3275 = vrot.lane.b32.xlu0 %v2672, 32
        %v3276 = vpop.permute.xlu0 %3275
        %3277 = vrot.lane.b32.xlu0 %v2673, 32
        %v3278 = vpop.permute.xlu0 %3277
        %3279 = vrot.lane.b32.xlu0 %v2674, 32
        %v3280 = vpop.permute.xlu0 %3279
        %3281 = vrot.lane.b32.xlu0 %v2675, 32
        %v3282 = vpop.permute.xlu0 %3281
        %3283 = vrot.lane.b32.xlu0 %v2676, 32
        %v3284 = vpop.permute.xlu0 %3283
        %3285 = vrot.lane.b32.xlu0 %v2677, 32
        %v3286 = vpop.permute.xlu0 %3285
        %3351 = vrot.lane.b32.xlu0 %v2678, 40
        %v3352 = vpop.permute.xlu0 %3351
        %3353 = vrot.lane.b32.xlu0 %v2679, 40
        %v3354 = vpop.permute.xlu0 %3353
        %3355 = vrot.lane.b32.xlu0 %v2680, 40
        %v3356 = vpop.permute.xlu0 %3355
        %3357 = vrot.lane.b32.xlu0 %v2681, 40
        %v3358 = vpop.permute.xlu0 %3357
        %3359 = vrot.lane.b32.xlu0 %v2682, 40
        %v3360 = vpop.permute.xlu0 %3359
        %3361 = vrot.lane.b32.xlu0 %v2683, 40
        %v3362 = vpop.permute.xlu0 %3361
        %3363 = vrot.lane.b32.xlu0 %v2684, 40
        %v3364 = vpop.permute.xlu0 %3363
        %3365 = vrot.lane.b32.xlu0 %v2685, 40
        %v3366 = vpop.permute.xlu0 %3365
        %3367 = vrot.lane.b32.xlu0 %v2686, 40
        %v3368 = vpop.permute.xlu0 %3367
        %3369 = vrot.lane.b32.xlu0 %v2687, 40
        %v3370 = vpop.permute.xlu0 %3369
        %3371 = vrot.lane.b32.xlu0 %v2688, 40
        %v3372 = vpop.permute.xlu0 %3371
        %3373 = vrot.lane.b32.xlu0 %v2689, 40
        %v3374 = vpop.permute.xlu0 %3373
        %3375 = vrot.lane.b32.xlu0 %v2690, 40
        %v3376 = vpop.permute.xlu0 %3375
        %3377 = vrot.lane.b32.xlu0 %v2691, 40
        %v3378 = vpop.permute.xlu0 %3377
        %3379 = vrot.lane.b32.xlu0 %v2692, 40
        %v3380 = vpop.permute.xlu0 %3379
        %3381 = vrot.lane.b32.xlu0 %v2693, 40
        %v3382 = vpop.permute.xlu0 %3381
        %3383 = vrot.lane.b32.xlu0 %v2694, 40
        %v3384 = vpop.permute.xlu0 %3383
        %3385 = vrot.lane.b32.xlu0 %v2695, 40
        %v3386 = vpop.permute.xlu0 %3385
        %3387 = vrot.lane.b32.xlu0 %v2696, 40
        %v3388 = vpop.permute.xlu0 %3387
        %3389 = vrot.lane.b32.xlu0 %v2697, 40
        %v3390 = vpop.permute.xlu0 %3389
        %3391 = vrot.lane.b32.xlu0 %v2698, 40
        %v3392 = vpop.permute.xlu0 %3391
        %3393 = vrot.lane.b32.xlu0 %v2699, 40
        %v3394 = vpop.permute.xlu0 %3393
        %3395 = vrot.lane.b32.xlu0 %v2700, 40
        %v3396 = vpop.permute.xlu0 %3395
        %3397 = vrot.lane.b32.xlu0 %v2701, 40
        %v3398 = vpop.permute.xlu0 %3397
        %3399 = vrot.lane.b32.xlu0 %v2702, 40
        %v3400 = vpop.permute.xlu0 %3399
        %3401 = vrot.lane.b32.xlu0 %v2703, 40
        %v3402 = vpop.permute.xlu0 %3401
        %3403 = vrot.lane.b32.xlu0 %v2704, 40
        %v3404 = vpop.permute.xlu0 %3403
        %3405 = vrot.lane.b32.xlu0 %v2705, 40
        %v3406 = vpop.permute.xlu0 %3405
        %3407 = vrot.lane.b32.xlu0 %v2706, 40
        %v3408 = vpop.permute.xlu0 %3407
        %3409 = vrot.lane.b32.xlu0 %v2707, 40
        %v3410 = vpop.permute.xlu0 %3409
        %3411 = vrot.lane.b32.xlu0 %v2708, 40
        %v3412 = vpop.permute.xlu0 %3411
        %3413 = vrot.lane.b32.xlu0 %v2709, 40
        %v3414 = vpop.permute.xlu0 %3413
        %3479 = vrot.lane.b32.xlu0 %v2711, 48
        %v3480 = vpop.permute.xlu0 %3479
        %3481 = vrot.lane.b32.xlu0 %v2712, 48
        %v3482 = vpop.permute.xlu0 %3481
        %3483 = vrot.lane.b32.xlu0 %v2713, 48
        %v3484 = vpop.permute.xlu0 %3483
        %3485 = vrot.lane.b32.xlu0 %v2714, 48
        %v3486 = vpop.permute.xlu0 %3485
        %3487 = vrot.lane.b32.xlu0 %v2715, 48
        %v3488 = vpop.permute.xlu0 %3487
        %3489 = vrot.lane.b32.xlu0 %v2716, 48
        %v3490 = vpop.permute.xlu0 %3489
        %3491 = vrot.lane.b32.xlu0 %v2717, 48
        %v3492 = vpop.permute.xlu0 %3491
        %3493 = vrot.lane.b32.xlu0 %v2718, 48
        %v3494 = vpop.permute.xlu0 %3493
        %3495 = vrot.lane.b32.xlu0 %v2719, 48
        %v3496 = vpop.permute.xlu0 %3495
        %3497 = vrot.lane.b32.xlu0 %v2720, 48
        %v3498 = vpop.permute.xlu0 %3497
        %3499 = vrot.lane.b32.xlu0 %v2721, 48
        %v3500 = vpop.permute.xlu0 %3499
        %3501 = vrot.lane.b32.xlu0 %v2722, 48
        %v3502 = vpop.permute.xlu0 %3501
        %3503 = vrot.lane.b32.xlu0 %v2723, 48
        %v3504 = vpop.permute.xlu0 %3503
        %3505 = vrot.lane.b32.xlu0 %v2724, 48
        %v3506 = vpop.permute.xlu0 %3505
        %3507 = vrot.lane.b32.xlu0 %v2725, 48
        %v3508 = vpop.permute.xlu0 %3507
        %3509 = vrot.lane.b32.xlu0 %v2726, 48
        %v3510 = vpop.permute.xlu0 %3509
        %3511 = vrot.lane.b32.xlu0 %v2727, 48
        %v3512 = vpop.permute.xlu0 %3511
        %3513 = vrot.lane.b32.xlu0 %v2728, 48
        %v3514 = vpop.permute.xlu0 %3513
        %3515 = vrot.lane.b32.xlu0 %v2729, 48
        %v3516 = vpop.permute.xlu0 %3515
        %3517 = vrot.lane.b32.xlu0 %v2730, 48
        %v3518 = vpop.permute.xlu0 %3517
        %3519 = vrot.lane.b32.xlu0 %v2731, 48
        %v3520 = vpop.permute.xlu0 %3519
        %3521 = vrot.lane.b32.xlu0 %v2732, 48
        %v3522 = vpop.permute.xlu0 %3521
        %3523 = vrot.lane.b32.xlu0 %v2733, 48
        %v3524 = vpop.permute.xlu0 %3523
        %3525 = vrot.lane.b32.xlu0 %v2734, 48
        %v3526 = vpop.permute.xlu0 %3525
        %3527 = vrot.lane.b32.xlu0 %v2735, 48
        %v3528 = vpop.permute.xlu0 %3527
        %3529 = vrot.lane.b32.xlu0 %v2736, 48
        %v3530 = vpop.permute.xlu0 %3529
        %3531 = vrot.lane.b32.xlu0 %v2737, 48
        %v3532 = vpop.permute.xlu0 %3531
        %3533 = vrot.lane.b32.xlu0 %v2738, 48
        %v3534 = vpop.permute.xlu0 %3533
        %3535 = vrot.lane.b32.xlu0 %v2739, 48
        %v3536 = vpop.permute.xlu0 %3535
        %3537 = vrot.lane.b32.xlu0 %v2740, 48
        %v3538 = vpop.permute.xlu0 %3537
        %3539 = vrot.lane.b32.xlu0 %v2741, 48
        %v3540 = vpop.permute.xlu0 %3539
        %3541 = vrot.lane.b32.xlu0 %v2742, 48
        %v3542 = vpop.permute.xlu0 %3541
        %3607 = vrot.lane.b32.xlu0 %v2743, 56
        %v3608 = vpop.permute.xlu0 %3607
        %3609 = vrot.lane.b32.xlu0 %v2744, 56
        %v3610 = vpop.permute.xlu0 %3609
        %3611 = vrot.lane.b32.xlu0 %v2745, 56
        %v3612 = vpop.permute.xlu0 %3611
        %3613 = vrot.lane.b32.xlu0 %v2746, 56
        %v3614 = vpop.permute.xlu0 %3613
        %3615 = vrot.lane.b32.xlu0 %v2747, 56
        %v3616 = vpop.permute.xlu0 %3615
        %3617 = vrot.lane.b32.xlu0 %v2748, 56
        %v3618 = vpop.permute.xlu0 %3617
        %3619 = vrot.lane.b32.xlu0 %v2749, 56
        %v3620 = vpop.permute.xlu0 %3619
        %3621 = vrot.lane.b32.xlu0 %v2750, 56
        %v3622 = vpop.permute.xlu0 %3621
        %3623 = vrot.lane.b32.xlu0 %v2751, 56
        %v3624 = vpop.permute.xlu0 %3623
        %3625 = vrot.lane.b32.xlu0 %v2752, 56
        %v3626 = vpop.permute.xlu0 %3625
        %3627 = vrot.lane.b32.xlu0 %v2753, 56
        %v3628 = vpop.permute.xlu0 %3627
        %3629 = vrot.lane.b32.xlu0 %v2754, 56
        %v3630 = vpop.permute.xlu0 %3629
        %3631 = vrot.lane.b32.xlu0 %v2755, 56
        %v3632 = vpop.permute.xlu0 %3631
        %3633 = vrot.lane.b32.xlu0 %v2756, 56
        %v3634 = vpop.permute.xlu0 %3633
        %3635 = vrot.lane.b32.xlu0 %v2757, 56
        %v3636 = vpop.permute.xlu0 %3635
        %3637 = vrot.lane.b32.xlu0 %v2758, 56
        %v3638 = vpop.permute.xlu0 %3637
        %3639 = vrot.lane.b32.xlu0 %v2759, 56
        %v3640 = vpop.permute.xlu0 %3639
        %3641 = vrot.lane.b32.xlu0 %v2760, 56
        %v3642 = vpop.permute.xlu0 %3641
        %3643 = vrot.lane.b32.xlu0 %v2761, 56
        %v3644 = vpop.permute.xlu0 %3643
        %3645 = vrot.lane.b32.xlu0 %v2762, 56
        %v3646 = vpop.permute.xlu0 %3645
        %3647 = vrot.lane.b32.xlu0 %v2763, 56
        %v3648 = vpop.permute.xlu0 %3647
        %3649 = vrot.lane.b32.xlu0 %v2764, 56
        %v3650 = vpop.permute.xlu0 %3649
        %3651 = vrot.lane.b32.xlu0 %v2765, 56
        %v3652 = vpop.permute.xlu0 %3651
        %3653 = vrot.lane.b32.xlu0 %v2766, 56
        %v3654 = vpop.permute.xlu0 %3653
        %3655 = vrot.lane.b32.xlu0 %v2767, 56
        %v3656 = vpop.permute.xlu0 %3655
        %3657 = vrot.lane.b32.xlu0 %v2768, 56
        %v3658 = vpop.permute.xlu0 %3657
        %3659 = vrot.lane.b32.xlu0 %v2769, 56
        %v3660 = vpop.permute.xlu0 %3659
        %3661 = vrot.lane.b32.xlu0 %v2770, 56
        %v3662 = vpop.permute.xlu0 %3661
        %3663 = vrot.lane.b32.xlu0 %v2771, 56
        %v3664 = vpop.permute.xlu0 %3663
        %3665 = vrot.lane.b32.xlu0 %v2772, 56
        %v3666 = vpop.permute.xlu0 %3665
        %3667 = vrot.lane.b32.xlu0 %v2773, 56
        %v3668 = vpop.permute.xlu0 %3667
        %3669 = vrot.lane.b32.xlu0 %v2774, 56
        %v3670 = vpop.permute.xlu0 %3669
        %3735 = vrot.lane.b32.xlu0 %v2775, 64
        %v3736 = vpop.permute.xlu0 %3735
        %3737 = vrot.lane.b32.xlu0 %v2776, 64
        %v3738 = vpop.permute.xlu0 %3737
        %3739 = vrot.lane.b32.xlu0 %v2777, 64
        %v3740 = vpop.permute.xlu0 %3739
        %3741 = vrot.lane.b32.xlu0 %v2778, 64
        %v3742 = vpop.permute.xlu0 %3741
        %3743 = vrot.lane.b32.xlu0 %v2779, 64
        %v3744 = vpop.permute.xlu0 %3743
        %3745 = vrot.lane.b32.xlu0 %v2780, 64
        %v3746 = vpop.permute.xlu0 %3745
        %3747 = vrot.lane.b32.xlu0 %v2781, 64
        %v3748 = vpop.permute.xlu0 %3747
        %3749 = vrot.lane.b32.xlu0 %v2782, 64
        %v3750 = vpop.permute.xlu0 %3749
        %3751 = vrot.lane.b32.xlu0 %v2783, 64
        %v3752 = vpop.permute.xlu0 %3751
        %3753 = vrot.lane.b32.xlu0 %v2784, 64
        %v3754 = vpop.permute.xlu0 %3753
        %3755 = vrot.lane.b32.xlu0 %v2785, 64
        %v3756 = vpop.permute.xlu0 %3755
        %3757 = vrot.lane.b32.xlu0 %v2786, 64
        %v3758 = vpop.permute.xlu0 %3757
        %3759 = vrot.lane.b32.xlu0 %v2787, 64
        %v3760 = vpop.permute.xlu0 %3759
        %3761 = vrot.lane.b32.xlu0 %v2788, 64
        %v3762 = vpop.permute.xlu0 %3761
        %3763 = vrot.lane.b32.xlu0 %v2789, 64
        %v3764 = vpop.permute.xlu0 %3763
        %3765 = vrot.lane.b32.xlu0 %v2790, 64
        %v3766 = vpop.permute.xlu0 %3765
        %3767 = vrot.lane.b32.xlu0 %v2791, 64
        %v3768 = vpop.permute.xlu0 %3767
        %3769 = vrot.lane.b32.xlu0 %v2792, 64
        %v3770 = vpop.permute.xlu0 %3769
        %3771 = vrot.lane.b32.xlu0 %v2793, 64
        %v3772 = vpop.permute.xlu0 %3771
        %3773 = vrot.lane.b32.xlu0 %v2794, 64
        %v3774 = vpop.permute.xlu0 %3773
        %3775 = vrot.lane.b32.xlu0 %v2795, 64
        %v3776 = vpop.permute.xlu0 %3775
        %3777 = vrot.lane.b32.xlu0 %v2796, 64
        %v3778 = vpop.permute.xlu0 %3777
        %3779 = vrot.lane.b32.xlu0 %v2797, 64
        %v3780 = vpop.permute.xlu0 %3779
        %3781 = vrot.lane.b32.xlu0 %v2798, 64
        %v3782 = vpop.permute.xlu0 %3781
        %3783 = vrot.lane.b32.xlu0 %v2799, 64
        %v3784 = vpop.permute.xlu0 %3783
        %3785 = vrot.lane.b32.xlu0 %v2800, 64
        %v3786 = vpop.permute.xlu0 %3785
        %3787 = vrot.lane.b32.xlu0 %v2801, 64
        %v3788 = vpop.permute.xlu0 %3787
        %3789 = vrot.lane.b32.xlu0 %v2802, 64
        %v3790 = vpop.permute.xlu0 %3789
        %3791 = vrot.lane.b32.xlu0 %v2803, 64
        %v3792 = vpop.permute.xlu0 %3791
        %3793 = vrot.lane.b32.xlu0 %v2804, 64
        %v3794 = vpop.permute.xlu0 %3793
        %3795 = vrot.lane.b32.xlu0 %v2805, 64
        %v3796 = vpop.permute.xlu0 %3795
        %3797 = vrot.lane.b32.xlu0 %v2806, 64
        %v3798 = vpop.permute.xlu0 %3797
        %v3831 = vsel %vm388, %v2518, %v2840
        %v3832 = vsel %vm388, %v2519, %v2842
        %v3833 = vsel %vm388, %v2520, %v2844
        %v3834 = vsel %vm388, %v2521, %v2846
        %v3835 = vsel %vm388, %v2522, %v2848
        %v3836 = vsel %vm388, %v2523, %v2850
        %v3837 = vsel %vm388, %v2524, %v2852
        %v3838 = vsel %vm388, %v2525, %v2854
        %v3839 = vsel %vm388, %v2526, %v2856
        %v3840 = vsel %vm388, %v2527, %v2858
        %v3841 = vsel %vm388, %v2528, %v2860
        %v3842 = vsel %vm388, %v2529, %v2862
        %v3843 = vsel %vm388, %v2530, %v2864
        %v3844 = vsel %vm388, %v2531, %v2866
        %v3845 = vsel %vm388, %v2532, %v2868
        %v3846 = vsel %vm388, %v2533, %v2870
        %v3847 = vsel %vm388, %v2534, %v2872
        %v3848 = vsel %vm388, %v2535, %v2874
        %v3849 = vsel %vm388, %v2536, %v2876
        %v3850 = vsel %vm388, %v2537, %v2878
        %v3851 = vsel %vm388, %v2538, %v2880
        %v3852 = vsel %vm388, %v2539, %v2882
        %v3853 = vsel %vm388, %v2540, %v2884
        %v3854 = vsel %vm388, %v2541, %v2886
        %v3855 = vsel %vm388, %v2542, %v2888
        %v3856 = vsel %vm388, %v2543, %v2890
        %v3857 = vsel %vm388, %v2544, %v2892
        %v3858 = vsel %vm388, %v2545, %v2894
        %v3859 = vsel %vm388, %v2546, %v2896
        %v3860 = vsel %vm388, %v2547, %v2898
        %v3861 = vsel %vm388, %v2548, %v2900
        %v3862 = vsel %vm388, %v2549, %v2902
        %v3863 = vsel %vm444, %v3831, %v2968
        %v3864 = vsel %vm444, %v3832, %v2970
        %v3865 = vsel %vm444, %v3833, %v2972
        %v3866 = vsel %vm444, %v3834, %v2974
        %v3867 = vsel %vm444, %v3835, %v2976
        %v3868 = vsel %vm444, %v3836, %v2978
        %v3869 = vsel %vm444, %v3837, %v2980
        %v3870 = vsel %vm444, %v3838, %v2982
        %v3871 = vsel %vm444, %v3839, %v2984
        %v3872 = vsel %vm444, %v3840, %v2986
        %v3873 = vsel %vm444, %v3841, %v2988
        %v3874 = vsel %vm444, %v3842, %v2990
        %v3875 = vsel %vm444, %v3843, %v2992
        %v3876 = vsel %vm444, %v3844, %v2994
        %v3877 = vsel %vm444, %v3845, %v2996
        %v3878 = vsel %vm444, %v3846, %v2998
        %v3879 = vsel %vm444, %v3847, %v3000
        %v3880 = vsel %vm444, %v3848, %v3002
        %v3881 = vsel %vm444, %v3849, %v3004
        %v3882 = vsel %vm444, %v3850, %v3006
        %v3883 = vsel %vm444, %v3851, %v3008
        %v3884 = vsel %vm444, %v3852, %v3010
        %v3885 = vsel %vm444, %v3853, %v3012
        %v3886 = vsel %vm444, %v3854, %v3014
        %v3887 = vsel %vm444, %v3855, %v3016
        %v3888 = vsel %vm444, %v3856, %v3018
        %v3889 = vsel %vm444, %v3857, %v3020
        %v3890 = vsel %vm444, %v3858, %v3022
        %v3891 = vsel %vm444, %v3859, %v3024
        %v3892 = vsel %vm444, %v3860, %v3026
        %v3893 = vsel %vm444, %v3861, %v3028
        %v3894 = vsel %vm444, %v3862, %v3030
        %v3895 = vsel %vm1976, %v3863, %v3096
        %v3896 = vsel %vm1976, %v3864, %v3098
        %v3897 = vsel %vm1976, %v3865, %v3100
        %v3898 = vsel %vm1976, %v3866, %v3102
        %v3899 = vsel %vm1976, %v3867, %v3104
        %v3900 = vsel %vm1976, %v3868, %v3106
        %v3901 = vsel %vm1976, %v3869, %v3108
        %v3902 = vsel %vm1976, %v3870, %v3110
        %v3903 = vsel %vm1976, %v3871, %v3112
        %v3904 = vsel %vm1976, %v3872, %v3114
        %v3905 = vsel %vm1976, %v3873, %v3116
        %v3906 = vsel %vm1976, %v3874, %v3118
        %v3907 = vsel %vm1976, %v3875, %v3120
        %v3908 = vsel %vm1976, %v3876, %v3122
        %v3909 = vsel %vm1976, %v3877, %v3124
        %v3910 = vsel %vm1976, %v3878, %v3126
        %v3911 = vsel %vm1976, %v3879, %v3128
        %v3912 = vsel %vm1976, %v3880, %v3130
        %v3913 = vsel %vm1976, %v3881, %v3132
        %v3914 = vsel %vm1976, %v3882, %v3134
        %v3915 = vsel %vm1976, %v3883, %v3136
        %v3916 = vsel %vm1976, %v3884, %v3138
        %v3917 = vsel %vm1976, %v3885, %v3140
        %v3918 = vsel %vm1976, %v3886, %v3142
        %v3919 = vsel %vm1976, %v3887, %v3144
        %v3920 = vsel %vm1976, %v3888, %v3146
        %v3921 = vsel %vm1976, %v3889, %v3148
        %v3922 = vsel %vm1976, %v3890, %v3150
        %v3923 = vsel %vm1976, %v3891, %v3152
        %v3924 = vsel %vm1976, %v3892, %v3154
        %v3925 = vsel %vm1976, %v3893, %v3156
        %v3926 = vsel %vm1976, %v3894, %v3158
        %vm3927 = vcmask 261120
        %v3928 = vsel %vm3927, %v3895, %v3224
        %v3929 = vsel %vm3927, %v3896, %v3226
        %v3930 = vsel %vm3927, %v3897, %v3228
        %v3931 = vsel %vm3927, %v3898, %v3230
        %v3932 = vsel %vm3927, %v3899, %v3232
        %v3933 = vsel %vm3927, %v3900, %v3234
        %v3934 = vsel %vm3927, %v3901, %v3236
        %v3935 = vsel %vm3927, %v3902, %v3238
        %v3936 = vsel %vm3927, %v3903, %v3240
        %v3937 = vsel %vm3927, %v3904, %v3242
        %v3938 = vsel %vm3927, %v3905, %v3244
        %v3939 = vsel %vm3927, %v3906, %v3246
        %v3940 = vsel %vm3927, %v3907, %v3248
        %v3941 = vsel %vm3927, %v3908, %v3250
        %v3942 = vsel %vm3927, %v3909, %v3252
        %v3943 = vsel %vm3927, %v3910, %v3254
        %v3944 = vsel %vm3927, %v3911, %v3256
        %v3945 = vsel %vm3927, %v3912, %v3258
        %v3946 = vsel %vm3927, %v3913, %v3260
        %v3947 = vsel %vm3927, %v3914, %v3262
        %v3948 = vsel %vm3927, %v3915, %v3264
        %v3949 = vsel %vm3927, %v3916, %v3266
        %v3950 = vsel %vm3927, %v3917, %v3268
        %v3951 = vsel %vm3927, %v3918, %v3270
        %v3952 = vsel %vm3927, %v3919, %v3272
        %v3953 = vsel %vm3927, %v3920, %v3274
        %v3954 = vsel %vm3927, %v3921, %v3276
        %v3955 = vsel %vm3927, %v3922, %v3278
        %v3956 = vsel %vm3927, %v3923, %v3280
        %v3957 = vsel %vm3927, %v3924, %v3282
        %v3958 = vsel %vm3927, %v3925, %v3284
        %v3959 = vsel %vm3927, %v3926, %v3286
        %vm3960 = vcmask 326656
        %v3961 = vsel %vm3960, %v3928, %v3352
        %v3962 = vsel %vm3960, %v3929, %v3354
        %v3963 = vsel %vm3960, %v3930, %v3356
        %v3964 = vsel %vm3960, %v3931, %v3358
        %v3965 = vsel %vm3960, %v3932, %v3360
        %v3966 = vsel %vm3960, %v3933, %v3362
        %v3967 = vsel %vm3960, %v3934, %v3364
        %v3968 = vsel %vm3960, %v3935, %v3366
        %v3969 = vsel %vm3960, %v3936, %v3368
        %v3970 = vsel %vm3960, %v3937, %v3370
        %v3971 = vsel %vm3960, %v3938, %v3372
        %v3972 = vsel %vm3960, %v3939, %v3374
        %v3973 = vsel %vm3960, %v3940, %v3376
        %v3974 = vsel %vm3960, %v3941, %v3378
        %v3975 = vsel %vm3960, %v3942, %v3380
        %v3976 = vsel %vm3960, %v3943, %v3382
        %v3977 = vsel %vm3960, %v3944, %v3384
        %v3978 = vsel %vm3960, %v3945, %v3386
        %v3979 = vsel %vm3960, %v3946, %v3388
        %v3980 = vsel %vm3960, %v3947, %v3390
        %v3981 = vsel %vm3960, %v3948, %v3392
        %v3982 = vsel %vm3960, %v3949, %v3394
        %v3983 = vsel %vm3960, %v3950, %v3396
        %v3984 = vsel %vm3960, %v3951, %v3398
        %v3985 = vsel %vm3960, %v3952, %v3400
        %v3986 = vsel %vm3960, %v3953, %v3402
        %v3987 = vsel %vm3960, %v3954, %v3404
        %v3988 = vsel %vm3960, %v3955, %v3406
        %v3989 = vsel %vm3960, %v3956, %v3408
        %v3990 = vsel %vm3960, %v3957, %v3410
        %v3991 = vsel %vm3960, %v3958, %v3412
        %v3992 = vsel %vm3960, %v3959, %v3414
        %v3993 = vsel %vm2108, %v3961, %v3480
        %v3994 = vsel %vm2108, %v3962, %v3482
        %v3995 = vsel %vm2108, %v3963, %v3484
        %v3996 = vsel %vm2108, %v3964, %v3486
        %v3997 = vsel %vm2108, %v3965, %v3488
        %v3998 = vsel %vm2108, %v3966, %v3490
        %v3999 = vsel %vm2108, %v3967, %v3492
        %v4000 = vsel %vm2108, %v3968, %v3494
        %v4001 = vsel %vm2108, %v3969, %v3496
        %v4002 = vsel %vm2108, %v3970, %v3498
        %v4003 = vsel %vm2108, %v3971, %v3500
        %v4004 = vsel %vm2108, %v3972, %v3502
        %v4005 = vsel %vm2108, %v3973, %v3504
        %v4006 = vsel %vm2108, %v3974, %v3506
        %v4007 = vsel %vm2108, %v3975, %v3508
        %v4008 = vsel %vm2108, %v3976, %v3510
        %v4009 = vsel %vm2108, %v3977, %v3512
        %v4010 = vsel %vm2108, %v3978, %v3514
        %v4011 = vsel %vm2108, %v3979, %v3516
        %v4012 = vsel %vm2108, %v3980, %v3518
        %v4013 = vsel %vm2108, %v3981, %v3520
        %v4014 = vsel %vm2108, %v3982, %v3522
        %v4015 = vsel %vm2108, %v3983, %v3524
        %v4016 = vsel %vm2108, %v3984, %v3526
        %v4017 = vsel %vm2108, %v3985, %v3528
        %v4018 = vsel %vm2108, %v3986, %v3530
        %v4019 = vsel %vm2108, %v3987, %v3532
        %v4020 = vsel %vm2108, %v3988, %v3534
        %v4021 = vsel %vm2108, %v3989, %v3536
        %v4022 = vsel %vm2108, %v3990, %v3538
        %v4023 = vsel %vm2108, %v3991, %v3540
        %v4024 = vsel %vm2108, %v3992, %v3542
        %vm4025 = vcmask 457728
        %v4026 = vsel %vm4025, %v3993, %v3608
        %v4027 = vsel %vm4025, %v3994, %v3610
        %v4028 = vsel %vm4025, %v3995, %v3612
        %v4029 = vsel %vm4025, %v3996, %v3614
        %v4030 = vsel %vm4025, %v3997, %v3616
        %v4031 = vsel %vm4025, %v3998, %v3618
        %v4032 = vsel %vm4025, %v3999, %v3620
        %v4033 = vsel %vm4025, %v4000, %v3622
        %v4034 = vsel %vm4025, %v4001, %v3624
        %v4035 = vsel %vm4025, %v4002, %v3626
        %v4036 = vsel %vm4025, %v4003, %v3628
        %v4037 = vsel %vm4025, %v4004, %v3630
        %v4038 = vsel %vm4025, %v4005, %v3632
        %v4039 = vsel %vm4025, %v4006, %v3634
        %v4040 = vsel %vm4025, %v4007, %v3636
        %v4041 = vsel %vm4025, %v4008, %v3638
        %v4042 = vsel %vm4025, %v4009, %v3640
        %v4043 = vsel %vm4025, %v4010, %v3642
        %v4044 = vsel %vm4025, %v4011, %v3644
        %v4045 = vsel %vm4025, %v4012, %v3646
        %v4046 = vsel %vm4025, %v4013, %v3648
        %v4047 = vsel %vm4025, %v4014, %v3650
        %v4048 = vsel %vm4025, %v4015, %v3652
        %v4049 = vsel %vm4025, %v4016, %v3654
        %v4050 = vsel %vm4025, %v4017, %v3656
        %v4051 = vsel %vm4025, %v4018, %v3658
        %v4052 = vsel %vm4025, %v4019, %v3660
        %v4053 = vsel %vm4025, %v4020, %v3662
        %v4054 = vsel %vm4025, %v4021, %v3664
        %v4055 = vsel %vm4025, %v4022, %v3666
        %v4056 = vsel %vm4025, %v4023, %v3668
        %v4057 = vsel %vm4025, %v4024, %v3670
        %vm4058 = vcmask 523264
        %v4059 = vsel %vm4058, %v4026, %v3736
        %v4060 = vsel %vm4058, %v4027, %v3738
        %v4061 = vsel %vm4058, %v4028, %v3740
        %v4062 = vsel %vm4058, %v4029, %v3742
        %v4063 = vsel %vm4058, %v4030, %v3744
        %v4064 = vsel %vm4058, %v4031, %v3746
        %v4065 = vsel %vm4058, %v4032, %v3748
        %v4066 = vsel %vm4058, %v4033, %v3750
        %v4067 = vsel %vm4058, %v4034, %v3752
        %v4068 = vsel %vm4058, %v4035, %v3754
        %v4069 = vsel %vm4058, %v4036, %v3756
        %v4070 = vsel %vm4058, %v4037, %v3758
        %v4071 = vsel %vm4058, %v4038, %v3760
        %v4072 = vsel %vm4058, %v4039, %v3762
        %v4073 = vsel %vm4058, %v4040, %v3764
        %v4074 = vsel %vm4058, %v4041, %v3766
        %v4075 = vsel %vm4058, %v4042, %v3768
        %v4076 = vsel %vm4058, %v4043, %v3770
        %v4077 = vsel %vm4058, %v4044, %v3772
        %v4078 = vsel %vm4058, %v4045, %v3774
        %v4079 = vsel %vm4058, %v4046, %v3776
        %v4080 = vsel %vm4058, %v4047, %v3778
        %v4081 = vsel %vm4058, %v4048, %v3780
        %v4082 = vsel %vm4058, %v4049, %v3782
        %v4083 = vsel %vm4058, %v4050, %v3784
        %v4084 = vsel %vm4058, %v4051, %v3786
        %v4085 = vsel %vm4058, %v4052, %v3788
        %v4086 = vsel %vm4058, %v4053, %v3790
        %v4087 = vsel %vm4058, %v4054, %v3792
        %v4088 = vsel %vm4058, %v4055, %v3794
        %v4089 = vsel %vm4058, %v4056, %v3796
        %v4090 = vsel %vm4058, %v4057, %v3798
        %v4091 = vpack.c.bf16 %v4060, %v4059
        %v4092 = vpack.c.bf16 %v4062, %v4061
        %v4093 = vpack.c.bf16 %v4064, %v4063
        %v4094 = vpack.c.bf16 %v4066, %v4065
        %v4095 = vpack.c.bf16 %v4068, %v4067
        %v4096 = vpack.c.bf16 %v4070, %v4069
        %v4097 = vpack.c.bf16 %v4072, %v4071
        %v4098 = vpack.c.bf16 %v4074, %v4073
        %v4099 = vpack.c.bf16 %v4076, %v4075
        %v4100 = vpack.c.bf16 %v4078, %v4077
        %v4101 = vpack.c.bf16 %v4080, %v4079
        %v4102 = vpack.c.bf16 %v4082, %v4081
        %v4103 = vpack.c.bf16 %v4084, %v4083
        %v4104 = vpack.c.bf16 %v4086, %v4085
        %v4105 = vpack.c.bf16 %v4088, %v4087
        %v4106 = vpack.c.bf16 %v4090, %v4089
        %v4107 = vld [vmem:[%s3] sm:$0xff]
        %v4108 = vld [vmem:[%s3 + $0x8] sm:$0xff]
        %v4109 = vld [vmem:[%s3 + $0x10] sm:$0xff]
        %v4110 = vld [vmem:[%s3 + $0x18] sm:$0xff]
        %v4111 = vld [vmem:[%s3 + $0x20] sm:$0xff]
        %v4112 = vld [vmem:[%s3 + $0x28] sm:$0xff]
        %v4113 = vld [vmem:[%s3 + $0x30] sm:$0xff]
        %v4114 = vld [vmem:[%s3 + $0x38] sm:$0xff]
        %v4115 = vld [vmem:[%s3 + $0x40] sm:$0xff]
        %v4116 = vpack.c.bf16 %v4108, %v4107
        %v4117 = vpack.c.bf16 %v4110, %v4109
        %v4118 = vpack.c.bf16 %v4112, %v4111
        %v4119 = vpack.c.bf16 %v4114, %v4113
        %v4120 = vpack.c.bf16 %v4115, %v4115
        %v4121 = vld [vmem:[%s4] sm:$0x1]
        %v4123 = vlaneseq
        %v4124 = vshrl.u32 %v4123, 7
        %v4125 = vsub.s32 0, %v4124
        %v4126 = vrot.slane %v4121, %v4125
        %vm4128 = vcmask 588800
        %v4130 = vsel %vm4128, %v4091, 0
        %v4133 = vsel %vm4128, %v4092, 0
        %v4136 = vsel %vm4128, %v4093, 0
        %v4139 = vsel %vm4128, %v4094, 0
        %v4142 = vsel %vm4128, %v4095, 0
        %v4145 = vsel %vm4128, %v4096, 0
        %v4148 = vsel %vm4128, %v4097, 0
        %v4151 = vsel %vm4128, %v4098, 0
        %v4154 = vsel %vm4128, %v4099, 0
        %v4157 = vsel %vm4128, %v4100, 0
        %v4160 = vsel %vm4128, %v4101, 0
        %v4163 = vsel %vm4128, %v4102, 0
        %v4166 = vsel %vm4128, %v4103, 0
        %v4169 = vsel %vm4128, %v4104, 0
        %v4172 = vsel %vm4128, %v4105, 0
        %v4175 = vsel %vm4128, %v4106, 0
        %vm4177 = vcmask 1043456
        %v4179 = vsel %vm4177, %v4120, 0
        %4181 = vmatprep.subr.bf16.mxu0 0
        %4182 = vmatpush1.bf16.msra.mxu0 0
        %4183 = vmatprep.subr.bf16.mxu0 0
        %4184 = vmatpush1.bf16.msra.mxu0 0
        %4185 = vmatprep.subr.bf16.mxu0 0
        %4186 = vmatpush1.bf16.msra.mxu0 0
        %4187 = vmatprep.subr.bf16.mxu0 0
        %4188 = vmatpush1.bf16.msra.mxu0 %v4179
        %4189 = vmatprep.subr.bf16.mxu0 0
        %4190 = vmatpush1.bf16.msra.mxu0 %v4119
        %4191 = vmatprep.subr.bf16.mxu0 0
        %4192 = vmatpush1.bf16.msra.mxu0 %v4118
        %4193 = vmatprep.subr.bf16.mxu0 0
        %4194 = vmatpush1.bf16.msra.mxu0 %v4117
        %4195 = vmatprep.subr.bf16.mxu0 0
        %4196 = vmatpush1.bf16.msra.mxu0 %v4116
        %4197 = vmatprep.subr.bf16.mxu0 0
        %4198 = vmatpush2.bf16.msra.mxu0 0
        %4199 = vmatprep.subr.bf16.mxu0 0
        %4200 = vmatpush2.bf16.msra.mxu0 0
        %4201 = vmatprep.subr.bf16.mxu0 0
        %4202 = vmatpush2.bf16.msra.mxu0 0
        %4203 = vmatprep.subr.bf16.mxu0 0
        %4204 = vmatpush2.bf16.msra.mxu0 0
        %4205 = vmatprep.subr.bf16.mxu0 0
        %4206 = vmatpush2.bf16.msra.mxu0 0
        %4207 = vmatprep.subr.bf16.mxu0 0
        %4208 = vmatpush2.bf16.msra.mxu0 0
        %4209 = vmatprep.subr.bf16.mxu0 0
        %4210 = vmatpush2.bf16.msra.mxu0 0
        %4211 = vmatprep.subr.bf16.mxu0 0
        %4212 = vmatpush2.bf16.msra.mxu0 0
        %4213 = vmatprep.mubr.bf16.mxu0 0
        %4214 = vmatmul.mubr.bf16.gmra.mxu0 %v4130
        %v4215 = vpop.f32.mrf.mxu0
        %v4216 = vadd.f32 %v4126, %v4215
        %v4217 = vpop.f32.mrf.mxu0
        %v4218 = vpop.f32.mrf.mxu0
        %v4219 = vadd.f32 %v4126, %v4218
        %v4220 = vpop.f32.mrf.mxu0
        %4221 = vmatprep.mubr.bf16.mxu0 0
        %4222 = vmatmul.mubr.bf16.gmra.mxu0 %v4133
        %v4223 = vpop.f32.mrf.mxu0
        %v4224 = vadd.f32 %v4126, %v4223
        %v4225 = vpop.f32.mrf.mxu0
        %v4226 = vpop.f32.mrf.mxu0
        %v4227 = vadd.f32 %v4126, %v4226
        %v4228 = vpop.f32.mrf.mxu0
        %4229 = vmatprep.mubr.bf16.mxu0 0
        %4230 = vmatmul.mubr.bf16.gmra.mxu0 %v4136
        %v4231 = vpop.f32.mrf.mxu0
        %v4232 = vadd.f32 %v4126, %v4231
        %v4233 = vpop.f32.mrf.mxu0
        %v4234 = vpop.f32.mrf.mxu0
        %v4235 = vadd.f32 %v4126, %v4234
        %v4236 = vpop.f32.mrf.mxu0
        %4237 = vmatprep.mubr.bf16.mxu0 0
        %4238 = vmatmul.mubr.bf16.gmra.mxu0 %v4139
        %v4239 = vpop.f32.mrf.mxu0
        %v4240 = vadd.f32 %v4126, %v4239
        %v4241 = vpop.f32.mrf.mxu0
        %v4242 = vpop.f32.mrf.mxu0
        %v4243 = vadd.f32 %v4126, %v4242
        %v4244 = vpop.f32.mrf.mxu0
        %4245 = vmatprep.mubr.bf16.mxu0 0
        %4246 = vmatmul.mubr.bf16.gmra.mxu0 %v4142
        %v4247 = vpop.f32.mrf.mxu0
        %v4248 = vadd.f32 %v4126, %v4247
        %v4249 = vpop.f32.mrf.mxu0
        %v4250 = vpop.f32.mrf.mxu0
        %v4251 = vadd.f32 %v4126, %v4250
        %v4252 = vpop.f32.mrf.mxu0
        %4253 = vmatprep.mubr.bf16.mxu0 0
        %4254 = vmatmul.mubr.bf16.gmra.mxu0 %v4145
        %v4255 = vpop.f32.mrf.mxu0
        %v4256 = vadd.f32 %v4126, %v4255
        %v4257 = vpop.f32.mrf.mxu0
        %v4258 = vpop.f32.mrf.mxu0
        %v4259 = vadd.f32 %v4126, %v4258
        %v4260 = vpop.f32.mrf.mxu0
        %4261 = vmatprep.mubr.bf16.mxu0 0
        %4262 = vmatmul.mubr.bf16.gmra.mxu0 %v4148
        %v4263 = vpop.f32.mrf.mxu0
        %v4264 = vadd.f32 %v4126, %v4263
        %v4265 = vpop.f32.mrf.mxu0
        %v4266 = vpop.f32.mrf.mxu0
        %v4267 = vadd.f32 %v4126, %v4266
        %v4268 = vpop.f32.mrf.mxu0
        %4269 = vmatprep.mubr.bf16.mxu0 0
        %4270 = vmatmul.mubr.bf16.gmra.mxu0 %v4151
        %v4271 = vpop.f32.mrf.mxu0
        %v4272 = vadd.f32 %v4126, %v4271
        %v4273 = vpop.f32.mrf.mxu0
        %v4274 = vpop.f32.mrf.mxu0
        %v4275 = vadd.f32 %v4126, %v4274
        %v4276 = vpop.f32.mrf.mxu0
        %4277 = vmatprep.mubr.bf16.mxu0 0
        %4278 = vmatmul.mubr.bf16.gmra.mxu0 %v4154
        %v4279 = vpop.f32.mrf.mxu0
        %v4280 = vadd.f32 %v4126, %v4279
        %v4281 = vpop.f32.mrf.mxu0
        %v4282 = vpop.f32.mrf.mxu0
        %v4283 = vadd.f32 %v4126, %v4282
        %v4284 = vpop.f32.mrf.mxu0
        %4285 = vmatprep.mubr.bf16.mxu0 0
        %4286 = vmatmul.mubr.bf16.gmra.mxu0 %v4157
        %v4287 = vpop.f32.mrf.mxu0
        %v4288 = vadd.f32 %v4126, %v4287
        %v4289 = vpop.f32.mrf.mxu0
        %v4290 = vpop.f32.mrf.mxu0
        %v4291 = vadd.f32 %v4126, %v4290
        %v4292 = vpop.f32.mrf.mxu0
        %4293 = vmatprep.mubr.bf16.mxu0 0
        %4294 = vmatmul.mubr.bf16.gmra.mxu0 %v4160
        %v4295 = vpop.f32.mrf.mxu0
        %v4296 = vadd.f32 %v4126, %v4295
        %v4297 = vpop.f32.mrf.mxu0
        %v4298 = vpop.f32.mrf.mxu0
        %v4299 = vadd.f32 %v4126, %v4298
        %v4300 = vpop.f32.mrf.mxu0
        %4301 = vmatprep.mubr.bf16.mxu0 0
        %4302 = vmatmul.mubr.bf16.gmra.mxu0 %v4163
        %v4303 = vpop.f32.mrf.mxu0
        %v4304 = vadd.f32 %v4126, %v4303
        %v4305 = vpop.f32.mrf.mxu0
        %v4306 = vpop.f32.mrf.mxu0
        %v4307 = vadd.f32 %v4126, %v4306
        %v4308 = vpop.f32.mrf.mxu0
        %4309 = vmatprep.mubr.bf16.mxu0 0
        %4310 = vmatmul.mubr.bf16.gmra.mxu0 %v4166
        %v4311 = vpop.f32.mrf.mxu0
        %v4312 = vadd.f32 %v4126, %v4311
        %v4313 = vpop.f32.mrf.mxu0
        %v4314 = vpop.f32.mrf.mxu0
        %v4315 = vadd.f32 %v4126, %v4314
        %v4316 = vpop.f32.mrf.mxu0
        %4317 = vmatprep.mubr.bf16.mxu0 0
        %4318 = vmatmul.mubr.bf16.gmra.mxu0 %v4169
        %v4319 = vpop.f32.mrf.mxu0
        %v4320 = vadd.f32 %v4126, %v4319
        %v4321 = vpop.f32.mrf.mxu0
        %v4322 = vpop.f32.mrf.mxu0
        %v4323 = vadd.f32 %v4126, %v4322
        %v4324 = vpop.f32.mrf.mxu0
        %4325 = vmatprep.mubr.bf16.mxu0 0
        %4326 = vmatmul.mubr.bf16.gmra.mxu0 %v4172
        %v4327 = vpop.f32.mrf.mxu0
        %v4328 = vadd.f32 %v4126, %v4327
        %v4329 = vpop.f32.mrf.mxu0
        %v4330 = vpop.f32.mrf.mxu0
        %v4331 = vadd.f32 %v4126, %v4330
        %v4332 = vpop.f32.mrf.mxu0
        %4333 = vmatprep.mubr.bf16.mxu0 0
        %4334 = vmatmul.mubr.bf16.gmra.mxu0 %v4175
        %v4335 = vpop.f32.mrf.mxu0
        %v4336 = vadd.f32 %v4126, %v4335
        %v4337 = vpop.f32.mrf.mxu0
        %v4338 = vpop.f32.mrf.mxu0
        %v4339 = vadd.f32 %v4126, %v4338
        %v4340 = vpop.f32.mrf.mxu0
        %4341 = vdwg.mxu0
        %vm4342 = vcmp.ge.f32.partialorder %v4216, 0.0
        %vm4343 = vcmp.ge.f32.partialorder %v4219, 0.0
        %vm4344 = vcmp.ge.f32.partialorder %v4224, 0.0
        %vm4345 = vcmp.ge.f32.partialorder %v4227, 0.0
        %vm4346 = vcmp.ge.f32.partialorder %v4232, 0.0
        %vm4347 = vcmp.ge.f32.partialorder %v4235, 0.0
        %vm4348 = vcmp.ge.f32.partialorder %v4240, 0.0
        %vm4349 = vcmp.ge.f32.partialorder %v4243, 0.0
        %vm4350 = vcmp.ge.f32.partialorder %v4248, 0.0
        %vm4351 = vcmp.ge.f32.partialorder %v4251, 0.0
        %vm4352 = vcmp.ge.f32.partialorder %v4256, 0.0
        %vm4353 = vcmp.ge.f32.partialorder %v4259, 0.0
        %vm4354 = vcmp.ge.f32.partialorder %v4264, 0.0
        %vm4355 = vcmp.ge.f32.partialorder %v4267, 0.0
        %vm4356 = vcmp.ge.f32.partialorder %v4272, 0.0
        %vm4357 = vcmp.ge.f32.partialorder %v4275, 0.0
        %vm4358 = vcmp.ge.f32.partialorder %v4280, 0.0
        %vm4359 = vcmp.ge.f32.partialorder %v4283, 0.0
        %vm4360 = vcmp.ge.f32.partialorder %v4288, 0.0
        %vm4361 = vcmp.ge.f32.partialorder %v4291, 0.0
        %vm4362 = vcmp.ge.f32.partialorder %v4296, 0.0
        %vm4363 = vcmp.ge.f32.partialorder %v4299, 0.0
        %vm4364 = vcmp.ge.f32.partialorder %v4304, 0.0
        %vm4365 = vcmp.ge.f32.partialorder %v4307, 0.0
        %vm4366 = vcmp.ge.f32.partialorder %v4312, 0.0
        %vm4367 = vcmp.ge.f32.partialorder %v4315, 0.0
        %vm4368 = vcmp.ge.f32.partialorder %v4320, 0.0
        %vm4369 = vcmp.ge.f32.partialorder %v4323, 0.0
        %vm4370 = vcmp.ge.f32.partialorder %v4328, 0.0
        %vm4371 = vcmp.ge.f32.partialorder %v4331, 0.0
        %vm4372 = vcmp.ge.f32.partialorder %v4336, 0.0
        %vm4373 = vcmp.ge.f32.partialorder %v4339, 0.0
        %v4374 = vmul.f32 %v4216, 0.2
        %v4375 = vmul.f32 %v4219, 0.2
        %v4376 = vmul.f32 %v4224, 0.2
        %v4377 = vmul.f32 %v4227, 0.2
        %v4378 = vmul.f32 %v4232, 0.2
        %v4379 = vmul.f32 %v4235, 0.2
        %v4380 = vmul.f32 %v4240, 0.2
        %v4381 = vmul.f32 %v4243, 0.2
        %v4382 = vmul.f32 %v4248, 0.2
        %v4383 = vmul.f32 %v4251, 0.2
        %v4384 = vmul.f32 %v4256, 0.2
        %v4385 = vmul.f32 %v4259, 0.2
        %v4386 = vmul.f32 %v4264, 0.2
        %v4387 = vmul.f32 %v4267, 0.2
        %v4388 = vmul.f32 %v4272, 0.2
        %v4389 = vmul.f32 %v4275, 0.2
        %v4390 = vmul.f32 %v4280, 0.2
        %v4391 = vmul.f32 %v4283, 0.2
        %v4392 = vmul.f32 %v4288, 0.2
        %v4393 = vmul.f32 %v4291, 0.2
        %v4394 = vmul.f32 %v4296, 0.2
        %v4395 = vmul.f32 %v4299, 0.2
        %v4396 = vmul.f32 %v4304, 0.2
        %v4397 = vmul.f32 %v4307, 0.2
        %v4398 = vmul.f32 %v4312, 0.2
        %v4399 = vmul.f32 %v4315, 0.2
        %v4400 = vmul.f32 %v4320, 0.2
        %v4401 = vmul.f32 %v4323, 0.2
        %v4402 = vmul.f32 %v4328, 0.2
        %v4403 = vmul.f32 %v4331, 0.2
        %v4404 = vmul.f32 %v4336, 0.2
        %v4405 = vmul.f32 %v4339, 0.2
        %v4406 = vsel %vm4342, %v4216, %v4374
        %v4407 = vsel %vm4343, %v4219, %v4375
        %v4408 = vsel %vm4344, %v4224, %v4376
        %v4409 = vsel %vm4345, %v4227, %v4377
        %v4410 = vsel %vm4346, %v4232, %v4378
        %v4411 = vsel %vm4347, %v4235, %v4379
        %v4412 = vsel %vm4348, %v4240, %v4380
        %v4413 = vsel %vm4349, %v4243, %v4381
        %v4414 = vsel %vm4350, %v4248, %v4382
        %v4415 = vsel %vm4351, %v4251, %v4383
        %v4416 = vsel %vm4352, %v4256, %v4384
        %v4417 = vsel %vm4353, %v4259, %v4385
        %v4418 = vsel %vm4354, %v4264, %v4386
        %v4419 = vsel %vm4355, %v4267, %v4387
        %v4420 = vsel %vm4356, %v4272, %v4388
        %v4421 = vsel %vm4357, %v4275, %v4389
        %v4422 = vsel %vm4358, %v4280, %v4390
        %v4423 = vsel %vm4359, %v4283, %v4391
        %v4424 = vsel %vm4360, %v4288, %v4392
        %v4425 = vsel %vm4361, %v4291, %v4393
        %v4426 = vsel %vm4362, %v4296, %v4394
        %v4427 = vsel %vm4363, %v4299, %v4395
        %v4428 = vsel %vm4364, %v4304, %v4396
        %v4429 = vsel %vm4365, %v4307, %v4397
        %v4430 = vsel %vm4366, %v4312, %v4398
        %v4431 = vsel %vm4367, %v4315, %v4399
        %v4432 = vsel %vm4368, %v4320, %v4400
        %v4433 = vsel %vm4369, %v4323, %v4401
        %v4434 = vsel %vm4370, %v4328, %v4402
        %v4435 = vsel %vm4371, %v4331, %v4403
        %v4436 = vsel %vm4372, %v4336, %v4404
        %v4437 = vsel %vm4373, %v4339, %v4405
        %s4438 = scalar_lea.vmem [#allocation4], 24
        %4439 = vst.msk [vmem:[%s4438 + $0x1] sm:$0xff] %vm444, %v4406
        %4440 = vst.msk [vmem:[%s4438 + $0x9] sm:$0xff] %vm444, %v4407
        %4441 = vst.msk [vmem:[%s4438 + $0x19] sm:$0xff] %vm444, %v4408
        %4442 = vst.msk [vmem:[%s4438 + $0x21] sm:$0xff] %vm444, %v4409
        %4443 = vst.msk [vmem:[%s4438 + $0x31] sm:$0xff] %vm444, %v4410
        %4444 = vst.msk [vmem:[%s4438 + $0x39] sm:$0xff] %vm444, %v4411
        %4445 = vst.msk [vmem:[%s4438 + $0x49] sm:$0xff] %vm444, %v4412
        %4446 = vst.msk [vmem:[%s4438 + $0x51] sm:$0xff] %vm444, %v4413
        %4447 = vst.msk [vmem:[%s4438 + $0x61] sm:$0xff] %vm444, %v4414
        %4448 = vst.msk [vmem:[%s4438 + $0x69] sm:$0xff] %vm444, %v4415
        %4449 = vst.msk [vmem:[%s4438 + $0x79] sm:$0xff] %vm444, %v4416
        %4450 = vst.msk [vmem:[%s4438 + $0x81] sm:$0xff] %vm444, %v4417
        %4451 = vst.msk [vmem:[%s4438 + $0x91] sm:$0xff] %vm444, %v4418
        %4452 = vst.msk [vmem:[%s4438 + $0x99] sm:$0xff] %vm444, %v4419
        %4453 = vst.msk [vmem:[%s4438 + $0xa9] sm:$0xff] %vm444, %v4420
        %4454 = vst.msk [vmem:[%s4438 + $0xb1] sm:$0xff] %vm444, %v4421
        %4455 = vst.msk [vmem:[%s4438 + $0xc1] sm:$0xff] %vm444, %v4422
        %4456 = vst.msk [vmem:[%s4438 + $0xc9] sm:$0xff] %vm444, %v4423
        %4457 = vst.msk [vmem:[%s4438 + $0xd9] sm:$0xff] %vm444, %v4424
        %4458 = vst.msk [vmem:[%s4438 + $0xe1] sm:$0xff] %vm444, %v4425
        %4459 = vst.msk [vmem:[%s4438 + $0xf1] sm:$0xff] %vm444, %v4426
        %4460 = vst.msk [vmem:[%s4438 + $0xf9] sm:$0xff] %vm444, %v4427
        %4461 = vst.msk [vmem:[%s4438 + $0x109] sm:$0xff] %vm444, %v4428
        %4462 = vst.msk [vmem:[%s4438 + $0x111] sm:$0xff] %vm444, %v4429
        %4463 = vst.msk [vmem:[%s4438 + $0x121] sm:$0xff] %vm444, %v4430
        %4464 = vst.msk [vmem:[%s4438 + $0x129] sm:$0xff] %vm444, %v4431
        %4465 = vst.msk [vmem:[%s4438 + $0x139] sm:$0xff] %vm444, %v4432
        %4466 = vst.msk [vmem:[%s4438 + $0x141] sm:$0xff] %vm444, %v4433
        %4467 = vst.msk [vmem:[%s4438 + $0x151] sm:$0xff] %vm444, %v4434
        %4468 = vst.msk [vmem:[%s4438 + $0x159] sm:$0xff] %vm444, %v4435
        %4469 = vst.msk [vmem:[%s4438 + $0x169] sm:$0xff] %vm444, %v4436
        %4470 = vst.msk [vmem:[%s4438 + $0x171] sm:$0xff] %vm444, %v4437
        %v4471 = vld [vmem:[#allocation4] sm:$0xff]
        %v4472 = vld [vmem:[#allocation4 + $0x8] sm:$0xff]
        %v4473 = vld [vmem:[#allocation4 + $0x18] sm:$0xff]
        %v4474 = vld [vmem:[#allocation4 + $0x20] sm:$0xff]
        %v4475 = vld [vmem:[#allocation4 + $0x30] sm:$0xff]
        %v4476 = vld [vmem:[#allocation4 + $0x38] sm:$0xff]
        %v4477 = vld [vmem:[#allocation4 + $0x48] sm:$0xff]
        %v4478 = vld [vmem:[#allocation4 + $0x50] sm:$0xff]
        %v4479 = vld [vmem:[#allocation4 + $0x60] sm:$0xff]
        %v4480 = vld [vmem:[#allocation4 + $0x68] sm:$0xff]
        %v4481 = vld [vmem:[#allocation4 + $0x78] sm:$0xff]
        %v4482 = vld [vmem:[#allocation4 + $0x80] sm:$0xff]
        %v4483 = vld [vmem:[#allocation4 + $0x90] sm:$0xff]
        %v4484 = vld [vmem:[#allocation4 + $0x98] sm:$0xff]
        %v4485 = vld [vmem:[#allocation4 + $0xa8] sm:$0xff]
        %v4486 = vld [vmem:[#allocation4 + $0xb0] sm:$0xff]
        %v4487 = vld [vmem:[#allocation4 + $0xc0] sm:$0xff]
        %v4488 = vld [vmem:[#allocation4 + $0xc8] sm:$0xff]
        %v4489 = vld [vmem:[#allocation4 + $0xd8] sm:$0xff]
        %v4490 = vld [vmem:[#allocation4 + $0xe0] sm:$0xff]
        %v4491 = vld [vmem:[#allocation4 + $0xf0] sm:$0xff]
        %v4492 = vld [vmem:[#allocation4 + $0xf8] sm:$0xff]
        %v4493 = vld [vmem:[#allocation4 + $0x108] sm:$0xff]
        %v4494 = vld [vmem:[#allocation4 + $0x110] sm:$0xff]
        %v4495 = vld [vmem:[#allocation4 + $0x120] sm:$0xff]
        %v4496 = vld [vmem:[#allocation4 + $0x128] sm:$0xff]
        %v4497 = vld [vmem:[#allocation4 + $0x138] sm:$0xff]
        %v4498 = vld [vmem:[#allocation4 + $0x140] sm:$0xff]
        %v4499 = vld [vmem:[#allocation4 + $0x150] sm:$0xff]
        %v4500 = vld [vmem:[#allocation4 + $0x158] sm:$0xff]
        %v4501 = vld [vmem:[#allocation4 + $0x168] sm:$0xff]
        %v4502 = vld [vmem:[#allocation4 + $0x170] sm:$0xff]
        %v4503 = vld [vmem:[#allocation4 + $0x1] sm:$0xff]
        %v4504 = vld [vmem:[#allocation4 + $0x9] sm:$0xff]
        %v4505 = vld [vmem:[#allocation4 + $0x19] sm:$0xff]
        %v4506 = vld [vmem:[#allocation4 + $0x21] sm:$0xff]
        %v4507 = vld [vmem:[#allocation4 + $0x31] sm:$0xff]
        %v4508 = vld [vmem:[#allocation4 + $0x39] sm:$0xff]
        %v4509 = vld [vmem:[#allocation4 + $0x49] sm:$0xff]
        %v4510 = vld [vmem:[#allocation4 + $0x51] sm:$0xff]
        %v4511 = vld [vmem:[#allocation4 + $0x61] sm:$0xff]
        %v4512 = vld [vmem:[#allocation4 + $0x69] sm:$0xff]
        %v4513 = vld [vmem:[#allocation4 + $0x79] sm:$0xff]
        %v4514 = vld [vmem:[#allocation4 + $0x81] sm:$0xff]
        %v4515 = vld [vmem:[#allocation4 + $0x91] sm:$0xff]
        %v4516 = vld [vmem:[#allocation4 + $0x99] sm:$0xff]
        %v4517 = vld [vmem:[#allocation4 + $0xa9] sm:$0xff]
        %v4518 = vld [vmem:[#allocation4 + $0xb1] sm:$0xff]
        %v4519 = vld [vmem:[#allocation4 + $0xc1] sm:$0xff]
        %v4520 = vld [vmem:[#allocation4 + $0xc9] sm:$0xff]
        %v4521 = vld [vmem:[#allocation4 + $0xd9] sm:$0xff]
        %v4522 = vld [vmem:[#allocation4 + $0xe1] sm:$0xff]
        %v4523 = vld [vmem:[#allocation4 + $0xf1] sm:$0xff]
        %v4524 = vld [vmem:[#allocation4 + $0xf9] sm:$0xff]
        %v4525 = vld [vmem:[#allocation4 + $0x109] sm:$0xff]
        %v4526 = vld [vmem:[#allocation4 + $0x111] sm:$0xff]
        %v4527 = vld [vmem:[#allocation4 + $0x121] sm:$0xff]
        %v4528 = vld [vmem:[#allocation4 + $0x129] sm:$0xff]
        %v4529 = vld [vmem:[#allocation4 + $0x139] sm:$0xff]
        %v4530 = vld [vmem:[#allocation4 + $0x141] sm:$0xff]
        %v4531 = vld [vmem:[#allocation4 + $0x151] sm:$0xff]
        %v4532 = vld [vmem:[#allocation4 + $0x159] sm:$0xff]
        %v4533 = vld [vmem:[#allocation4 + $0x169] sm:$0xff]
        %v4534 = vld [vmem:[#allocation4 + $0x171] sm:$0xff]
        %v4535 = vld [vmem:[#allocation4 + $0x2] sm:$0xff]
        %v4536 = vld [vmem:[#allocation4 + $0xa] sm:$0xff]
        %v4537 = vld [vmem:[#allocation4 + $0x1a] sm:$0xff]
        %v4538 = vld [vmem:[#allocation4 + $0x22] sm:$0xff]
        %v4539 = vld [vmem:[#allocation4 + $0x32] sm:$0xff]
        %v4540 = vld [vmem:[#allocation4 + $0x3a] sm:$0xff]
        %v4541 = vld [vmem:[#allocation4 + $0x4a] sm:$0xff]
        %v4542 = vld [vmem:[#allocation4 + $0x52] sm:$0xff]
        %v4543 = vld [vmem:[#allocation4 + $0x62] sm:$0xff]
        %v4544 = vld [vmem:[#allocation4 + $0x6a] sm:$0xff]
        %v4545 = vld [vmem:[#allocation4 + $0x7a] sm:$0xff]
        %v4546 = vld [vmem:[#allocation4 + $0x82] sm:$0xff]
        %v4547 = vld [vmem:[#allocation4 + $0x92] sm:$0xff]
        %v4548 = vld [vmem:[#allocation4 + $0x9a] sm:$0xff]
        %v4549 = vld [vmem:[#allocation4 + $0xaa] sm:$0xff]
        %v4550 = vld [vmem:[#allocation4 + $0xb2] sm:$0xff]
        %v4551 = vld [vmem:[#allocation4 + $0xc2] sm:$0xff]
        %v4552 = vld [vmem:[#allocation4 + $0xca] sm:$0xff]
        %v4553 = vld [vmem:[#allocation4 + $0xda] sm:$0xff]
        %v4554 = vld [vmem:[#allocation4 + $0xe2] sm:$0xff]
        %v4555 = vld [vmem:[#allocation4 + $0xf2] sm:$0xff]
        %v4556 = vld [vmem:[#allocation4 + $0xfa] sm:$0xff]
        %v4557 = vld [vmem:[#allocation4 + $0x10a] sm:$0xff]
        %v4558 = vld [vmem:[#allocation4 + $0x112] sm:$0xff]
        %v4559 = vld [vmem:[#allocation4 + $0x122] sm:$0xff]
        %v4560 = vld [vmem:[#allocation4 + $0x12a] sm:$0xff]
        %v4561 = vld [vmem:[#allocation4 + $0x13a] sm:$0xff]
        %v4562 = vld [vmem:[#allocation4 + $0x142] sm:$0xff]
        %v4563 = vld [vmem:[#allocation4 + $0x152] sm:$0xff]
        %v4564 = vld [vmem:[#allocation4 + $0x15a] sm:$0xff]
        %v4565 = vld [vmem:[#allocation4 + $0x16a] sm:$0xff]
        %v4566 = vld [vmem:[#allocation4 + $0x172] sm:$0xff]
        %v4567 = vld [vmem:[%s4438] sm:$0xff]
        %v4568 = vld [vmem:[%s4438 + $0x8] sm:$0xff]
        %v4569 = vld [vmem:[%s4438 + $0x18] sm:$0xff]
        %v4570 = vld [vmem:[%s4438 + $0x20] sm:$0xff]
        %v4571 = vld [vmem:[%s4438 + $0x30] sm:$0xff]
        %v4572 = vld [vmem:[%s4438 + $0x38] sm:$0xff]
        %v4573 = vld [vmem:[%s4438 + $0x48] sm:$0xff]
        %v4574 = vld [vmem:[%s4438 + $0x50] sm:$0xff]
        %v4575 = vld [vmem:[%s4438 + $0x60] sm:$0xff]
        %v4576 = vld [vmem:[%s4438 + $0x68] sm:$0xff]
        %v4577 = vld [vmem:[%s4438 + $0x78] sm:$0xff]
        %v4578 = vld [vmem:[%s4438 + $0x80] sm:$0xff]
        %v4579 = vld [vmem:[%s4438 + $0x90] sm:$0xff]
        %v4580 = vld [vmem:[%s4438 + $0x98] sm:$0xff]
        %v4581 = vld [vmem:[%s4438 + $0xa8] sm:$0xff]
        %v4582 = vld [vmem:[%s4438 + $0xb0] sm:$0xff]
        %v4583 = vld [vmem:[%s4438 + $0xc0] sm:$0xff]
        %v4584 = vld [vmem:[%s4438 + $0xc8] sm:$0xff]
        %v4585 = vld [vmem:[%s4438 + $0xd8] sm:$0xff]
        %v4586 = vld [vmem:[%s4438 + $0xe0] sm:$0xff]
        %v4587 = vld [vmem:[%s4438 + $0xf0] sm:$0xff]
        %v4588 = vld [vmem:[%s4438 + $0xf8] sm:$0xff]
        %v4589 = vld [vmem:[%s4438 + $0x108] sm:$0xff]
        %v4590 = vld [vmem:[%s4438 + $0x110] sm:$0xff]
        %v4591 = vld [vmem:[%s4438 + $0x120] sm:$0xff]
        %v4592 = vld [vmem:[%s4438 + $0x128] sm:$0xff]
        %v4593 = vld [vmem:[%s4438 + $0x138] sm:$0xff]
        %v4594 = vld [vmem:[%s4438 + $0x140] sm:$0xff]
        %v4595 = vld [vmem:[%s4438 + $0x150] sm:$0xff]
        %v4596 = vld [vmem:[%s4438 + $0x158] sm:$0xff]
        %v4597 = vld [vmem:[%s4438 + $0x168] sm:$0xff]
        %v4598 = vld [vmem:[%s4438 + $0x170] sm:$0xff]
        %v4599 = vld [vmem:[%s4438 + $0x1] sm:$0xff]
        %v4600 = vld [vmem:[%s4438 + $0x9] sm:$0xff]
        %v4601 = vld [vmem:[%s4438 + $0x19] sm:$0xff]
        %v4602 = vld [vmem:[%s4438 + $0x21] sm:$0xff]
        %v4603 = vld [vmem:[%s4438 + $0x31] sm:$0xff]
        %v4604 = vld [vmem:[%s4438 + $0x39] sm:$0xff]
        %v4605 = vld [vmem:[%s4438 + $0x49] sm:$0xff]
        %v4606 = vld [vmem:[%s4438 + $0x51] sm:$0xff]
        %v4607 = vld [vmem:[%s4438 + $0x61] sm:$0xff]
        %v4608 = vld [vmem:[%s4438 + $0x69] sm:$0xff]
        %v4609 = vld [vmem:[%s4438 + $0x79] sm:$0xff]
        %v4610 = vld [vmem:[%s4438 + $0x81] sm:$0xff]
        %v4611 = vld [vmem:[%s4438 + $0x91] sm:$0xff]
        %v4612 = vld [vmem:[%s4438 + $0x99] sm:$0xff]
        %v4613 = vld [vmem:[%s4438 + $0xa9] sm:$0xff]
        %v4614 = vld [vmem:[%s4438 + $0xb1] sm:$0xff]
        %v4615 = vld [vmem:[%s4438 + $0xc1] sm:$0xff]
        %v4616 = vld [vmem:[%s4438 + $0xc9] sm:$0xff]
        %v4617 = vld [vmem:[%s4438 + $0xd9] sm:$0xff]
        %v4618 = vld [vmem:[%s4438 + $0xe1] sm:$0xff]
        %v4619 = vld [vmem:[%s4438 + $0xf1] sm:$0xff]
        %v4620 = vld [vmem:[%s4438 + $0xf9] sm:$0xff]
        %v4621 = vld [vmem:[%s4438 + $0x109] sm:$0xff]
        %v4622 = vld [vmem:[%s4438 + $0x111] sm:$0xff]
        %v4623 = vld [vmem:[%s4438 + $0x121] sm:$0xff]
        %v4624 = vld [vmem:[%s4438 + $0x129] sm:$0xff]
        %v4625 = vld [vmem:[%s4438 + $0x139] sm:$0xff]
        %v4626 = vld [vmem:[%s4438 + $0x141] sm:$0xff]
        %v4627 = vld [vmem:[%s4438 + $0x151] sm:$0xff]
        %v4628 = vld [vmem:[%s4438 + $0x159] sm:$0xff]
        %v4629 = vld [vmem:[%s4438 + $0x169] sm:$0xff]
        %v4630 = vld [vmem:[%s4438 + $0x171] sm:$0xff]
        %v4631 = vld [vmem:[%s4438 + $0x2] sm:$0xff]
        %v4632 = vld [vmem:[%s4438 + $0xa] sm:$0xff]
        %v4633 = vld [vmem:[%s4438 + $0x1a] sm:$0xff]
        %v4634 = vld [vmem:[%s4438 + $0x22] sm:$0xff]
        %v4635 = vld [vmem:[%s4438 + $0x32] sm:$0xff]
        %v4636 = vld [vmem:[%s4438 + $0x3a] sm:$0xff]
        %v4637 = vld [vmem:[%s4438 + $0x4a] sm:$0xff]
        %v4638 = vld [vmem:[%s4438 + $0x52] sm:$0xff]
        %v4639 = vld [vmem:[%s4438 + $0x62] sm:$0xff]
        %v4640 = vld [vmem:[%s4438 + $0x6a] sm:$0xff]
        %v4641 = vld [vmem:[%s4438 + $0x7a] sm:$0xff]
        %v4642 = vld [vmem:[%s4438 + $0x82] sm:$0xff]
        %v4643 = vld [vmem:[%s4438 + $0x92] sm:$0xff]
        %v4644 = vld [vmem:[%s4438 + $0x9a] sm:$0xff]
        %v4645 = vld [vmem:[%s4438 + $0xaa] sm:$0xff]
        %v4646 = vld [vmem:[%s4438 + $0xb2] sm:$0xff]
        %v4647 = vld [vmem:[%s4438 + $0xc2] sm:$0xff]
        %v4648 = vld [vmem:[%s4438 + $0xca] sm:$0xff]
        %v4649 = vld [vmem:[%s4438 + $0xda] sm:$0xff]
        %v4650 = vld [vmem:[%s4438 + $0xe2] sm:$0xff]
        %v4651 = vld [vmem:[%s4438 + $0xf2] sm:$0xff]
        %v4652 = vld [vmem:[%s4438 + $0xfa] sm:$0xff]
        %v4653 = vld [vmem:[%s4438 + $0x10a] sm:$0xff]
        %v4654 = vld [vmem:[%s4438 + $0x112] sm:$0xff]
        %v4655 = vld [vmem:[%s4438 + $0x122] sm:$0xff]
        %v4656 = vld [vmem:[%s4438 + $0x12a] sm:$0xff]
        %v4657 = vld [vmem:[%s4438 + $0x13a] sm:$0xff]
        %v4658 = vld [vmem:[%s4438 + $0x142] sm:$0xff]
        %v4659 = vld [vmem:[%s4438 + $0x152] sm:$0xff]
        %v4660 = vld [vmem:[%s4438 + $0x15a] sm:$0xff]
        %v4661 = vld [vmem:[%s4438 + $0x16a] sm:$0xff]
        %v4662 = vld [vmem:[%s4438 + $0x172] sm:$0xff]
        %s4663 = scalar_lea.vmem [#allocation4], 48
        %v4664 = vld [vmem:[%s4663] sm:$0xff]
        %v4665 = vld [vmem:[%s4663 + $0x8] sm:$0xff]
        %v4666 = vld [vmem:[%s4663 + $0x18] sm:$0xff]
        %v4667 = vld [vmem:[%s4663 + $0x20] sm:$0xff]
        %v4668 = vld [vmem:[%s4663 + $0x30] sm:$0xff]
        %v4669 = vld [vmem:[%s4663 + $0x38] sm:$0xff]
        %v4670 = vld [vmem:[%s4663 + $0x48] sm:$0xff]
        %v4671 = vld [vmem:[%s4663 + $0x50] sm:$0xff]
        %v4672 = vld [vmem:[%s4663 + $0x60] sm:$0xff]
        %v4673 = vld [vmem:[%s4663 + $0x68] sm:$0xff]
        %v4674 = vld [vmem:[%s4663 + $0x78] sm:$0xff]
        %v4675 = vld [vmem:[%s4663 + $0x80] sm:$0xff]
        %v4676 = vld [vmem:[%s4663 + $0x90] sm:$0xff]
        %v4677 = vld [vmem:[%s4663 + $0x98] sm:$0xff]
        %v4678 = vld [vmem:[%s4663 + $0xa8] sm:$0xff]
        %v4679 = vld [vmem:[%s4663 + $0xb0] sm:$0xff]
        %v4680 = vld [vmem:[%s4663 + $0xc0] sm:$0xff]
        %v4681 = vld [vmem:[%s4663 + $0xc8] sm:$0xff]
        %v4682 = vld [vmem:[%s4663 + $0xd8] sm:$0xff]
        %v4683 = vld [vmem:[%s4663 + $0xe0] sm:$0xff]
        %v4684 = vld [vmem:[%s4663 + $0xf0] sm:$0xff]
        %v4685 = vld [vmem:[%s4663 + $0xf8] sm:$0xff]
        %v4686 = vld [vmem:[%s4663 + $0x108] sm:$0xff]
        %v4687 = vld [vmem:[%s4663 + $0x110] sm:$0xff]
        %v4688 = vld [vmem:[%s4663 + $0x120] sm:$0xff]
        %v4689 = vld [vmem:[%s4663 + $0x128] sm:$0xff]
        %v4690 = vld [vmem:[%s4663 + $0x138] sm:$0xff]
        %v4691 = vld [vmem:[%s4663 + $0x140] sm:$0xff]
        %v4692 = vld [vmem:[%s4663 + $0x150] sm:$0xff]
        %v4693 = vld [vmem:[%s4663 + $0x158] sm:$0xff]
        %v4694 = vld [vmem:[%s4663 + $0x168] sm:$0xff]
        %v4695 = vld [vmem:[%s4663 + $0x170] sm:$0xff]
        %v4696 = vld [vmem:[%s4663 + $0x1] sm:$0xff]
        %v4697 = vld [vmem:[%s4663 + $0x9] sm:$0xff]
        %v4698 = vld [vmem:[%s4663 + $0x19] sm:$0xff]
        %v4699 = vld [vmem:[%s4663 + $0x21] sm:$0xff]
        %v4700 = vld [vmem:[%s4663 + $0x31] sm:$0xff]
        %v4701 = vld [vmem:[%s4663 + $0x39] sm:$0xff]
        %v4702 = vld [vmem:[%s4663 + $0x49] sm:$0xff]
        %v4703 = vld [vmem:[%s4663 + $0x51] sm:$0xff]
        %v4704 = vld [vmem:[%s4663 + $0x61] sm:$0xff]
        %v4705 = vld [vmem:[%s4663 + $0x69] sm:$0xff]
        %v4706 = vld [vmem:[%s4663 + $0x79] sm:$0xff]
        %v4707 = vld [vmem:[%s4663 + $0x81] sm:$0xff]
        %v4708 = vld [vmem:[%s4663 + $0x91] sm:$0xff]
        %v4709 = vld [vmem:[%s4663 + $0x99] sm:$0xff]
        %v4710 = vld [vmem:[%s4663 + $0xa9] sm:$0xff]
        %v4711 = vld [vmem:[%s4663 + $0xb1] sm:$0xff]
        %v4712 = vld [vmem:[%s4663 + $0xc1] sm:$0xff]
        %v4713 = vld [vmem:[%s4663 + $0xc9] sm:$0xff]
        %v4714 = vld [vmem:[%s4663 + $0xd9] sm:$0xff]
        %v4715 = vld [vmem:[%s4663 + $0xe1] sm:$0xff]
        %v4716 = vld [vmem:[%s4663 + $0xf1] sm:$0xff]
        %v4717 = vld [vmem:[%s4663 + $0xf9] sm:$0xff]
        %v4718 = vld [vmem:[%s4663 + $0x109] sm:$0xff]
        %v4719 = vld [vmem:[%s4663 + $0x111] sm:$0xff]
        %v4720 = vld [vmem:[%s4663 + $0x121] sm:$0xff]
        %v4721 = vld [vmem:[%s4663 + $0x129] sm:$0xff]
        %v4722 = vld [vmem:[%s4663 + $0x139] sm:$0xff]
        %v4723 = vld [vmem:[%s4663 + $0x141] sm:$0xff]
        %v4724 = vld [vmem:[%s4663 + $0x151] sm:$0xff]
        %v4725 = vld [vmem:[%s4663 + $0x159] sm:$0xff]
        %v4726 = vld [vmem:[%s4663 + $0x169] sm:$0xff]
        %v4727 = vld [vmem:[%s4663 + $0x171] sm:$0xff]
        %v4728 = vld [vmem:[%s4663 + $0x2] sm:$0xff]
        %v4729 = vld [vmem:[%s4663 + $0xa] sm:$0xff]
        %v4730 = vld [vmem:[%s4663 + $0x1a] sm:$0xff]
        %v4731 = vld [vmem:[%s4663 + $0x22] sm:$0xff]
        %v4732 = vld [vmem:[%s4663 + $0x32] sm:$0xff]
        %v4733 = vld [vmem:[%s4663 + $0x3a] sm:$0xff]
        %v4734 = vld [vmem:[%s4663 + $0x4a] sm:$0xff]
        %v4735 = vld [vmem:[%s4663 + $0x52] sm:$0xff]
        %v4736 = vld [vmem:[%s4663 + $0x62] sm:$0xff]
        %v4737 = vld [vmem:[%s4663 + $0x6a] sm:$0xff]
        %v4738 = vld [vmem:[%s4663 + $0x7a] sm:$0xff]
        %v4739 = vld [vmem:[%s4663 + $0x82] sm:$0xff]
        %v4740 = vld [vmem:[%s4663 + $0x92] sm:$0xff]
        %v4741 = vld [vmem:[%s4663 + $0x9a] sm:$0xff]
        %v4742 = vld [vmem:[%s4663 + $0xaa] sm:$0xff]
        %v4743 = vld [vmem:[%s4663 + $0xb2] sm:$0xff]
        %v4744 = vld [vmem:[%s4663 + $0xc2] sm:$0xff]
        %v4745 = vld [vmem:[%s4663 + $0xca] sm:$0xff]
        %v4746 = vld [vmem:[%s4663 + $0xda] sm:$0xff]
        %v4747 = vld [vmem:[%s4663 + $0xe2] sm:$0xff]
        %v4748 = vld [vmem:[%s4663 + $0xf2] sm:$0xff]
        %v4749 = vld [vmem:[%s4663 + $0xfa] sm:$0xff]
        %v4750 = vld [vmem:[%s4663 + $0x10a] sm:$0xff]
        %v4751 = vld [vmem:[%s4663 + $0x112] sm:$0xff]
        %v4752 = vld [vmem:[%s4663 + $0x122] sm:$0xff]
        %v4753 = vld [vmem:[%s4663 + $0x12a] sm:$0xff]
        %v4754 = vld [vmem:[%s4663 + $0x13a] sm:$0xff]
        %v4755 = vld [vmem:[%s4663 + $0x142] sm:$0xff]
        %v4756 = vld [vmem:[%s4663 + $0x152] sm:$0xff]
        %v4757 = vld [vmem:[%s4663 + $0x15a] sm:$0xff]
        %v4758 = vld [vmem:[%s4663 + $0x16a] sm:$0xff]
        %v4759 = vld [vmem:[%s4663 + $0x172] sm:$0xff]
        %4792 = vrot.lane.b32.xlu0 %v4503, 16
        %v4793 = vpop.permute.xlu0 %4792
        %4794 = vrot.lane.b32.xlu0 %v4504, 16
        %v4795 = vpop.permute.xlu0 %4794
        %4796 = vrot.lane.b32.xlu0 %v4505, 16
        %v4797 = vpop.permute.xlu0 %4796
        %4798 = vrot.lane.b32.xlu0 %v4506, 16
        %v4799 = vpop.permute.xlu0 %4798
        %4800 = vrot.lane.b32.xlu0 %v4507, 16
        %v4801 = vpop.permute.xlu0 %4800
        %4802 = vrot.lane.b32.xlu0 %v4508, 16
        %v4803 = vpop.permute.xlu0 %4802
        %4804 = vrot.lane.b32.xlu0 %v4509, 16
        %v4805 = vpop.permute.xlu0 %4804
        %4806 = vrot.lane.b32.xlu0 %v4510, 16
        %v4807 = vpop.permute.xlu0 %4806
        %4808 = vrot.lane.b32.xlu0 %v4511, 16
        %v4809 = vpop.permute.xlu0 %4808
        %4810 = vrot.lane.b32.xlu0 %v4512, 16
        %v4811 = vpop.permute.xlu0 %4810
        %4812 = vrot.lane.b32.xlu0 %v4513, 16
        %v4813 = vpop.permute.xlu0 %4812
        %4814 = vrot.lane.b32.xlu0 %v4514, 16
        %v4815 = vpop.permute.xlu0 %4814
        %4816 = vrot.lane.b32.xlu0 %v4515, 16
        %v4817 = vpop.permute.xlu0 %4816
        %4818 = vrot.lane.b32.xlu0 %v4516, 16
        %v4819 = vpop.permute.xlu0 %4818
        %4820 = vrot.lane.b32.xlu0 %v4517, 16
        %v4821 = vpop.permute.xlu0 %4820
        %4822 = vrot.lane.b32.xlu0 %v4518, 16
        %v4823 = vpop.permute.xlu0 %4822
        %4824 = vrot.lane.b32.xlu0 %v4519, 16
        %v4825 = vpop.permute.xlu0 %4824
        %4826 = vrot.lane.b32.xlu0 %v4520, 16
        %v4827 = vpop.permute.xlu0 %4826
        %4828 = vrot.lane.b32.xlu0 %v4521, 16
        %v4829 = vpop.permute.xlu0 %4828
        %4830 = vrot.lane.b32.xlu0 %v4522, 16
        %v4831 = vpop.permute.xlu0 %4830
        %4832 = vrot.lane.b32.xlu0 %v4523, 16
        %v4833 = vpop.permute.xlu0 %4832
        %4834 = vrot.lane.b32.xlu0 %v4524, 16
        %v4835 = vpop.permute.xlu0 %4834
        %4836 = vrot.lane.b32.xlu0 %v4525, 16
        %v4837 = vpop.permute.xlu0 %4836
        %4838 = vrot.lane.b32.xlu0 %v4526, 16
        %v4839 = vpop.permute.xlu0 %4838
        %4840 = vrot.lane.b32.xlu0 %v4527, 16
        %v4841 = vpop.permute.xlu0 %4840
        %4842 = vrot.lane.b32.xlu0 %v4528, 16
        %v4843 = vpop.permute.xlu0 %4842
        %4844 = vrot.lane.b32.xlu0 %v4529, 16
        %v4845 = vpop.permute.xlu0 %4844
        %4846 = vrot.lane.b32.xlu0 %v4530, 16
        %v4847 = vpop.permute.xlu0 %4846
        %4848 = vrot.lane.b32.xlu0 %v4531, 16
        %v4849 = vpop.permute.xlu0 %4848
        %4850 = vrot.lane.b32.xlu0 %v4532, 16
        %v4851 = vpop.permute.xlu0 %4850
        %4852 = vrot.lane.b32.xlu0 %v4533, 16
        %v4853 = vpop.permute.xlu0 %4852
        %4854 = vrot.lane.b32.xlu0 %v4534, 16
        %v4855 = vpop.permute.xlu0 %4854
        %4920 = vrot.lane.b32.xlu0 %v4535, 32
        %v4921 = vpop.permute.xlu0 %4920
        %4922 = vrot.lane.b32.xlu0 %v4536, 32
        %v4923 = vpop.permute.xlu0 %4922
        %4924 = vrot.lane.b32.xlu0 %v4537, 32
        %v4925 = vpop.permute.xlu0 %4924
        %4926 = vrot.lane.b32.xlu0 %v4538, 32
        %v4927 = vpop.permute.xlu0 %4926
        %4928 = vrot.lane.b32.xlu0 %v4539, 32
        %v4929 = vpop.permute.xlu0 %4928
        %4930 = vrot.lane.b32.xlu0 %v4540, 32
        %v4931 = vpop.permute.xlu0 %4930
        %4932 = vrot.lane.b32.xlu0 %v4541, 32
        %v4933 = vpop.permute.xlu0 %4932
        %4934 = vrot.lane.b32.xlu0 %v4542, 32
        %v4935 = vpop.permute.xlu0 %4934
        %4936 = vrot.lane.b32.xlu0 %v4543, 32
        %v4937 = vpop.permute.xlu0 %4936
        %4938 = vrot.lane.b32.xlu0 %v4544, 32
        %v4939 = vpop.permute.xlu0 %4938
        %4940 = vrot.lane.b32.xlu0 %v4545, 32
        %v4941 = vpop.permute.xlu0 %4940
        %4942 = vrot.lane.b32.xlu0 %v4546, 32
        %v4943 = vpop.permute.xlu0 %4942
        %4944 = vrot.lane.b32.xlu0 %v4547, 32
        %v4945 = vpop.permute.xlu0 %4944
        %4946 = vrot.lane.b32.xlu0 %v4548, 32
        %v4947 = vpop.permute.xlu0 %4946
        %4948 = vrot.lane.b32.xlu0 %v4549, 32
        %v4949 = vpop.permute.xlu0 %4948
        %4950 = vrot.lane.b32.xlu0 %v4550, 32
        %v4951 = vpop.permute.xlu0 %4950
        %4952 = vrot.lane.b32.xlu0 %v4551, 32
        %v4953 = vpop.permute.xlu0 %4952
        %4954 = vrot.lane.b32.xlu0 %v4552, 32
        %v4955 = vpop.permute.xlu0 %4954
        %4956 = vrot.lane.b32.xlu0 %v4553, 32
        %v4957 = vpop.permute.xlu0 %4956
        %4958 = vrot.lane.b32.xlu0 %v4554, 32
        %v4959 = vpop.permute.xlu0 %4958
        %4960 = vrot.lane.b32.xlu0 %v4555, 32
        %v4961 = vpop.permute.xlu0 %4960
        %4962 = vrot.lane.b32.xlu0 %v4556, 32
        %v4963 = vpop.permute.xlu0 %4962
        %4964 = vrot.lane.b32.xlu0 %v4557, 32
        %v4965 = vpop.permute.xlu0 %4964
        %4966 = vrot.lane.b32.xlu0 %v4558, 32
        %v4967 = vpop.permute.xlu0 %4966
        %4968 = vrot.lane.b32.xlu0 %v4559, 32
        %v4969 = vpop.permute.xlu0 %4968
        %4970 = vrot.lane.b32.xlu0 %v4560, 32
        %v4971 = vpop.permute.xlu0 %4970
        %4972 = vrot.lane.b32.xlu0 %v4561, 32
        %v4973 = vpop.permute.xlu0 %4972
        %4974 = vrot.lane.b32.xlu0 %v4562, 32
        %v4975 = vpop.permute.xlu0 %4974
        %4976 = vrot.lane.b32.xlu0 %v4563, 32
        %v4977 = vpop.permute.xlu0 %4976
        %4978 = vrot.lane.b32.xlu0 %v4564, 32
        %v4979 = vpop.permute.xlu0 %4978
        %4980 = vrot.lane.b32.xlu0 %v4565, 32
        %v4981 = vpop.permute.xlu0 %4980
        %4982 = vrot.lane.b32.xlu0 %v4566, 32
        %v4983 = vpop.permute.xlu0 %4982
        %5048 = vrot.lane.b32.xlu0 %v4567, 48
        %v5049 = vpop.permute.xlu0 %5048
        %5050 = vrot.lane.b32.xlu0 %v4568, 48
        %v5051 = vpop.permute.xlu0 %5050
        %5052 = vrot.lane.b32.xlu0 %v4569, 48
        %v5053 = vpop.permute.xlu0 %5052
        %5054 = vrot.lane.b32.xlu0 %v4570, 48
        %v5055 = vpop.permute.xlu0 %5054
        %5056 = vrot.lane.b32.xlu0 %v4571, 48
        %v5057 = vpop.permute.xlu0 %5056
        %5058 = vrot.lane.b32.xlu0 %v4572, 48
        %v5059 = vpop.permute.xlu0 %5058
        %5060 = vrot.lane.b32.xlu0 %v4573, 48
        %v5061 = vpop.permute.xlu0 %5060
        %5062 = vrot.lane.b32.xlu0 %v4574, 48
        %v5063 = vpop.permute.xlu0 %5062
        %5064 = vrot.lane.b32.xlu0 %v4575, 48
        %v5065 = vpop.permute.xlu0 %5064
        %5066 = vrot.lane.b32.xlu0 %v4576, 48
        %v5067 = vpop.permute.xlu0 %5066
        %5068 = vrot.lane.b32.xlu0 %v4577, 48
        %v5069 = vpop.permute.xlu0 %5068
        %5070 = vrot.lane.b32.xlu0 %v4578, 48
        %v5071 = vpop.permute.xlu0 %5070
        %5072 = vrot.lane.b32.xlu0 %v4579, 48
        %v5073 = vpop.permute.xlu0 %5072
        %5074 = vrot.lane.b32.xlu0 %v4580, 48
        %v5075 = vpop.permute.xlu0 %5074
        %5076 = vrot.lane.b32.xlu0 %v4581, 48
        %v5077 = vpop.permute.xlu0 %5076
        %5078 = vrot.lane.b32.xlu0 %v4582, 48
        %v5079 = vpop.permute.xlu0 %5078
        %5080 = vrot.lane.b32.xlu0 %v4583, 48
        %v5081 = vpop.permute.xlu0 %5080
        %5082 = vrot.lane.b32.xlu0 %v4584, 48
        %v5083 = vpop.permute.xlu0 %5082
        %5084 = vrot.lane.b32.xlu0 %v4585, 48
        %v5085 = vpop.permute.xlu0 %5084
        %5086 = vrot.lane.b32.xlu0 %v4586, 48
        %v5087 = vpop.permute.xlu0 %5086
        %5088 = vrot.lane.b32.xlu0 %v4587, 48
        %v5089 = vpop.permute.xlu0 %5088
        %5090 = vrot.lane.b32.xlu0 %v4588, 48
        %v5091 = vpop.permute.xlu0 %5090
        %5092 = vrot.lane.b32.xlu0 %v4589, 48
        %v5093 = vpop.permute.xlu0 %5092
        %5094 = vrot.lane.b32.xlu0 %v4590, 48
        %v5095 = vpop.permute.xlu0 %5094
        %5096 = vrot.lane.b32.xlu0 %v4591, 48
        %v5097 = vpop.permute.xlu0 %5096
        %5098 = vrot.lane.b32.xlu0 %v4592, 48
        %v5099 = vpop.permute.xlu0 %5098
        %5100 = vrot.lane.b32.xlu0 %v4593, 48
        %v5101 = vpop.permute.xlu0 %5100
        %5102 = vrot.lane.b32.xlu0 %v4594, 48
        %v5103 = vpop.permute.xlu0 %5102
        %5104 = vrot.lane.b32.xlu0 %v4595, 48
        %v5105 = vpop.permute.xlu0 %5104
        %5106 = vrot.lane.b32.xlu0 %v4596, 48
        %v5107 = vpop.permute.xlu0 %5106
        %5108 = vrot.lane.b32.xlu0 %v4597, 48
        %v5109 = vpop.permute.xlu0 %5108
        %5110 = vrot.lane.b32.xlu0 %v4598, 48
        %v5111 = vpop.permute.xlu0 %5110
        %5176 = vrot.lane.b32.xlu0 %v4599, 64
        %v5177 = vpop.permute.xlu0 %5176
        %5178 = vrot.lane.b32.xlu0 %v4600, 64
        %v5179 = vpop.permute.xlu0 %5178
        %5180 = vrot.lane.b32.xlu0 %v4601, 64
        %v5181 = vpop.permute.xlu0 %5180
        %5182 = vrot.lane.b32.xlu0 %v4602, 64
        %v5183 = vpop.permute.xlu0 %5182
        %5184 = vrot.lane.b32.xlu0 %v4603, 64
        %v5185 = vpop.permute.xlu0 %5184
        %5186 = vrot.lane.b32.xlu0 %v4604, 64
        %v5187 = vpop.permute.xlu0 %5186
        %5188 = vrot.lane.b32.xlu0 %v4605, 64
        %v5189 = vpop.permute.xlu0 %5188
        %5190 = vrot.lane.b32.xlu0 %v4606, 64
        %v5191 = vpop.permute.xlu0 %5190
        %5192 = vrot.lane.b32.xlu0 %v4607, 64
        %v5193 = vpop.permute.xlu0 %5192
        %5194 = vrot.lane.b32.xlu0 %v4608, 64
        %v5195 = vpop.permute.xlu0 %5194
        %5196 = vrot.lane.b32.xlu0 %v4609, 64
        %v5197 = vpop.permute.xlu0 %5196
        %5198 = vrot.lane.b32.xlu0 %v4610, 64
        %v5199 = vpop.permute.xlu0 %5198
        %5200 = vrot.lane.b32.xlu0 %v4611, 64
        %v5201 = vpop.permute.xlu0 %5200
        %5202 = vrot.lane.b32.xlu0 %v4612, 64
        %v5203 = vpop.permute.xlu0 %5202
        %5204 = vrot.lane.b32.xlu0 %v4613, 64
        %v5205 = vpop.permute.xlu0 %5204
        %5206 = vrot.lane.b32.xlu0 %v4614, 64
        %v5207 = vpop.permute.xlu0 %5206
        %5208 = vrot.lane.b32.xlu0 %v4615, 64
        %v5209 = vpop.permute.xlu0 %5208
        %5210 = vrot.lane.b32.xlu0 %v4616, 64
        %v5211 = vpop.permute.xlu0 %5210
        %5212 = vrot.lane.b32.xlu0 %v4617, 64
        %v5213 = vpop.permute.xlu0 %5212
        %5214 = vrot.lane.b32.xlu0 %v4618, 64
        %v5215 = vpop.permute.xlu0 %5214
        %5216 = vrot.lane.b32.xlu0 %v4619, 64
        %v5217 = vpop.permute.xlu0 %5216
        %5218 = vrot.lane.b32.xlu0 %v4620, 64
        %v5219 = vpop.permute.xlu0 %5218
        %5220 = vrot.lane.b32.xlu0 %v4621, 64
        %v5221 = vpop.permute.xlu0 %5220
        %5222 = vrot.lane.b32.xlu0 %v4622, 64
        %v5223 = vpop.permute.xlu0 %5222
        %5224 = vrot.lane.b32.xlu0 %v4623, 64
        %v5225 = vpop.permute.xlu0 %5224
        %5226 = vrot.lane.b32.xlu0 %v4624, 64
        %v5227 = vpop.permute.xlu0 %5226
        %5228 = vrot.lane.b32.xlu0 %v4625, 64
        %v5229 = vpop.permute.xlu0 %5228
        %5230 = vrot.lane.b32.xlu0 %v4626, 64
        %v5231 = vpop.permute.xlu0 %5230
        %5232 = vrot.lane.b32.xlu0 %v4627, 64
        %v5233 = vpop.permute.xlu0 %5232
        %5234 = vrot.lane.b32.xlu0 %v4628, 64
        %v5235 = vpop.permute.xlu0 %5234
        %5236 = vrot.lane.b32.xlu0 %v4629, 64
        %v5237 = vpop.permute.xlu0 %5236
        %5238 = vrot.lane.b32.xlu0 %v4630, 64
        %v5239 = vpop.permute.xlu0 %5238
        %5304 = vrot.lane.b32.xlu0 %v4631, 80
        %v5305 = vpop.permute.xlu0 %5304
        %5306 = vrot.lane.b32.xlu0 %v4632, 80
        %v5307 = vpop.permute.xlu0 %5306
        %5308 = vrot.lane.b32.xlu0 %v4633, 80
        %v5309 = vpop.permute.xlu0 %5308
        %5310 = vrot.lane.b32.xlu0 %v4634, 80
        %v5311 = vpop.permute.xlu0 %5310
        %5312 = vrot.lane.b32.xlu0 %v4635, 80
        %v5313 = vpop.permute.xlu0 %5312
        %5314 = vrot.lane.b32.xlu0 %v4636, 80
        %v5315 = vpop.permute.xlu0 %5314
        %5316 = vrot.lane.b32.xlu0 %v4637, 80
        %v5317 = vpop.permute.xlu0 %5316
        %5318 = vrot.lane.b32.xlu0 %v4638, 80
        %v5319 = vpop.permute.xlu0 %5318
        %5320 = vrot.lane.b32.xlu0 %v4639, 80
        %v5321 = vpop.permute.xlu0 %5320
        %5322 = vrot.lane.b32.xlu0 %v4640, 80
        %v5323 = vpop.permute.xlu0 %5322
        %5324 = vrot.lane.b32.xlu0 %v4641, 80
        %v5325 = vpop.permute.xlu0 %5324
        %5326 = vrot.lane.b32.xlu0 %v4642, 80
        %v5327 = vpop.permute.xlu0 %5326
        %5328 = vrot.lane.b32.xlu0 %v4643, 80
        %v5329 = vpop.permute.xlu0 %5328
        %5330 = vrot.lane.b32.xlu0 %v4644, 80
        %v5331 = vpop.permute.xlu0 %5330
        %5332 = vrot.lane.b32.xlu0 %v4645, 80
        %v5333 = vpop.permute.xlu0 %5332
        %5334 = vrot.lane.b32.xlu0 %v4646, 80
        %v5335 = vpop.permute.xlu0 %5334
        %5336 = vrot.lane.b32.xlu0 %v4647, 80
        %v5337 = vpop.permute.xlu0 %5336
        %5338 = vrot.lane.b32.xlu0 %v4648, 80
        %v5339 = vpop.permute.xlu0 %5338
        %5340 = vrot.lane.b32.xlu0 %v4649, 80
        %v5341 = vpop.permute.xlu0 %5340
        %5342 = vrot.lane.b32.xlu0 %v4650, 80
        %v5343 = vpop.permute.xlu0 %5342
        %5344 = vrot.lane.b32.xlu0 %v4651, 80
        %v5345 = vpop.permute.xlu0 %5344
        %5346 = vrot.lane.b32.xlu0 %v4652, 80
        %v5347 = vpop.permute.xlu0 %5346
        %5348 = vrot.lane.b32.xlu0 %v4653, 80
        %v5349 = vpop.permute.xlu0 %5348
        %5350 = vrot.lane.b32.xlu0 %v4654, 80
        %v5351 = vpop.permute.xlu0 %5350
        %5352 = vrot.lane.b32.xlu0 %v4655, 80
        %v5353 = vpop.permute.xlu0 %5352
        %5354 = vrot.lane.b32.xlu0 %v4656, 80
        %v5355 = vpop.permute.xlu0 %5354
        %5356 = vrot.lane.b32.xlu0 %v4657, 80
        %v5357 = vpop.permute.xlu0 %5356
        %5358 = vrot.lane.b32.xlu0 %v4658, 80
        %v5359 = vpop.permute.xlu0 %5358
        %5360 = vrot.lane.b32.xlu0 %v4659, 80
        %v5361 = vpop.permute.xlu0 %5360
        %5362 = vrot.lane.b32.xlu0 %v4660, 80
        %v5363 = vpop.permute.xlu0 %5362
        %5364 = vrot.lane.b32.xlu0 %v4661, 80
        %v5365 = vpop.permute.xlu0 %5364
        %5366 = vrot.lane.b32.xlu0 %v4662, 80
        %v5367 = vpop.permute.xlu0 %5366
        %5432 = vrot.lane.b32.xlu0 %v4664, 96
        %v5433 = vpop.permute.xlu0 %5432
        %5434 = vrot.lane.b32.xlu0 %v4665, 96
        %v5435 = vpop.permute.xlu0 %5434
        %5436 = vrot.lane.b32.xlu0 %v4666, 96
        %v5437 = vpop.permute.xlu0 %5436
        %5438 = vrot.lane.b32.xlu0 %v4667, 96
        %v5439 = vpop.permute.xlu0 %5438
        %5440 = vrot.lane.b32.xlu0 %v4668, 96
        %v5441 = vpop.permute.xlu0 %5440
        %5442 = vrot.lane.b32.xlu0 %v4669, 96
        %v5443 = vpop.permute.xlu0 %5442
        %5444 = vrot.lane.b32.xlu0 %v4670, 96
        %v5445 = vpop.permute.xlu0 %5444
        %5446 = vrot.lane.b32.xlu0 %v4671, 96
        %v5447 = vpop.permute.xlu0 %5446
        %5448 = vrot.lane.b32.xlu0 %v4672, 96
        %v5449 = vpop.permute.xlu0 %5448
        %5450 = vrot.lane.b32.xlu0 %v4673, 96
        %v5451 = vpop.permute.xlu0 %5450
        %5452 = vrot.lane.b32.xlu0 %v4674, 96
        %v5453 = vpop.permute.xlu0 %5452
        %5454 = vrot.lane.b32.xlu0 %v4675, 96
        %v5455 = vpop.permute.xlu0 %5454
        %5456 = vrot.lane.b32.xlu0 %v4676, 96
        %v5457 = vpop.permute.xlu0 %5456
        %5458 = vrot.lane.b32.xlu0 %v4677, 96
        %v5459 = vpop.permute.xlu0 %5458
        %5460 = vrot.lane.b32.xlu0 %v4678, 96
        %v5461 = vpop.permute.xlu0 %5460
        %5462 = vrot.lane.b32.xlu0 %v4679, 96
        %v5463 = vpop.permute.xlu0 %5462
        %5464 = vrot.lane.b32.xlu0 %v4680, 96
        %v5465 = vpop.permute.xlu0 %5464
        %5466 = vrot.lane.b32.xlu0 %v4681, 96
        %v5467 = vpop.permute.xlu0 %5466
        %5468 = vrot.lane.b32.xlu0 %v4682, 96
        %v5469 = vpop.permute.xlu0 %5468
        %5470 = vrot.lane.b32.xlu0 %v4683, 96
        %v5471 = vpop.permute.xlu0 %5470
        %5472 = vrot.lane.b32.xlu0 %v4684, 96
        %v5473 = vpop.permute.xlu0 %5472
        %5474 = vrot.lane.b32.xlu0 %v4685, 96
        %v5475 = vpop.permute.xlu0 %5474
        %5476 = vrot.lane.b32.xlu0 %v4686, 96
        %v5477 = vpop.permute.xlu0 %5476
        %5478 = vrot.lane.b32.xlu0 %v4687, 96
        %v5479 = vpop.permute.xlu0 %5478
        %5480 = vrot.lane.b32.xlu0 %v4688, 96
        %v5481 = vpop.permute.xlu0 %5480
        %5482 = vrot.lane.b32.xlu0 %v4689, 96
        %v5483 = vpop.permute.xlu0 %5482
        %5484 = vrot.lane.b32.xlu0 %v4690, 96
        %v5485 = vpop.permute.xlu0 %5484
        %5486 = vrot.lane.b32.xlu0 %v4691, 96
        %v5487 = vpop.permute.xlu0 %5486
        %5488 = vrot.lane.b32.xlu0 %v4692, 96
        %v5489 = vpop.permute.xlu0 %5488
        %5490 = vrot.lane.b32.xlu0 %v4693, 96
        %v5491 = vpop.permute.xlu0 %5490
        %5492 = vrot.lane.b32.xlu0 %v4694, 96
        %v5493 = vpop.permute.xlu0 %5492
        %5494 = vrot.lane.b32.xlu0 %v4695, 96
        %v5495 = vpop.permute.xlu0 %5494
        %5560 = vrot.lane.b32.xlu0 %v4696, 112
        %v5561 = vpop.permute.xlu0 %5560
        %5562 = vrot.lane.b32.xlu0 %v4697, 112
        %v5563 = vpop.permute.xlu0 %5562
        %5564 = vrot.lane.b32.xlu0 %v4698, 112
        %v5565 = vpop.permute.xlu0 %5564
        %5566 = vrot.lane.b32.xlu0 %v4699, 112
        %v5567 = vpop.permute.xlu0 %5566
        %5568 = vrot.lane.b32.xlu0 %v4700, 112
        %v5569 = vpop.permute.xlu0 %5568
        %5570 = vrot.lane.b32.xlu0 %v4701, 112
        %v5571 = vpop.permute.xlu0 %5570
        %5572 = vrot.lane.b32.xlu0 %v4702, 112
        %v5573 = vpop.permute.xlu0 %5572
        %5574 = vrot.lane.b32.xlu0 %v4703, 112
        %v5575 = vpop.permute.xlu0 %5574
        %5576 = vrot.lane.b32.xlu0 %v4704, 112
        %v5577 = vpop.permute.xlu0 %5576
        %5578 = vrot.lane.b32.xlu0 %v4705, 112
        %v5579 = vpop.permute.xlu0 %5578
        %5580 = vrot.lane.b32.xlu0 %v4706, 112
        %v5581 = vpop.permute.xlu0 %5580
        %5582 = vrot.lane.b32.xlu0 %v4707, 112
        %v5583 = vpop.permute.xlu0 %5582
        %5584 = vrot.lane.b32.xlu0 %v4708, 112
        %v5585 = vpop.permute.xlu0 %5584
        %5586 = vrot.lane.b32.xlu0 %v4709, 112
        %v5587 = vpop.permute.xlu0 %5586
        %5588 = vrot.lane.b32.xlu0 %v4710, 112
        %v5589 = vpop.permute.xlu0 %5588
        %5590 = vrot.lane.b32.xlu0 %v4711, 112
        %v5591 = vpop.permute.xlu0 %5590
        %5592 = vrot.lane.b32.xlu0 %v4712, 112
        %v5593 = vpop.permute.xlu0 %5592
        %5594 = vrot.lane.b32.xlu0 %v4713, 112
        %v5595 = vpop.permute.xlu0 %5594
        %5596 = vrot.lane.b32.xlu0 %v4714, 112
        %v5597 = vpop.permute.xlu0 %5596
        %5598 = vrot.lane.b32.xlu0 %v4715, 112
        %v5599 = vpop.permute.xlu0 %5598
        %5600 = vrot.lane.b32.xlu0 %v4716, 112
        %v5601 = vpop.permute.xlu0 %5600
        %5602 = vrot.lane.b32.xlu0 %v4717, 112
        %v5603 = vpop.permute.xlu0 %5602
        %5604 = vrot.lane.b32.xlu0 %v4718, 112
        %v5605 = vpop.permute.xlu0 %5604
        %5606 = vrot.lane.b32.xlu0 %v4719, 112
        %v5607 = vpop.permute.xlu0 %5606
        %5608 = vrot.lane.b32.xlu0 %v4720, 112
        %v5609 = vpop.permute.xlu0 %5608
        %5610 = vrot.lane.b32.xlu0 %v4721, 112
        %v5611 = vpop.permute.xlu0 %5610
        %5612 = vrot.lane.b32.xlu0 %v4722, 112
        %v5613 = vpop.permute.xlu0 %5612
        %5614 = vrot.lane.b32.xlu0 %v4723, 112
        %v5615 = vpop.permute.xlu0 %5614
        %5616 = vrot.lane.b32.xlu0 %v4724, 112
        %v5617 = vpop.permute.xlu0 %5616
        %5618 = vrot.lane.b32.xlu0 %v4725, 112
        %v5619 = vpop.permute.xlu0 %5618
        %5620 = vrot.lane.b32.xlu0 %v4726, 112
        %v5621 = vpop.permute.xlu0 %5620
        %5622 = vrot.lane.b32.xlu0 %v4727, 112
        %v5623 = vpop.permute.xlu0 %5622
        %v5656 = vsel %vm444, %v4471, %v4793
        %v5657 = vsel %vm444, %v4472, %v4795
        %v5658 = vsel %vm444, %v4473, %v4797
        %v5659 = vsel %vm444, %v4474, %v4799
        %v5660 = vsel %vm444, %v4475, %v4801
        %v5661 = vsel %vm444, %v4476, %v4803
        %v5662 = vsel %vm444, %v4477, %v4805
        %v5663 = vsel %vm444, %v4478, %v4807
        %v5664 = vsel %vm444, %v4479, %v4809
        %v5665 = vsel %vm444, %v4480, %v4811
        %v5666 = vsel %vm444, %v4481, %v4813
        %v5667 = vsel %vm444, %v4482, %v4815
        %v5668 = vsel %vm444, %v4483, %v4817
        %v5669 = vsel %vm444, %v4484, %v4819
        %v5670 = vsel %vm444, %v4485, %v4821
        %v5671 = vsel %vm444, %v4486, %v4823
        %v5672 = vsel %vm444, %v4487, %v4825
        %v5673 = vsel %vm444, %v4488, %v4827
        %v5674 = vsel %vm444, %v4489, %v4829
        %v5675 = vsel %vm444, %v4490, %v4831
        %v5676 = vsel %vm444, %v4491, %v4833
        %v5677 = vsel %vm444, %v4492, %v4835
        %v5678 = vsel %vm444, %v4493, %v4837
        %v5679 = vsel %vm444, %v4494, %v4839
        %v5680 = vsel %vm444, %v4495, %v4841
        %v5681 = vsel %vm444, %v4496, %v4843
        %v5682 = vsel %vm444, %v4497, %v4845
        %v5683 = vsel %vm444, %v4498, %v4847
        %v5684 = vsel %vm444, %v4499, %v4849
        %v5685 = vsel %vm444, %v4500, %v4851
        %v5686 = vsel %vm444, %v4501, %v4853
        %v5687 = vsel %vm444, %v4502, %v4855
        %v5688 = vsel %vm3927, %v5656, %v4921
        %v5689 = vsel %vm3927, %v5657, %v4923
        %v5690 = vsel %vm3927, %v5658, %v4925
        %v5691 = vsel %vm3927, %v5659, %v4927
        %v5692 = vsel %vm3927, %v5660, %v4929
        %v5693 = vsel %vm3927, %v5661, %v4931
        %v5694 = vsel %vm3927, %v5662, %v4933
        %v5695 = vsel %vm3927, %v5663, %v4935
        %v5696 = vsel %vm3927, %v5664, %v4937
        %v5697 = vsel %vm3927, %v5665, %v4939
        %v5698 = vsel %vm3927, %v5666, %v4941
        %v5699 = vsel %vm3927, %v5667, %v4943
        %v5700 = vsel %vm3927, %v5668, %v4945
        %v5701 = vsel %vm3927, %v5669, %v4947
        %v5702 = vsel %vm3927, %v5670, %v4949
        %v5703 = vsel %vm3927, %v5671, %v4951
        %v5704 = vsel %vm3927, %v5672, %v4953
        %v5705 = vsel %vm3927, %v5673, %v4955
        %v5706 = vsel %vm3927, %v5674, %v4957
        %v5707 = vsel %vm3927, %v5675, %v4959
        %v5708 = vsel %vm3927, %v5676, %v4961
        %v5709 = vsel %vm3927, %v5677, %v4963
        %v5710 = vsel %vm3927, %v5678, %v4965
        %v5711 = vsel %vm3927, %v5679, %v4967
        %v5712 = vsel %vm3927, %v5680, %v4969
        %v5713 = vsel %vm3927, %v5681, %v4971
        %v5714 = vsel %vm3927, %v5682, %v4973
        %v5715 = vsel %vm3927, %v5683, %v4975
        %v5716 = vsel %vm3927, %v5684, %v4977
        %v5717 = vsel %vm3927, %v5685, %v4979
        %v5718 = vsel %vm3927, %v5686, %v4981
        %v5719 = vsel %vm3927, %v5687, %v4983
        %v5720 = vsel %vm2108, %v5688, %v5049
        %v5721 = vsel %vm2108, %v5689, %v5051
        %v5722 = vsel %vm2108, %v5690, %v5053
        %v5723 = vsel %vm2108, %v5691, %v5055
        %v5724 = vsel %vm2108, %v5692, %v5057
        %v5725 = vsel %vm2108, %v5693, %v5059
        %v5726 = vsel %vm2108, %v5694, %v5061
        %v5727 = vsel %vm2108, %v5695, %v5063
        %v5728 = vsel %vm2108, %v5696, %v5065
        %v5729 = vsel %vm2108, %v5697, %v5067
        %v5730 = vsel %vm2108, %v5698, %v5069
        %v5731 = vsel %vm2108, %v5699, %v5071
        %v5732 = vsel %vm2108, %v5700, %v5073
        %v5733 = vsel %vm2108, %v5701, %v5075
        %v5734 = vsel %vm2108, %v5702, %v5077
        %v5735 = vsel %vm2108, %v5703, %v5079
        %v5736 = vsel %vm2108, %v5704, %v5081
        %v5737 = vsel %vm2108, %v5705, %v5083
        %v5738 = vsel %vm2108, %v5706, %v5085
        %v5739 = vsel %vm2108, %v5707, %v5087
        %v5740 = vsel %vm2108, %v5708, %v5089
        %v5741 = vsel %vm2108, %v5709, %v5091
        %v5742 = vsel %vm2108, %v5710, %v5093
        %v5743 = vsel %vm2108, %v5711, %v5095
        %v5744 = vsel %vm2108, %v5712, %v5097
        %v5745 = vsel %vm2108, %v5713, %v5099
        %v5746 = vsel %vm2108, %v5714, %v5101
        %v5747 = vsel %vm2108, %v5715, %v5103
        %v5748 = vsel %vm2108, %v5716, %v5105
        %v5749 = vsel %vm2108, %v5717, %v5107
        %v5750 = vsel %vm2108, %v5718, %v5109
        %v5751 = vsel %vm2108, %v5719, %v5111
        %v5752 = vsel %vm4058, %v5720, %v5177
        %v5753 = vsel %vm4058, %v5721, %v5179
        %v5754 = vsel %vm4058, %v5722, %v5181
        %v5755 = vsel %vm4058, %v5723, %v5183
        %v5756 = vsel %vm4058, %v5724, %v5185
        %v5757 = vsel %vm4058, %v5725, %v5187
        %v5758 = vsel %vm4058, %v5726, %v5189
        %v5759 = vsel %vm4058, %v5727, %v5191
        %v5760 = vsel %vm4058, %v5728, %v5193
        %v5761 = vsel %vm4058, %v5729, %v5195
        %v5762 = vsel %vm4058, %v5730, %v5197
        %v5763 = vsel %vm4058, %v5731, %v5199
        %v5764 = vsel %vm4058, %v5732, %v5201
        %v5765 = vsel %vm4058, %v5733, %v5203
        %v5766 = vsel %vm4058, %v5734, %v5205
        %v5767 = vsel %vm4058, %v5735, %v5207
        %v5768 = vsel %vm4058, %v5736, %v5209
        %v5769 = vsel %vm4058, %v5737, %v5211
        %v5770 = vsel %vm4058, %v5738, %v5213
        %v5771 = vsel %vm4058, %v5739, %v5215
        %v5772 = vsel %vm4058, %v5740, %v5217
        %v5773 = vsel %vm4058, %v5741, %v5219
        %v5774 = vsel %vm4058, %v5742, %v5221
        %v5775 = vsel %vm4058, %v5743, %v5223
        %v5776 = vsel %vm4058, %v5744, %v5225
        %v5777 = vsel %vm4058, %v5745, %v5227
        %v5778 = vsel %vm4058, %v5746, %v5229
        %v5779 = vsel %vm4058, %v5747, %v5231
        %v5780 = vsel %vm4058, %v5748, %v5233
        %v5781 = vsel %vm4058, %v5749, %v5235
        %v5782 = vsel %vm4058, %v5750, %v5237
        %v5783 = vsel %vm4058, %v5751, %v5239
        %vm5784 = vcmask 654336
        %v5785 = vsel %vm5784, %v5752, %v5305
        %v5786 = vsel %vm5784, %v5753, %v5307
        %v5787 = vsel %vm5784, %v5754, %v5309
        %v5788 = vsel %vm5784, %v5755, %v5311
        %v5789 = vsel %vm5784, %v5756, %v5313
        %v5790 = vsel %vm5784, %v5757, %v5315
        %v5791 = vsel %vm5784, %v5758, %v5317
        %v5792 = vsel %vm5784, %v5759, %v5319
        %v5793 = vsel %vm5784, %v5760, %v5321
        %v5794 = vsel %vm5784, %v5761, %v5323
        %v5795 = vsel %vm5784, %v5762, %v5325
        %v5796 = vsel %vm5784, %v5763, %v5327
        %v5797 = vsel %vm5784, %v5764, %v5329
        %v5798 = vsel %vm5784, %v5765, %v5331
        %v5799 = vsel %vm5784, %v5766, %v5333
        %v5800 = vsel %vm5784, %v5767, %v5335
        %v5801 = vsel %vm5784, %v5768, %v5337
        %v5802 = vsel %vm5784, %v5769, %v5339
        %v5803 = vsel %vm5784, %v5770, %v5341
        %v5804 = vsel %vm5784, %v5771, %v5343
        %v5805 = vsel %vm5784, %v5772, %v5345
        %v5806 = vsel %vm5784, %v5773, %v5347
        %v5807 = vsel %vm5784, %v5774, %v5349
        %v5808 = vsel %vm5784, %v5775, %v5351
        %v5809 = vsel %vm5784, %v5776, %v5353
        %v5810 = vsel %vm5784, %v5777, %v5355
        %v5811 = vsel %vm5784, %v5778, %v5357
        %v5812 = vsel %vm5784, %v5779, %v5359
        %v5813 = vsel %vm5784, %v5780, %v5361
        %v5814 = vsel %vm5784, %v5781, %v5363
        %v5815 = vsel %vm5784, %v5782, %v5365
        %v5816 = vsel %vm5784, %v5783, %v5367
        %vm5817 = vcmask 785408
        %v5818 = vsel %vm5817, %v5785, %v5433
        %v5819 = vsel %vm5817, %v5786, %v5435
        %v5820 = vsel %vm5817, %v5787, %v5437
        %v5821 = vsel %vm5817, %v5788, %v5439
        %v5822 = vsel %vm5817, %v5789, %v5441
        %v5823 = vsel %vm5817, %v5790, %v5443
        %v5824 = vsel %vm5817, %v5791, %v5445
        %v5825 = vsel %vm5817, %v5792, %v5447
        %v5826 = vsel %vm5817, %v5793, %v5449
        %v5827 = vsel %vm5817, %v5794, %v5451
        %v5828 = vsel %vm5817, %v5795, %v5453
        %v5829 = vsel %vm5817, %v5796, %v5455
        %v5830 = vsel %vm5817, %v5797, %v5457
        %v5831 = vsel %vm5817, %v5798, %v5459
        %v5832 = vsel %vm5817, %v5799, %v5461
        %v5833 = vsel %vm5817, %v5800, %v5463
        %v5834 = vsel %vm5817, %v5801, %v5465
        %v5835 = vsel %vm5817, %v5802, %v5467
        %v5836 = vsel %vm5817, %v5803, %v5469
        %v5837 = vsel %vm5817, %v5804, %v5471
        %v5838 = vsel %vm5817, %v5805, %v5473
        %v5839 = vsel %vm5817, %v5806, %v5475
        %v5840 = vsel %vm5817, %v5807, %v5477
        %v5841 = vsel %vm5817, %v5808, %v5479
        %v5842 = vsel %vm5817, %v5809, %v5481
        %v5843 = vsel %vm5817, %v5810, %v5483
        %v5844 = vsel %vm5817, %v5811, %v5485
        %v5845 = vsel %vm5817, %v5812, %v5487
        %v5846 = vsel %vm5817, %v5813, %v5489
        %v5847 = vsel %vm5817, %v5814, %v5491
        %v5848 = vsel %vm5817, %v5815, %v5493
        %v5849 = vsel %vm5817, %v5816, %v5495
        %vm5850 = vcmask 916480
        %v5851 = vsel %vm5850, %v5818, %v5561
        %v5852 = vsel %vm5850, %v5819, %v5563
        %v5853 = vsel %vm5850, %v5820, %v5565
        %v5854 = vsel %vm5850, %v5821, %v5567
        %v5855 = vsel %vm5850, %v5822, %v5569
        %v5856 = vsel %vm5850, %v5823, %v5571
        %v5857 = vsel %vm5850, %v5824, %v5573
        %v5858 = vsel %vm5850, %v5825, %v5575
        %v5859 = vsel %vm5850, %v5826, %v5577
        %v5860 = vsel %vm5850, %v5827, %v5579
        %v5861 = vsel %vm5850, %v5828, %v5581
        %v5862 = vsel %vm5850, %v5829, %v5583
        %v5863 = vsel %vm5850, %v5830, %v5585
        %v5864 = vsel %vm5850, %v5831, %v5587
        %v5865 = vsel %vm5850, %v5832, %v5589
        %v5866 = vsel %vm5850, %v5833, %v5591
        %v5867 = vsel %vm5850, %v5834, %v5593
        %v5868 = vsel %vm5850, %v5835, %v5595
        %v5869 = vsel %vm5850, %v5836, %v5597
        %v5870 = vsel %vm5850, %v5837, %v5599
        %v5871 = vsel %vm5850, %v5838, %v5601
        %v5872 = vsel %vm5850, %v5839, %v5603
        %v5873 = vsel %vm5850, %v5840, %v5605
        %v5874 = vsel %vm5850, %v5841, %v5607
        %v5875 = vsel %vm5850, %v5842, %v5609
        %v5876 = vsel %vm5850, %v5843, %v5611
        %v5877 = vsel %vm5850, %v5844, %v5613
        %v5878 = vsel %vm5850, %v5845, %v5615
        %v5879 = vsel %vm5850, %v5846, %v5617
        %v5880 = vsel %vm5850, %v5847, %v5619
        %v5881 = vsel %vm5850, %v5848, %v5621
        %v5882 = vsel %vm5850, %v5849, %v5623
        %v5883 = vpack.c.bf16 %v5852, %v5851
        %v5884 = vpack.c.bf16 %v4729, %v4728
        %v5885 = vpack.c.bf16 %v5854, %v5853
        %v5886 = vpack.c.bf16 %v4731, %v4730
        %v5887 = vpack.c.bf16 %v5856, %v5855
        %v5888 = vpack.c.bf16 %v4733, %v4732
        %v5889 = vpack.c.bf16 %v5858, %v5857
        %v5890 = vpack.c.bf16 %v4735, %v4734
        %v5891 = vpack.c.bf16 %v5860, %v5859
        %v5892 = vpack.c.bf16 %v4737, %v4736
        %v5893 = vpack.c.bf16 %v5862, %v5861
        %v5894 = vpack.c.bf16 %v4739, %v4738
        %v5895 = vpack.c.bf16 %v5864, %v5863
        %v5896 = vpack.c.bf16 %v4741, %v4740
        %v5897 = vpack.c.bf16 %v5866, %v5865
        %v5898 = vpack.c.bf16 %v4743, %v4742
        %v5899 = vpack.c.bf16 %v5868, %v5867
        %v5900 = vpack.c.bf16 %v4745, %v4744
        %v5901 = vpack.c.bf16 %v5870, %v5869
        %v5902 = vpack.c.bf16 %v4747, %v4746
        %v5903 = vpack.c.bf16 %v5872, %v5871
        %v5904 = vpack.c.bf16 %v4749, %v4748
        %v5905 = vpack.c.bf16 %v5874, %v5873
        %v5906 = vpack.c.bf16 %v4751, %v4750
        %v5907 = vpack.c.bf16 %v5876, %v5875
        %v5908 = vpack.c.bf16 %v4753, %v4752
        %v5909 = vpack.c.bf16 %v5878, %v5877
        %v5910 = vpack.c.bf16 %v4755, %v4754
        %v5911 = vpack.c.bf16 %v5880, %v5879
        %v5912 = vpack.c.bf16 %v4757, %v4756
        %v5913 = vpack.c.bf16 %v5882, %v5881
        %v5914 = vpack.c.bf16 %v4759, %v4758
        %v5915 = vld [vmem:[%s5] sm:$0xff]
        %v5916 = vld [vmem:[%s5 + $0x8] sm:$0xff]
        %v5917 = vld [vmem:[%s5 + $0x10] sm:$0xff]
        %v5918 = vld [vmem:[%s5 + $0x18] sm:$0xff]
        %v5919 = vld [vmem:[%s5 + $0x20] sm:$0xff]
        %v5920 = vld [vmem:[%s5 + $0x28] sm:$0xff]
        %v5921 = vld [vmem:[%s5 + $0x30] sm:$0xff]
        %v5922 = vld [vmem:[%s5 + $0x38] sm:$0xff]
        %v5923 = vld [vmem:[%s5 + $0x40] sm:$0xff]
        %v5924 = vld [vmem:[%s5 + $0x48] sm:$0xff]
        %v5925 = vld [vmem:[%s5 + $0x50] sm:$0xff]
        %v5926 = vld [vmem:[%s5 + $0x58] sm:$0xff]
        %v5927 = vld [vmem:[%s5 + $0x60] sm:$0xff]
        %v5928 = vld [vmem:[%s5 + $0x68] sm:$0xff]
        %v5929 = vld [vmem:[%s5 + $0x70] sm:$0xff]
        %v5930 = vld [vmem:[%s5 + $0x78] sm:$0xff]
        %v5931 = vld [vmem:[%s5 + $0x80] sm:$0xff]
        %v5932 = vld [vmem:[%s5 + $0x88] sm:$0xff]
        %v5933 = vpack.c.bf16 %v5916, %v5915
        %v5934 = vpack.c.bf16 %v5918, %v5917
        %v5935 = vpack.c.bf16 %v5920, %v5919
        %v5936 = vpack.c.bf16 %v5922, %v5921
        %v5937 = vpack.c.bf16 %v5924, %v5923
        %v5938 = vpack.c.bf16 %v5926, %v5925
        %v5939 = vpack.c.bf16 %v5928, %v5927
        %v5940 = vpack.c.bf16 %v5930, %v5929
        %v5941 = vpack.c.bf16 %v5932, %v5931
        %v5942 = vld [vmem:[%s6] sm:$0x1]
        %v5944 = vlaneseq
        %v5945 = vshrl.u32 %v5944, 7
        %v5946 = vsub.s32 0, %v5945
        %v5947 = vrot.slane %v5942, %v5946
        %v5950 = vsel %vm444, %v5884, 0
        %v5953 = vsel %vm444, %v5886, 0
        %v5956 = vsel %vm444, %v5888, 0
        %v5959 = vsel %vm444, %v5890, 0
        %v5962 = vsel %vm444, %v5892, 0
        %v5965 = vsel %vm444, %v5894, 0
        %v5968 = vsel %vm444, %v5896, 0
        %v5971 = vsel %vm444, %v5898, 0
        %v5974 = vsel %vm444, %v5900, 0
        %v5977 = vsel %vm444, %v5902, 0
        %v5980 = vsel %vm444, %v5904, 0
        %v5983 = vsel %vm444, %v5906, 0
        %v5986 = vsel %vm444, %v5908, 0
        %v5989 = vsel %vm444, %v5910, 0
        %v5992 = vsel %vm444, %v5912, 0
        %v5995 = vsel %vm444, %v5914, 0
        %5997 = vmatprep.subr.bf16.mxu0 0
        %5998 = vmatpush1.bf16.msra.mxu0 %v5940
        %5999 = vmatprep.subr.bf16.mxu0 0
        %6000 = vmatpush1.bf16.msra.mxu0 %v5939
        %6001 = vmatprep.subr.bf16.mxu0 0
        %6002 = vmatpush1.bf16.msra.mxu0 %v5938
        %6003 = vmatprep.subr.bf16.mxu0 0
        %6004 = vmatpush1.bf16.msra.mxu0 %v5937
        %6005 = vmatprep.subr.bf16.mxu0 0
        %6006 = vmatpush1.bf16.msra.mxu0 %v5936
        %6007 = vmatprep.subr.bf16.mxu0 0
        %6008 = vmatpush1.bf16.msra.mxu0 %v5935
        %6009 = vmatprep.subr.bf16.mxu0 0
        %6010 = vmatpush1.bf16.msra.mxu0 %v5934
        %6011 = vmatprep.subr.bf16.mxu0 0
        %6012 = vmatpush1.bf16.msra.mxu0 %v5933
        %6013 = vmatprep.subr.bf16.mxu0 0
        %6014 = vmatpush2.bf16.msra.mxu0 0
        %6015 = vmatprep.subr.bf16.mxu0 0
        %6016 = vmatpush2.bf16.msra.mxu0 0
        %6017 = vmatprep.subr.bf16.mxu0 0
        %6018 = vmatpush2.bf16.msra.mxu0 0
        %6019 = vmatprep.subr.bf16.mxu0 0
        %6020 = vmatpush2.bf16.msra.mxu0 0
        %6021 = vmatprep.subr.bf16.mxu0 0
        %6022 = vmatpush2.bf16.msra.mxu0 0
        %6023 = vmatprep.subr.bf16.mxu0 0
        %6024 = vmatpush2.bf16.msra.mxu0 0
        %6025 = vmatprep.subr.bf16.mxu0 0
        %6026 = vmatpush2.bf16.msra.mxu0 0
        %6027 = vmatprep.subr.bf16.mxu0 0
        %6028 = vmatpush2.bf16.msra.mxu0 %v5941
        %6029 = vmatprep.mubr.bf16.mxu0 %v5950
        %6030 = vmatmul.mubr.bf16.gmra.mxu0 %v5883
        %v6031 = vpop.f32.mrf.mxu0
        %v6032 = vadd.f32 %v5947, %v6031
        %v6033 = vpop.f32.mrf.mxu0
        %v6034 = vpop.f32.mrf.mxu0
        %v6035 = vadd.f32 %v5947, %v6034
        %v6036 = vpop.f32.mrf.mxu0
        %6037 = vmatprep.mubr.bf16.mxu0 %v5953
        %6038 = vmatmul.mubr.bf16.gmra.mxu0 %v5885
        %v6039 = vpop.f32.mrf.mxu0
        %v6040 = vadd.f32 %v5947, %v6039
        %v6041 = vpop.f32.mrf.mxu0
        %v6042 = vpop.f32.mrf.mxu0
        %v6043 = vadd.f32 %v5947, %v6042
        %v6044 = vpop.f32.mrf.mxu0
        %6045 = vmatprep.mubr.bf16.mxu0 %v5956
        %6046 = vmatmul.mubr.bf16.gmra.mxu0 %v5887
        %v6047 = vpop.f32.mrf.mxu0
        %v6048 = vadd.f32 %v5947, %v6047
        %v6049 = vpop.f32.mrf.mxu0
        %v6050 = vpop.f32.mrf.mxu0
        %v6051 = vadd.f32 %v5947, %v6050
        %v6052 = vpop.f32.mrf.mxu0
        %6053 = vmatprep.mubr.bf16.mxu0 %v5959
        %6054 = vmatmul.mubr.bf16.gmra.mxu0 %v5889
        %v6055 = vpop.f32.mrf.mxu0
        %v6056 = vadd.f32 %v5947, %v6055
        %v6057 = vpop.f32.mrf.mxu0
        %v6058 = vpop.f32.mrf.mxu0
        %v6059 = vadd.f32 %v5947, %v6058
        %v6060 = vpop.f32.mrf.mxu0
        %6061 = vmatprep.mubr.bf16.mxu0 %v5962
        %6062 = vmatmul.mubr.bf16.gmra.mxu0 %v5891
        %v6063 = vpop.f32.mrf.mxu0
        %v6064 = vadd.f32 %v5947, %v6063
        %v6065 = vpop.f32.mrf.mxu0
        %v6066 = vpop.f32.mrf.mxu0
        %v6067 = vadd.f32 %v5947, %v6066
        %v6068 = vpop.f32.mrf.mxu0
        %6069 = vmatprep.mubr.bf16.mxu0 %v5965
        %6070 = vmatmul.mubr.bf16.gmra.mxu0 %v5893
        %v6071 = vpop.f32.mrf.mxu0
        %v6072 = vadd.f32 %v5947, %v6071
        %v6073 = vpop.f32.mrf.mxu0
        %v6074 = vpop.f32.mrf.mxu0
        %v6075 = vadd.f32 %v5947, %v6074
        %v6076 = vpop.f32.mrf.mxu0
        %6077 = vmatprep.mubr.bf16.mxu0 %v5968
        %6078 = vmatmul.mubr.bf16.gmra.mxu0 %v5895
        %v6079 = vpop.f32.mrf.mxu0
        %v6080 = vadd.f32 %v5947, %v6079
        %v6081 = vpop.f32.mrf.mxu0
        %v6082 = vpop.f32.mrf.mxu0
        %v6083 = vadd.f32 %v5947, %v6082
        %v6084 = vpop.f32.mrf.mxu0
        %6085 = vmatprep.mubr.bf16.mxu0 %v5971
        %6086 = vmatmul.mubr.bf16.gmra.mxu0 %v5897
        %v6087 = vpop.f32.mrf.mxu0
        %v6088 = vadd.f32 %v5947, %v6087
        %v6089 = vpop.f32.mrf.mxu0
        %v6090 = vpop.f32.mrf.mxu0
        %v6091 = vadd.f32 %v5947, %v6090
        %v6092 = vpop.f32.mrf.mxu0
        %6093 = vmatprep.mubr.bf16.mxu0 %v5974
        %6094 = vmatmul.mubr.bf16.gmra.mxu0 %v5899
        %v6095 = vpop.f32.mrf.mxu0
        %v6096 = vadd.f32 %v5947, %v6095
        %v6097 = vpop.f32.mrf.mxu0
        %v6098 = vpop.f32.mrf.mxu0
        %v6099 = vadd.f32 %v5947, %v6098
        %v6100 = vpop.f32.mrf.mxu0
        %6101 = vmatprep.mubr.bf16.mxu0 %v5977
        %6102 = vmatmul.mubr.bf16.gmra.mxu0 %v5901
        %v6103 = vpop.f32.mrf.mxu0
        %v6104 = vadd.f32 %v5947, %v6103
        %v6105 = vpop.f32.mrf.mxu0
        %v6106 = vpop.f32.mrf.mxu0
        %v6107 = vadd.f32 %v5947, %v6106
        %v6108 = vpop.f32.mrf.mxu0
        %6109 = vmatprep.mubr.bf16.mxu0 %v5980
        %6110 = vmatmul.mubr.bf16.gmra.mxu0 %v5903
        %v6111 = vpop.f32.mrf.mxu0
        %v6112 = vadd.f32 %v5947, %v6111
        %v6113 = vpop.f32.mrf.mxu0
        %v6114 = vpop.f32.mrf.mxu0
        %v6115 = vadd.f32 %v5947, %v6114
        %v6116 = vpop.f32.mrf.mxu0
        %6117 = vmatprep.mubr.bf16.mxu0 %v5983
        %6118 = vmatmul.mubr.bf16.gmra.mxu0 %v5905
        %v6119 = vpop.f32.mrf.mxu0
        %v6120 = vadd.f32 %v5947, %v6119
        %v6121 = vpop.f32.mrf.mxu0
        %v6122 = vpop.f32.mrf.mxu0
        %v6123 = vadd.f32 %v5947, %v6122
        %v6124 = vpop.f32.mrf.mxu0
        %6125 = vmatprep.mubr.bf16.mxu0 %v5986
        %6126 = vmatmul.mubr.bf16.gmra.mxu0 %v5907
        %v6127 = vpop.f32.mrf.mxu0
        %v6128 = vadd.f32 %v5947, %v6127
        %v6129 = vpop.f32.mrf.mxu0
        %v6130 = vpop.f32.mrf.mxu0
        %v6131 = vadd.f32 %v5947, %v6130
        %v6132 = vpop.f32.mrf.mxu0
        %6133 = vmatprep.mubr.bf16.mxu0 %v5989
        %6134 = vmatmul.mubr.bf16.gmra.mxu0 %v5909
        %v6135 = vpop.f32.mrf.mxu0
        %v6136 = vadd.f32 %v5947, %v6135
        %v6137 = vpop.f32.mrf.mxu0
        %v6138 = vpop.f32.mrf.mxu0
        %v6139 = vadd.f32 %v5947, %v6138
        %v6140 = vpop.f32.mrf.mxu0
        %6141 = vmatprep.mubr.bf16.mxu0 %v5992
        %6142 = vmatmul.mubr.bf16.gmra.mxu0 %v5911
        %v6143 = vpop.f32.mrf.mxu0
        %v6144 = vadd.f32 %v5947, %v6143
        %v6145 = vpop.f32.mrf.mxu0
        %v6146 = vpop.f32.mrf.mxu0
        %v6147 = vadd.f32 %v5947, %v6146
        %v6148 = vpop.f32.mrf.mxu0
        %6149 = vmatprep.mubr.bf16.mxu0 %v5995
        %6150 = vmatmul.mubr.bf16.gmra.mxu0 %v5913
        %v6151 = vpop.f32.mrf.mxu0
        %v6152 = vadd.f32 %v5947, %v6151
        %v6153 = vpop.f32.mrf.mxu0
        %v6154 = vpop.f32.mrf.mxu0
        %v6155 = vadd.f32 %v5947, %v6154
        %v6156 = vpop.f32.mrf.mxu0
        %6157 = vdwg.mxu0
        %v6158 = vpack.c.bf16 %v2266, %v2263
        %v6159 = vpack.c.bf16 %v2274, %v2271
        %v6160 = vpack.c.bf16 %v2282, %v2279
        %v6161 = vpack.c.bf16 %v2290, %v2287
        %v6162 = vpack.c.bf16 %v2298, %v2295
        %v6163 = vpack.c.bf16 %v2306, %v2303
        %v6164 = vpack.c.bf16 %v2314, %v2311
        %v6165 = vpack.c.bf16 %v2322, %v2319
        %v6166 = vpack.c.bf16 %v2330, %v2327
        %v6167 = vpack.c.bf16 %v2338, %v2335
        %v6168 = vpack.c.bf16 %v2346, %v2343
        %v6169 = vpack.c.bf16 %v2354, %v2351
        %v6170 = vpack.c.bf16 %v2362, %v2359
        %v6171 = vpack.c.bf16 %v2370, %v2367
        %v6172 = vpack.c.bf16 %v2378, %v2375
        %v6173 = vpack.c.bf16 %v2386, %v2383
        %v6174 = vld [vmem:[%s7] sm:$0xff]
        %v6175 = vpack.c.bf16 %v6174, %v6174
        %v6176 = vld [vmem:[%s8] sm:$0x1]
        %v6178 = vlaneseq
        %v6179 = vshrl.u32 %v6178, 7
        %v6180 = vsub.s32 0, %v6179
        %v6181 = vrot.slane %v6176, %v6180
        %v6184 = vsel %vm388, %v6158, 0
        %v6187 = vsel %vm388, %v6159, 0
        %v6190 = vsel %vm388, %v6160, 0
        %v6193 = vsel %vm388, %v6161, 0
        %v6196 = vsel %vm388, %v6162, 0
        %v6199 = vsel %vm388, %v6163, 0
        %v6202 = vsel %vm388, %v6164, 0
        %v6205 = vsel %vm388, %v6165, 0
        %v6208 = vsel %vm388, %v6166, 0
        %v6211 = vsel %vm388, %v6167, 0
        %v6214 = vsel %vm388, %v6168, 0
        %v6217 = vsel %vm388, %v6169, 0
        %v6220 = vsel %vm388, %v6170, 0
        %v6223 = vsel %vm388, %v6171, 0
        %v6226 = vsel %vm388, %v6172, 0
        %v6229 = vsel %vm388, %v6173, 0
        %v6232 = vsel %vm4177, %v6175, 0
        %6234 = vmatprep.subr.bf16.mxu0 0
        %6235 = vmatpush1.bf16.msra.mxu0 0
        %6236 = vmatprep.subr.bf16.mxu0 0
        %6237 = vmatpush1.bf16.msra.mxu0 0
        %6238 = vmatprep.subr.bf16.mxu0 0
        %6239 = vmatpush1.bf16.msra.mxu0 0
        %6240 = vmatprep.subr.bf16.mxu0 0
        %6241 = vmatpush1.bf16.msra.mxu0 0
        %6242 = vmatprep.subr.bf16.mxu0 0
        %6243 = vmatpush1.bf16.msra.mxu0 0
        %6244 = vmatprep.subr.bf16.mxu0 0
        %6245 = vmatpush1.bf16.msra.mxu0 0
        %6246 = vmatprep.subr.bf16.mxu0 0
        %6247 = vmatpush1.bf16.msra.mxu0 0
        %6248 = vmatprep.subr.bf16.mxu0 0
        %6249 = vmatpush1.bf16.msra.mxu0 %v6232
        %6250 = vmatprep.subr.bf16.mxu0 0
        %6251 = vmatpush2.bf16.msra.mxu0 0
        %6252 = vmatprep.subr.bf16.mxu0 0
        %6253 = vmatpush2.bf16.msra.mxu0 0
        %6254 = vmatprep.subr.bf16.mxu0 0
        %6255 = vmatpush2.bf16.msra.mxu0 0
        %6256 = vmatprep.subr.bf16.mxu0 0
        %6257 = vmatpush2.bf16.msra.mxu0 0
        %6258 = vmatprep.subr.bf16.mxu0 0
        %6259 = vmatpush2.bf16.msra.mxu0 0
        %6260 = vmatprep.subr.bf16.mxu0 0
        %6261 = vmatpush2.bf16.msra.mxu0 0
        %6262 = vmatprep.subr.bf16.mxu0 0
        %6263 = vmatpush2.bf16.msra.mxu0 0
        %6264 = vmatprep.subr.bf16.mxu0 0
        %6265 = vmatpush2.bf16.msra.mxu0 0
        %6266 = vmatprep.mubr.bf16.mxu0 0
        %6267 = vmatmul.mubr.bf16.gmra.mxu0 %v6184
        %v6268 = vpop.f32.mrf.mxu0
        %v6269 = vadd.f32 %v6181, %v6268
        %v6270 = vpop.f32.mrf.mxu0
        %v6271 = vpop.f32.mrf.mxu0
        %v6272 = vadd.f32 %v6181, %v6271
        %v6273 = vpop.f32.mrf.mxu0
        %6274 = vmatprep.mubr.bf16.mxu0 0
        %6275 = vmatmul.mubr.bf16.gmra.mxu0 %v6187
        %v6276 = vpop.f32.mrf.mxu0
        %v6277 = vadd.f32 %v6181, %v6276
        %v6278 = vpop.f32.mrf.mxu0
        %v6279 = vpop.f32.mrf.mxu0
        %v6280 = vadd.f32 %v6181, %v6279
        %v6281 = vpop.f32.mrf.mxu0
        %6282 = vmatprep.mubr.bf16.mxu0 0
        %6283 = vmatmul.mubr.bf16.gmra.mxu0 %v6190
        %v6284 = vpop.f32.mrf.mxu0
        %v6285 = vadd.f32 %v6181, %v6284
        %v6286 = vpop.f32.mrf.mxu0
        %v6287 = vpop.f32.mrf.mxu0
        %v6288 = vadd.f32 %v6181, %v6287
        %v6289 = vpop.f32.mrf.mxu0
        %6290 = vmatprep.mubr.bf16.mxu0 0
        %6291 = vmatmul.mubr.bf16.gmra.mxu0 %v6193
        %v6292 = vpop.f32.mrf.mxu0
        %v6293 = vadd.f32 %v6181, %v6292
        %v6294 = vpop.f32.mrf.mxu0
        %v6295 = vpop.f32.mrf.mxu0
        %v6296 = vadd.f32 %v6181, %v6295
        %v6297 = vpop.f32.mrf.mxu0
        %6298 = vmatprep.mubr.bf16.mxu0 0
        %6299 = vmatmul.mubr.bf16.gmra.mxu0 %v6196
        %v6300 = vpop.f32.mrf.mxu0
        %v6301 = vadd.f32 %v6181, %v6300
        %v6302 = vpop.f32.mrf.mxu0
        %v6303 = vpop.f32.mrf.mxu0
        %v6304 = vadd.f32 %v6181, %v6303
        %v6305 = vpop.f32.mrf.mxu0
        %6306 = vmatprep.mubr.bf16.mxu0 0
        %6307 = vmatmul.mubr.bf16.gmra.mxu0 %v6199
        %v6308 = vpop.f32.mrf.mxu0
        %v6309 = vadd.f32 %v6181, %v6308
        %v6310 = vpop.f32.mrf.mxu0
        %v6311 = vpop.f32.mrf.mxu0
        %v6312 = vadd.f32 %v6181, %v6311
        %v6313 = vpop.f32.mrf.mxu0
        %6314 = vmatprep.mubr.bf16.mxu0 0
        %6315 = vmatmul.mubr.bf16.gmra.mxu0 %v6202
        %v6316 = vpop.f32.mrf.mxu0
        %v6317 = vadd.f32 %v6181, %v6316
        %v6318 = vpop.f32.mrf.mxu0
        %v6319 = vpop.f32.mrf.mxu0
        %v6320 = vadd.f32 %v6181, %v6319
        %v6321 = vpop.f32.mrf.mxu0
        %6322 = vmatprep.mubr.bf16.mxu0 0
        %6323 = vmatmul.mubr.bf16.gmra.mxu0 %v6205
        %v6324 = vpop.f32.mrf.mxu0
        %v6325 = vadd.f32 %v6181, %v6324
        %v6326 = vpop.f32.mrf.mxu0
        %v6327 = vpop.f32.mrf.mxu0
        %v6328 = vadd.f32 %v6181, %v6327
        %v6329 = vpop.f32.mrf.mxu0
        %6330 = vmatprep.mubr.bf16.mxu0 0
        %6331 = vmatmul.mubr.bf16.gmra.mxu0 %v6208
        %v6332 = vpop.f32.mrf.mxu0
        %v6333 = vadd.f32 %v6181, %v6332
        %v6334 = vpop.f32.mrf.mxu0
        %v6335 = vpop.f32.mrf.mxu0
        %v6336 = vadd.f32 %v6181, %v6335
        %v6337 = vpop.f32.mrf.mxu0
        %6338 = vmatprep.mubr.bf16.mxu0 0
        %6339 = vmatmul.mubr.bf16.gmra.mxu0 %v6211
        %v6340 = vpop.f32.mrf.mxu0
        %v6341 = vadd.f32 %v6181, %v6340
        %v6342 = vpop.f32.mrf.mxu0
        %v6343 = vpop.f32.mrf.mxu0
        %v6344 = vadd.f32 %v6181, %v6343
        %v6345 = vpop.f32.mrf.mxu0
        %6346 = vmatprep.mubr.bf16.mxu0 0
        %6347 = vmatmul.mubr.bf16.gmra.mxu0 %v6214
        %v6348 = vpop.f32.mrf.mxu0
        %v6349 = vadd.f32 %v6181, %v6348
        %v6350 = vpop.f32.mrf.mxu0
        %v6351 = vpop.f32.mrf.mxu0
        %v6352 = vadd.f32 %v6181, %v6351
        %v6353 = vpop.f32.mrf.mxu0
        %6354 = vmatprep.mubr.bf16.mxu0 0
        %6355 = vmatmul.mubr.bf16.gmra.mxu0 %v6217
        %v6356 = vpop.f32.mrf.mxu0
        %v6357 = vadd.f32 %v6181, %v6356
        %v6358 = vpop.f32.mrf.mxu0
        %v6359 = vpop.f32.mrf.mxu0
        %v6360 = vadd.f32 %v6181, %v6359
        %v6361 = vpop.f32.mrf.mxu0
        %6362 = vmatprep.mubr.bf16.mxu0 0
        %6363 = vmatmul.mubr.bf16.gmra.mxu0 %v6220
        %v6364 = vpop.f32.mrf.mxu0
        %v6365 = vadd.f32 %v6181, %v6364
        %v6366 = vpop.f32.mrf.mxu0
        %v6367 = vpop.f32.mrf.mxu0
        %v6368 = vadd.f32 %v6181, %v6367
        %v6369 = vpop.f32.mrf.mxu0
        %6370 = vmatprep.mubr.bf16.mxu0 0
        %6371 = vmatmul.mubr.bf16.gmra.mxu0 %v6223
        %v6372 = vpop.f32.mrf.mxu0
        %v6373 = vadd.f32 %v6181, %v6372
        %v6374 = vpop.f32.mrf.mxu0
        %v6375 = vpop.f32.mrf.mxu0
        %v6376 = vadd.f32 %v6181, %v6375
        %v6377 = vpop.f32.mrf.mxu0
        %6378 = vmatprep.mubr.bf16.mxu0 0
        %6379 = vmatmul.mubr.bf16.gmra.mxu0 %v6226
        %v6380 = vpop.f32.mrf.mxu0
        %v6381 = vadd.f32 %v6181, %v6380
        %v6382 = vpop.f32.mrf.mxu0
        %v6383 = vpop.f32.mrf.mxu0
        %v6384 = vadd.f32 %v6181, %v6383
        %v6385 = vpop.f32.mrf.mxu0
        %6386 = vmatprep.mubr.bf16.mxu0 0
        %6387 = vmatmul.mubr.bf16.gmra.mxu0 %v6229
        %v6388 = vpop.f32.mrf.mxu0
        %v6389 = vadd.f32 %v6181, %v6388
        %v6390 = vpop.f32.mrf.mxu0
        %v6391 = vpop.f32.mrf.mxu0
        %v6392 = vadd.f32 %v6181, %v6391
        %v6393 = vpop.f32.mrf.mxu0
        %6394 = vdwg.mxu0
        %v6395 = vadd.f32 %v6032, %v6269
        %v6396 = vadd.f32 %v6035, %v6272
        %v6397 = vadd.f32 %v6040, %v6277
        %v6398 = vadd.f32 %v6043, %v6280
        %v6399 = vadd.f32 %v6048, %v6285
        %v6400 = vadd.f32 %v6051, %v6288
        %v6401 = vadd.f32 %v6056, %v6293
        %v6402 = vadd.f32 %v6059, %v6296
        %v6403 = vadd.f32 %v6064, %v6301
        %v6404 = vadd.f32 %v6067, %v6304
        %v6405 = vadd.f32 %v6072, %v6309
        %v6406 = vadd.f32 %v6075, %v6312
        %v6407 = vadd.f32 %v6080, %v6317
        %v6408 = vadd.f32 %v6083, %v6320
        %v6409 = vadd.f32 %v6088, %v6325
        %v6410 = vadd.f32 %v6091, %v6328
        %v6411 = vadd.f32 %v6096, %v6333
        %v6412 = vadd.f32 %v6099, %v6336
        %v6413 = vadd.f32 %v6104, %v6341
        %v6414 = vadd.f32 %v6107, %v6344
        %v6415 = vadd.f32 %v6112, %v6349
        %v6416 = vadd.f32 %v6115, %v6352
        %v6417 = vadd.f32 %v6120, %v6357
        %v6418 = vadd.f32 %v6123, %v6360
        %v6419 = vadd.f32 %v6128, %v6365
        %v6420 = vadd.f32 %v6131, %v6368
        %v6421 = vadd.f32 %v6136, %v6373
        %v6422 = vadd.f32 %v6139, %v6376
        %v6423 = vadd.f32 %v6144, %v6381
        %v6424 = vadd.f32 %v6147, %v6384
        %v6425 = vadd.f32 %v6152, %v6389
        %v6426 = vadd.f32 %v6155, %v6392
        %6427 = vst.msk [vmem:[%s325] sm:$0xff] %vm444, %v6395
        %6428 = vst.msk [vmem:[%s325 + $0x8] sm:$0xff] %vm444, %v6396
        %6429 = vst.msk [vmem:[%s325 + $0x10] sm:$0xff] %vm444, %v6397
        %6430 = vst.msk [vmem:[%s325 + $0x18] sm:$0xff] %vm444, %v6398
        %6431 = vst.msk [vmem:[%s325 + $0x20] sm:$0xff] %vm444, %v6399
        %6432 = vst.msk [vmem:[%s325 + $0x28] sm:$0xff] %vm444, %v6400
        %6433 = vst.msk [vmem:[%s325 + $0x30] sm:$0xff] %vm444, %v6401
        %6434 = vst.msk [vmem:[%s325 + $0x38] sm:$0xff] %vm444, %v6402
        %6435 = vst.msk [vmem:[%s325 + $0x40] sm:$0xff] %vm444, %v6403
        %6436 = vst.msk [vmem:[%s325 + $0x48] sm:$0xff] %vm444, %v6404
        %6437 = vst.msk [vmem:[%s325 + $0x50] sm:$0xff] %vm444, %v6405
        %6438 = vst.msk [vmem:[%s325 + $0x58] sm:$0xff] %vm444, %v6406
        %6439 = vst.msk [vmem:[%s325 + $0x60] sm:$0xff] %vm444, %v6407
        %6440 = vst.msk [vmem:[%s325 + $0x68] sm:$0xff] %vm444, %v6408
        %6441 = vst.msk [vmem:[%s325 + $0x70] sm:$0xff] %vm444, %v6409
        %6442 = vst.msk [vmem:[%s325 + $0x78] sm:$0xff] %vm444, %v6410
        %6443 = vst.msk [vmem:[%s325 + $0x80] sm:$0xff] %vm444, %v6411
        %6444 = vst.msk [vmem:[%s325 + $0x88] sm:$0xff] %vm444, %v6412
        %6445 = vst.msk [vmem:[%s325 + $0x90] sm:$0xff] %vm444, %v6413
        %6446 = vst.msk [vmem:[%s325 + $0x98] sm:$0xff] %vm444, %v6414
        %6447 = vst.msk [vmem:[%s325 + $0xa0] sm:$0xff] %vm444, %v6415
        %6448 = vst.msk [vmem:[%s325 + $0xa8] sm:$0xff] %vm444, %v6416
        %6449 = vst.msk [vmem:[%s325 + $0xb0] sm:$0xff] %vm444, %v6417
        %6450 = vst.msk [vmem:[%s325 + $0xb8] sm:$0xff] %vm444, %v6418
        %6451 = vst.msk [vmem:[%s325 + $0xc0] sm:$0xff] %vm444, %v6419
        %6452 = vst.msk [vmem:[%s325 + $0xc8] sm:$0xff] %vm444, %v6420
        %6453 = vst.msk [vmem:[%s325 + $0xd0] sm:$0xff] %vm444, %v6421
        %6454 = vst.msk [vmem:[%s325 + $0xd8] sm:$0xff] %vm444, %v6422
        %6455 = vst.msk [vmem:[%s325 + $0xe0] sm:$0xff] %vm444, %v6423
        %6456 = vst.msk [vmem:[%s325 + $0xe8] sm:$0xff] %vm444, %v6424
        %6457 = vst.msk [vmem:[%s325 + $0xf0] sm:$0xff] %vm444, %v6425
        %6458 = vst.msk [vmem:[%s325 + $0xf8] sm:$0xff] %vm444, %v6426
        %s6459 = sand.u32 %s225, 1
        %s6460 = scalar_lea.sflag [#allocation6], %s6459
        %s6461 = sand.u32 %s225, 1
        %s6462 = smul.addr %s6461, 256
        %s6463 = scalar_lea.vmem [#allocation5], %s6462
        // Predicated region
        $region57: #{tpu_custom_call.1} parent=55 // pred_check
          %p6464 = pneg %p235
        $region58: #{tpu_custom_call.1} parent=55 // pred_check_branch
          %6466 = sbr.rel (%p6464) target = $region60
        $region59: #{tpu_custom_call.1} parent=55 // pred_region
          %s6468 = ssub.s32 4096, 4096
          %6469 = vsyncadd %s6460, %s6468
          %s6470 = smul.addr %s23, 32
          %s6471 = smul.addr %s6470, 128
          %s6472 = scalar_lea.hbm %s9, %s6471
          %s6473 = sshll.u32 %s6463, 4
          %s6474 = int_to_ptr.vmem [resolvable:$true] %s6473
          %6479 = dma.vmem_to_hbm [thread:$0]  %s6474, 4096, %s6472, %s6460, 128, 128, 8
        $region60: #{tpu_custom_call.1} parent=55 // pred_fallthru
          _
      $region56: #{tpu_custom_call.1} parent=5 // pred_fallthru
        _
      %p6480 = scmp.le.s32.totalorder 2, %s18
      // Predicated region
      $region61: #{tpu_custom_call.1} parent=5 // pred_check
        %p6481 = pneg %p6480
      $region62: #{tpu_custom_call.1} parent=5 // pred_check_branch
        %6483 = sbr.rel (%p6481) target = $region64
      $region63: #{tpu_custom_call.1} parent=5 // pred_region
        %s6484 = ssub.s32 %s18, 2
        // Predicated region
        $region65: #{tpu_custom_call.1} parent=63 // pred_check
          %p6485 = pneg %p241
        $region66: #{tpu_custom_call.1} parent=63 // pred_check_branch
          %6487 = sbr.rel (%p6485) target = $region68
        $region67: #{tpu_custom_call.1} parent=63 // pred_region
          %s6488 = sand.u32 %s226, 1
          %s6489 = scalar_lea.sflag [#allocation6], %s6488
          %s6490 = sand.u32 %s226, 1
          %s6491 = smul.addr %s6490, 256
          %s6492 = scalar_lea.vmem [#allocation5], %s6491
          %6493 = dma.done %s6489, 4096
        $region68: #{tpu_custom_call.1} parent=63 // pred_fallthru
          _
      $region64: #{tpu_custom_call.1} parent=5 // pred_fallthru
        _
    $region6: #{tpu_custom_call.1} parent=1 // loop_footer
      %s22 = sadd.s32 1, %s18
    $region7: #{tpu_custom_call.1} parent=1 // loop_footer_branch
      %17 = sbr.rel target = $region3
    $region8: #{tpu_custom_call.1} parent=1 // loop_exit
      _
    %6494 = vsyncpa [#allocation6], 1
    %s6495 = scalar_lea.sflag [#allocation6], 1
    %6496 = vsyncpa %s6495, 1

</llo_original>
